<compile_context>
chip_gen: v7x
topology: tpu7x:2x2x1
jax: 0.10.0
libtpu: 0.0.40
codegen_flags: <defaults>
</compile_context>

<pallas_src>
import jax
import jax.numpy as jnp
from jax import lax
from jax.experimental import pallas as pl
from jax.experimental.pallas import tpu as pltpu

# ---------------- architecture constants (LeNet on 3x32x32 input) -----------
H_IN, W_IN, C_IN = 32, 32, 3
C1, C2 = 6, 16                 # conv output channels
KH = KW = 5                    # conv kernel size
W1OUT = 28                     # conv1 valid output width
W2OUT = 10                     # conv2 valid output width
P2H, P2W = 5, 5                # pool2 output spatial
FEAT = C2 * P2H * P2W          # 400
F1, F2, F3 = 120, 84, 10

LANES_IN = 128                 # padded W_IN * C_IN (=96) -> 128
ROWS_IN = 40                   # 4 residue classes x 10 rows (8 data + 2 pad)
N1 = W1OUT * C1                # 168 conv1 lanes  (xo*6 + co)
N2 = W2OUT * C2                # 160 conv2 lanes  (u*16 + co)
K2 = 27 * C1                   # 162 conv2 contraction lanes (xo*6 + ci)
NFLAT = 5 * 9 * C2             # 720 lanes fed to fc1
NOUT = 128                     # padded class dim


# ------------------------------- the kernel ---------------------------------
def _lenet_kernel(x_ref, m1_ref, b1_ref, m2_ref, b2_ref,
                  wf1_ref, bf1_ref, wf2_ref, bf2_ref, wf3_ref, bf3_ref,
                  out_ref):
    f32 = jnp.float32
    B = out_ref.shape[1]                     # images per block (multiple of 8)
    xf = x_ref[0]                            # (40*B, 128); flat row = phys_row*B + b

    # ---- conv1: one Toeplitz matmul per vertical tap dy (K=128, N=168) ----
    z = [jnp.dot(xf, m1_ref[dy], preferred_element_type=f32) for dy in range(KH)]

    # vertical accumulation per output-row residue class c = y mod 4.
    # All slices are contiguous and sublane-aligned (starts are multiples of B).
    a1 = []
    for c in range(4):
        acc = None
        for dy in range(KH):
            s = (10 * ((c + dy) % 4) + (c + dy) // 4) * B
            t = z[dy][s:s + 8 * B]           # (8B, 168); row m*B+b <-> conv row y=4m+c
            acc = t if acc is None else acc + t
        a1.append(acc)

    # ---- pool1 rows (elementwise max across residue pairs) + bias + ReLU ----
    # parity q: pooled row r1 = 2m+q comes from conv rows 4m+2q, 4m+2q+1.
    p1 = [jnp.maximum(jnp.maximum(a1[2 * q], a1[2 * q + 1]) + b1_ref[...], 0.0)
          for q in range(2)]                 # (8B, 168)
    # pool1 cols: 2-wide window max along lanes (shift by C1); only even-x
    # anchors are consumed downstream (folded into the conv2 Toeplitz matrix).
    wm1 = [jnp.maximum(p[:, 0:K2], p[:, C1:C1 + K2]) for p in p1]       # (8B, 162)

    # ---- conv2: Toeplitz matmul per (input-row parity q, vertical tap dy) ----
    zz = [[jnp.dot(wm1[q], m2_ref[dy], preferred_element_type=f32)
           for dy in range(KH)] for q in range(2)]                      # (8B, 160)

    a2 = []
    for pbit in range(2):
        acc = None
        for dy in range(KH):
            q, s = (pbit + dy) % 2, ((pbit + dy) // 2) * B
            t = zz[q][dy][s:s + 5 * B]       # (5B, 160); row j*B+b <-> conv2 row v=2j+pbit
            acc = t if acc is None else acc + t
        a2.append(acc)

    # ---- pool2 rows + bias + ReLU, then 2-wide lane window max ----
    p2 = jnp.maximum(jnp.maximum(a2[0], a2[1]) + b2_ref[...], 0.0)      # (5B, 160)
    wm2 = jnp.maximum(p2[:, 0:144], p2[:, C2:C2 + 144])                 # (5B, 144)

    # ---- flatten: 5 aligned row-block slices, lane-concat to (B, 720).
    # The even-u pick and the PyTorch (c, h, w) flatten order live in wf1_ref.
    feat = jnp.concatenate([wm2[a * B:(a + 1) * B] for a in range(P2H)], axis=1)

    # ---- classifier: three dense matmuls with M = B ----
    h = jnp.maximum(jnp.dot(feat, wf1_ref[...],
                            preferred_element_type=f32) + bf1_ref[...], 0.0)
    h = jnp.maximum(jnp.dot(h, wf2_ref[...],
                            preferred_element_type=f32) + bf2_ref[...], 0.0)
    out_ref[0] = jnp.dot(h, wf3_ref[...],
                         preferred_element_type=f32) + bf3_ref[...]


# --------------------------- weight re-layout --------------------------------
def _build_m1(conv1_w):
    """Toeplitz matrices for conv1: (5, 128, 168); rows w*3+ci, cols xo*6+co."""
    w1t = jnp.transpose(conv1_w, (2, 3, 1, 0))            # (dy, dx, ci, co)
    w = jnp.arange(32)
    xo = jnp.arange(W1OUT)
    dx = w[:, None] - xo[None, :]                          # (32, 28)
    valid = (dx >= 0) & (dx < KW)
    m1 = w1t[:, jnp.clip(dx, 0, KW - 1), :, :]             # (5, 32, 28, 3, 6)
    m1 = m1 * valid[None, :, :, None, None]
    m1 = jnp.transpose(m1, (0, 1, 3, 2, 4)).reshape(KH, 32 * C_IN, N1)
    return jnp.pad(m1, ((0, 0), (0, LANES_IN - 32 * C_IN), (0, 0)))     # (5, 128, 168)


def _build_m2(conv2_w):
    """Toeplitz matrices for conv2: (5, 162, 160); rows xo*6+ci (even xo only),
    cols u*16+co.  The pool-1 column subsample is folded in here."""
    w2t = jnp.transpose(conv2_w, (2, 3, 1, 0))             # (dy, dx, ci, co)
    xo = jnp.arange(27)
    u = jnp.arange(W2OUT)
    dx = (xo // 2)[:, None] - u[None, :]                   # (27, 10)
    valid = (xo[:, None] % 2 == 0) & (dx >= 0) & (dx < KW)
    m2 = w2t[:, jnp.clip(dx, 0, KW - 1), :, :]             # (5, 27, 10, 6, 16)
    m2 = m2 * valid[None, :, :, None, None]
    return jnp.transpose(m2, (0, 1, 3, 2, 4)).reshape(KH, K2, N2)       # (5, 162, 160)


def _build_wf1(fc1_w):
    """fc1 weight with the pool-2 even-u pick and PyTorch flatten order folded
    in: (720, 120); rows 144*a + 16*u + co."""
    a = jnp.arange(P2H)
    u = jnp.arange(9)
    co = jnp.arange(C2)
    feat_idx = co[None, None, :] * 25 + a[:, None, None] * 5 + (u[None, :, None] // 2)
    w = fc1_w.T[feat_idx]                                  # (5, 9, 16, 120)
    w = w * (u % 2 == 0)[None, :, None, None]
    return w.reshape(P2H, 9 * C2, F1).reshape(NFLAT, F1)


def _const_spec(arr):
    nd = arr.ndim
    return pl.BlockSpec(arr.shape, lambda g, _nd=nd: (0,) * _nd)


# ------------------------------- wrapper -------------------------------------
def lenet_forward(x_nchw, p, block_b=8):
    assert block_b % 8 == 0 and block_b >= 8
    f32 = jnp.float32
    N = x_nchw.shape[0]
    B = block_b
    G = -(-N // B)
    NPAD = G * B

    # Boundary glue on the 12 KB network input only: NHWC, flatten (W, C) into
    # 96 lanes (pad to 128), permute rows into mod-4 residue order (10 rows per
    # class: 8 data + 2 zero pads), then interleave the B batch images so the
    # in-kernel flat row index is phys_row * B + b.
    xh = jnp.transpose(x_nchw, (0, 2, 3, 1)).astype(f32).reshape(N, H_IN, W_IN * C_IN)
    perm = (jnp.arange(H_IN) % 8) * 4 + (jnp.arange(H_IN) // 8)   # phys row -> orig row
    xh = xh[:, perm, :]
    xh = xh.reshape(N, 4, 8, W_IN * C_IN)
    xh = jnp.pad(xh, ((0, 0), (0, 0), (0, 2), (0, 0)))            # 10 rows per class
    xh = xh.reshape(N, ROWS_IN, W_IN * C_IN)
    xh = jnp.pad(xh, ((0, NPAD - N), (0, 0), (0, LANES_IN - W_IN * C_IN)))
    xh = xh.reshape(G, B, ROWS_IN, LANES_IN).transpose(0, 2, 1, 3)
    xh = xh.reshape(G, ROWS_IN * B, LANES_IN)                     # (G, 40*B, 128)

    # One-time weight re-layout (selection / flatten order folded into weights).
    m1 = _build_m1(p["conv1_w"])                                  # (5, 128, 168)
    m2 = _build_m2(p["conv2_w"])                                  # (5, 162, 160)
    wf1 = _build_wf1(p["fc1_w"])                                  # (720, 120)
    wf2 = p["fc2_w"].T                                            # (120, 84)
    wf3 = jnp.pad(p["fc3_w"].T, ((0, 0), (0, NOUT - F3)))         # (84, 128)
    b1r = jnp.tile(p["conv1_b"], W1OUT).reshape(1, N1)            # (1, 168)
    b2r = jnp.tile(p["conv2_b"], W2OUT).reshape(1, N2)            # (1, 160)
    bf1r = p["fc1_b"].reshape(1, F1)
    bf2r = p["fc2_b"].reshape(1, F2)
    bf3r = jnp.pad(p["fc3_b"], (0, NOUT - F3)).reshape(1, NOUT)

    in_specs = [
        pl.BlockSpec((1, ROWS_IN * B, LANES_IN), lambda g: (g, 0, 0)),
        _const_spec(m1), _const_spec(b1r),
        _const_spec(m2), _const_spec(b2r),
        _const_spec(wf1), _const_spec(bf1r),
        _const_spec(wf2), _const_spec(bf2r),
        _const_spec(wf3), _const_spec(bf3r),
    ]

    out = pl.pallas_call(
        _lenet_kernel,
        out_shape=jax.ShapeDtypeStruct((G, B, NOUT), f32),
        grid=(G,),
        in_specs=in_specs,
        out_specs=pl.BlockSpec((1, B, NOUT), lambda g: (g, 0, 0)),
        compiler_params=pltpu.CompilerParams(
            dimension_semantics=("parallel",),
            vmem_limit_bytes=32 * 1024 * 1024),   # > v5e's 16 MiB default, < v7x cap
    )(xh, m1, b1r, m2, b2r, wf1, bf1r, wf2, bf2r, wf3, bf3r)

    return out.reshape(NPAD, NOUT)[:N, :F3]


# ----------------------- params (deterministic init) -------------------------
def init_params(key):
    ks = jax.random.split(key, 10)

    def w(k, shape, fan_in):
        return jax.random.normal(k, shape, jnp.float32) / jnp.sqrt(float(fan_in))

    return dict(
        conv1_w=w(ks[0], (C1, C_IN, KH, KW), C_IN * KH * KW),
        conv1_b=0.01 * jax.random.normal(ks[1], (C1,), jnp.float32),
        conv2_w=w(ks[2], (C2, C1, KH, KW), C1 * KH * KW),
        conv2_b=0.01 * jax.random.normal(ks[3], (C2,), jnp.float32),
        fc1_w=w(ks[4], (F1, FEAT), FEAT),
        fc1_b=0.01 * jax.random.normal(ks[5], (F1,), jnp.float32),
        fc2_w=w(ks[6], (F2, F1), F1),
        fc2_b=0.01 * jax.random.normal(ks[7], (F2,), jnp.float32),
        fc3_w=w(ks[8], (F3, F2), F2),
        fc3_b=0.01 * jax.random.normal(ks[9], (F3,), jnp.float32),
    )


# -------------------- pure-JAX reference (PyTorch semantics) -----------------
def reference_forward(x, p):
    dn = ("NCHW", "OIHW", "NCHW")

    def pool(y):
        n, c, h, w = y.shape
        return y.reshape(n, c, h // 2, 2, w // 2, 2).max(axis=(3, 5))

    y = lax.conv_general_dilated(x, p["conv1_w"], (1, 1), "VALID", dimension_numbers=dn)
    y = pool(jnp.maximum(y + p["conv1_b"][None, :, None, None], 0.0))
    y = lax.conv_general_dilated(y, p["conv2_w"], (1, 1), "VALID", dimension_numbers=dn)
    y = pool(jnp.maximum(y + p["conv2_b"][None, :, None, None], 0.0))
    feat = y.reshape(y.shape[0], -1)
    h = jnp.maximum(feat @ p["fc1_w"].T + p["fc1_b"], 0.0)
    h = jnp.maximum(h @ p["fc2_w"].T + p["fc2_b"], 0.0)
    return h @ p["fc3_w"].T + p["fc3_b"]


if __name__ == "__main__":
    key = jax.random.PRNGKey(0)
    kx, kp = jax.random.split(key)
    # The classifier needs 16*5*5 features => 32x32 spatial, 3 input channels.
    # N=16 with B=8 -> 2 grid blocks (keeps both v7x TensorCores busy).
    x = jax.random.normal(kx, (16, 3, 32, 32), jnp.float32)     # NCHW like torch
    params = init_params(kp)

    out = jax.block_until_ready(jax.jit(lenet_forward)(x, params))
    ref = jax.block_until_ready(jax.jit(reference_forward)(x, params))

    assert out.shape == (16, 10), out.shape
    assert bool(jnp.all(jnp.isfinite(out)))
    max_err = float(jnp.max(jnp.abs(out - ref)))
    assert max_err < 2e-3, max_err
    print("KERNEL_OK")
</pallas_src>

<mosaic_0001>
module attributes {stable_mosaic.version = 11 : i64} {
  func.func @_lenet_kernel(%arg0: i32, %arg1: memref<1x320x128xf32, #tpu.memory_space<vmem>>, %arg2: memref<5x128x168xf32, #tpu.memory_space<vmem>>, %arg3: memref<1x168xf32, #tpu.memory_space<vmem>>, %arg4: memref<5x162x160xf32, #tpu.memory_space<vmem>>, %arg5: memref<1x160xf32, #tpu.memory_space<vmem>>, %arg6: memref<720x120xf32, #tpu.memory_space<vmem>>, %arg7: memref<1x120xf32, #tpu.memory_space<vmem>>, %arg8: memref<120x84xf32, #tpu.memory_space<vmem>>, %arg9: memref<1x84xf32, #tpu.memory_space<vmem>>, %arg10: memref<84x128xf32, #tpu.memory_space<vmem>>, %arg11: memref<1x128xf32, #tpu.memory_space<vmem>>, %arg12: memref<1x8x128xf32, #tpu.memory_space<vmem>>) attributes {dimension_semantics = [#tpu.dimension_semantics<parallel>], iteration_bounds = array<i64: 2>, scalar_prefetch = 0 : i64, scratch_operands = 0 : i64, tpu.core_type = #tpu.core_type<tc>, window_params = [{transform_indices = @transform_0, window_bounds = array<i64: 1, 320, 128>}, {pipeline_mode = #tpu.pipeline_mode<synchronous>, transform_indices = @transform_1, window_bounds = array<i64: 5, 128, 168>}, {pipeline_mode = #tpu.pipeline_mode<synchronous>, transform_indices = @transform_2, window_bounds = array<i64: 1, 168>}, {pipeline_mode = #tpu.pipeline_mode<synchronous>, transform_indices = @transform_3, window_bounds = array<i64: 5, 162, 160>}, {pipeline_mode = #tpu.pipeline_mode<synchronous>, transform_indices = @transform_4, window_bounds = array<i64: 1, 160>}, {pipeline_mode = #tpu.pipeline_mode<synchronous>, transform_indices = @transform_5, window_bounds = array<i64: 720, 120>}, {pipeline_mode = #tpu.pipeline_mode<synchronous>, transform_indices = @transform_6, window_bounds = array<i64: 1, 120>}, {pipeline_mode = #tpu.pipeline_mode<synchronous>, transform_indices = @transform_7, window_bounds = array<i64: 120, 84>}, {pipeline_mode = #tpu.pipeline_mode<synchronous>, transform_indices = @transform_8, window_bounds = array<i64: 1, 84>}, {pipeline_mode = #tpu.pipeline_mode<synchronous>, transform_indices = @transform_9, window_bounds = array<i64: 84, 128>}, {pipeline_mode = #tpu.pipeline_mode<synchronous>, transform_indices = @transform_10, window_bounds = array<i64: 1, 128>}, {transform_indices = @transform_11, window_bounds = array<i64: 1, 8, 128>}]} {
    %c0 = arith.constant 0 : index
    %c0_0 = arith.constant 0 : index
    %c0_1 = arith.constant 0 : index
    %0 = vector.load %arg1[%c0, %c0_0, %c0_1] : memref<1x320x128xf32, #tpu.memory_space<vmem>>, vector<1x320x128xf32>
    %1 = vector.shape_cast %0 : vector<1x320x128xf32> to vector<320x128xf32>
    %c0_2 = arith.constant 0 : index
    %c0_3 = arith.constant 0 : index
    %c0_4 = arith.constant 0 : index
    %2 = vector.load %arg2[%c0_2, %c0_3, %c0_4] : memref<5x128x168xf32, #tpu.memory_space<vmem>>, vector<1x128x168xf32>
    %3 = vector.shape_cast %2 : vector<1x128x168xf32> to vector<128x168xf32>
    %cst = arith.constant dense<0.000000e+00> : vector<320x168xf32>
    %4 = tpu.matmul %1, %3, %cst {dimension_numbers = #tpu.dot_dimension_numbers<[1], [0], [0], [1], [0, 0, 1, 1], [], []>} : vector<320x128xf32>, vector<128x168xf32>, vector<320x168xf32> -> vector<320x168xf32>
    %c1 = arith.constant 1 : index
    %c0_5 = arith.constant 0 : index
    %c0_6 = arith.constant 0 : index
    %5 = vector.load %arg2[%c1, %c0_5, %c0_6] : memref<5x128x168xf32, #tpu.memory_space<vmem>>, vector<1x128x168xf32>
    %6 = vector.shape_cast %5 : vector<1x128x168xf32> to vector<128x168xf32>
    %cst_7 = arith.constant dense<0.000000e+00> : vector<320x168xf32>
    %7 = tpu.matmul %1, %6, %cst_7 {dimension_numbers = #tpu.dot_dimension_numbers<[1], [0], [0], [1], [0, 0, 1, 1], [], []>} : vector<320x128xf32>, vector<128x168xf32>, vector<320x168xf32> -> vector<320x168xf32>
    %c2 = arith.constant 2 : index
    %c0_8 = arith.constant 0 : index
    %c0_9 = arith.constant 0 : index
    %8 = vector.load %arg2[%c2, %c0_8, %c0_9] : memref<5x128x168xf32, #tpu.memory_space<vmem>>, vector<1x128x168xf32>
    %9 = vector.shape_cast %8 : vector<1x128x168xf32> to vector<128x168xf32>
    %cst_10 = arith.constant dense<0.000000e+00> : vector<320x168xf32>
    %10 = tpu.matmul %1, %9, %cst_10 {dimension_numbers = #tpu.dot_dimension_numbers<[1], [0], [0], [1], [0, 0, 1, 1], [], []>} : vector<320x128xf32>, vector<128x168xf32>, vector<320x168xf32> -> vector<320x168xf32>
    %c3 = arith.constant 3 : index
    %c0_11 = arith.constant 0 : index
    %c0_12 = arith.constant 0 : index
    %11 = vector.load %arg2[%c3, %c0_11, %c0_12] : memref<5x128x168xf32, #tpu.memory_space<vmem>>, vector<1x128x168xf32>
    %12 = vector.shape_cast %11 : vector<1x128x168xf32> to vector<128x168xf32>
    %cst_13 = arith.constant dense<0.000000e+00> : vector<320x168xf32>
    %13 = tpu.matmul %1, %12, %cst_13 {dimension_numbers = #tpu.dot_dimension_numbers<[1], [0], [0], [1], [0, 0, 1, 1], [], []>} : vector<320x128xf32>, vector<128x168xf32>, vector<320x168xf32> -> vector<320x168xf32>
    %c4 = arith.constant 4 : index
    %c0_14 = arith.constant 0 : index
    %c0_15 = arith.constant 0 : index
    %14 = vector.load %arg2[%c4, %c0_14, %c0_15] : memref<5x128x168xf32, #tpu.memory_space<vmem>>, vector<1x128x168xf32>
    %15 = vector.shape_cast %14 : vector<1x128x168xf32> to vector<128x168xf32>
    %cst_16 = arith.constant dense<0.000000e+00> : vector<320x168xf32>
    %16 = tpu.matmul %1, %15, %cst_16 {dimension_numbers = #tpu.dot_dimension_numbers<[1], [0], [0], [1], [0, 0, 1, 1], [], []>} : vector<320x128xf32>, vector<128x168xf32>, vector<320x168xf32> -> vector<320x168xf32>
    %17 = vector.extract_strided_slice %4 {offsets = [0, 0], sizes = [64, 168], strides = [1, 1]} : vector<320x168xf32> to vector<64x168xf32>
    %18 = vector.extract_strided_slice %7 {offsets = [80, 0], sizes = [64, 168], strides = [1, 1]} : vector<320x168xf32> to vector<64x168xf32>
    %19 = arith.addf %17, %18 : vector<64x168xf32>
    %20 = vector.extract_strided_slice %10 {offsets = [160, 0], sizes = [64, 168], strides = [1, 1]} : vector<320x168xf32> to vector<64x168xf32>
    %21 = arith.addf %19, %20 : vector<64x168xf32>
    %22 = vector.extract_strided_slice %13 {offsets = [240, 0], sizes = [64, 168], strides = [1, 1]} : vector<320x168xf32> to vector<64x168xf32>
    %23 = arith.addf %21, %22 : vector<64x168xf32>
    %24 = vector.extract_strided_slice %16 {offsets = [8, 0], sizes = [64, 168], strides = [1, 1]} : vector<320x168xf32> to vector<64x168xf32>
    %25 = arith.addf %23, %24 : vector<64x168xf32>
    %26 = vector.extract_strided_slice %4 {offsets = [80, 0], sizes = [64, 168], strides = [1, 1]} : vector<320x168xf32> to vector<64x168xf32>
    %27 = vector.extract_strided_slice %7 {offsets = [160, 0], sizes = [64, 168], strides = [1, 1]} : vector<320x168xf32> to vector<64x168xf32>
    %28 = arith.addf %26, %27 : vector<64x168xf32>
    %29 = vector.extract_strided_slice %10 {offsets = [240, 0], sizes = [64, 168], strides = [1, 1]} : vector<320x168xf32> to vector<64x168xf32>
    %30 = arith.addf %28, %29 : vector<64x168xf32>
    %31 = vector.extract_strided_slice %13 {offsets = [8, 0], sizes = [64, 168], strides = [1, 1]} : vector<320x168xf32> to vector<64x168xf32>
    %32 = arith.addf %30, %31 : vector<64x168xf32>
    %33 = vector.extract_strided_slice %16 {offsets = [88, 0], sizes = [64, 168], strides = [1, 1]} : vector<320x168xf32> to vector<64x168xf32>
    %34 = arith.addf %32, %33 : vector<64x168xf32>
    %35 = vector.extract_strided_slice %4 {offsets = [160, 0], sizes = [64, 168], strides = [1, 1]} : vector<320x168xf32> to vector<64x168xf32>
    %36 = vector.extract_strided_slice %7 {offsets = [240, 0], sizes = [64, 168], strides = [1, 1]} : vector<320x168xf32> to vector<64x168xf32>
    %37 = arith.addf %35, %36 : vector<64x168xf32>
    %38 = vector.extract_strided_slice %10 {offsets = [8, 0], sizes = [64, 168], strides = [1, 1]} : vector<320x168xf32> to vector<64x168xf32>
    %39 = arith.addf %37, %38 : vector<64x168xf32>
    %40 = vector.extract_strided_slice %13 {offsets = [88, 0], sizes = [64, 168], strides = [1, 1]} : vector<320x168xf32> to vector<64x168xf32>
    %41 = arith.addf %39, %40 : vector<64x168xf32>
    %42 = vector.extract_strided_slice %16 {offsets = [168, 0], sizes = [64, 168], strides = [1, 1]} : vector<320x168xf32> to vector<64x168xf32>
    %43 = arith.addf %41, %42 : vector<64x168xf32>
    %44 = vector.extract_strided_slice %4 {offsets = [240, 0], sizes = [64, 168], strides = [1, 1]} : vector<320x168xf32> to vector<64x168xf32>
    %45 = vector.extract_strided_slice %7 {offsets = [8, 0], sizes = [64, 168], strides = [1, 1]} : vector<320x168xf32> to vector<64x168xf32>
    %46 = arith.addf %44, %45 : vector<64x168xf32>
    %47 = vector.extract_strided_slice %10 {offsets = [88, 0], sizes = [64, 168], strides = [1, 1]} : vector<320x168xf32> to vector<64x168xf32>
    %48 = arith.addf %46, %47 : vector<64x168xf32>
    %49 = vector.extract_strided_slice %13 {offsets = [168, 0], sizes = [64, 168], strides = [1, 1]} : vector<320x168xf32> to vector<64x168xf32>
    %50 = arith.addf %48, %49 : vector<64x168xf32>
    %51 = vector.extract_strided_slice %16 {offsets = [248, 0], sizes = [64, 168], strides = [1, 1]} : vector<320x168xf32> to vector<64x168xf32>
    %52 = arith.addf %50, %51 : vector<64x168xf32>
    %53 = arith.maximumf %25, %34 : vector<64x168xf32>
    %c0_17 = arith.constant 0 : index
    %c0_18 = arith.constant 0 : index
    %54 = vector.load %arg3[%c0_17, %c0_18] : memref<1x168xf32, #tpu.memory_space<vmem>>, vector<1x168xf32>
    %55 = vector.broadcast %54 : vector<1x168xf32> to vector<64x168xf32>
    %56 = arith.addf %53, %55 : vector<64x168xf32>
    %cst_19 = arith.constant 0.000000e+00 : f32
    %57 = vector.broadcast %cst_19 : f32 to vector<64x168xf32>
    %58 = arith.maximumf %56, %57 : vector<64x168xf32>
    %59 = arith.maximumf %43, %52 : vector<64x168xf32>
    %c0_20 = arith.constant 0 : index
    %c0_21 = arith.constant 0 : index
    %60 = vector.load %arg3[%c0_20, %c0_21] : memref<1x168xf32, #tpu.memory_space<vmem>>, vector<1x168xf32>
    %61 = vector.broadcast %60 : vector<1x168xf32> to vector<64x168xf32>
    %62 = arith.addf %59, %61 : vector<64x168xf32>
    %cst_22 = arith.constant 0.000000e+00 : f32
    %63 = vector.broadcast %cst_22 : f32 to vector<64x168xf32>
    %64 = arith.maximumf %62, %63 : vector<64x168xf32>
    %65 = vector.extract_strided_slice %58 {offsets = [0, 0], sizes = [64, 162], strides = [1, 1]} : vector<64x168xf32> to vector<64x162xf32>
    %66 = vector.extract_strided_slice %58 {offsets = [0, 6], sizes = [64, 162], strides = [1, 1]} : vector<64x168xf32> to vector<64x162xf32>
    %67 = arith.maximumf %65, %66 : vector<64x162xf32>
    %68 = vector.extract_strided_slice %64 {offsets = [0, 0], sizes = [64, 162], strides = [1, 1]} : vector<64x168xf32> to vector<64x162xf32>
    %69 = vector.extract_strided_slice %64 {offsets = [0, 6], sizes = [64, 162], strides = [1, 1]} : vector<64x168xf32> to vector<64x162xf32>
    %70 = arith.maximumf %68, %69 : vector<64x162xf32>
    %c0_23 = arith.constant 0 : index
    %c0_24 = arith.constant 0 : index
    %c0_25 = arith.constant 0 : index
    %71 = vector.load %arg4[%c0_23, %c0_24, %c0_25] : memref<5x162x160xf32, #tpu.memory_space<vmem>>, vector<1x162x160xf32>
    %72 = vector.shape_cast %71 : vector<1x162x160xf32> to vector<162x160xf32>
    %cst_26 = arith.constant dense<0.000000e+00> : vector<64x160xf32>
    %73 = tpu.matmul %67, %72, %cst_26 {dimension_numbers = #tpu.dot_dimension_numbers<[1], [0], [0], [1], [0, 0, 1, 1], [], []>} : vector<64x162xf32>, vector<162x160xf32>, vector<64x160xf32> -> vector<64x160xf32>
    %c1_27 = arith.constant 1 : index
    %c0_28 = arith.constant 0 : index
    %c0_29 = arith.constant 0 : index
    %74 = vector.load %arg4[%c1_27, %c0_28, %c0_29] : memref<5x162x160xf32, #tpu.memory_space<vmem>>, vector<1x162x160xf32>
    %75 = vector.shape_cast %74 : vector<1x162x160xf32> to vector<162x160xf32>
    %cst_30 = arith.constant dense<0.000000e+00> : vector<64x160xf32>
    %76 = tpu.matmul %67, %75, %cst_30 {dimension_numbers = #tpu.dot_dimension_numbers<[1], [0], [0], [1], [0, 0, 1, 1], [], []>} : vector<64x162xf32>, vector<162x160xf32>, vector<64x160xf32> -> vector<64x160xf32>
    %c2_31 = arith.constant 2 : index
    %c0_32 = arith.constant 0 : index
    %c0_33 = arith.constant 0 : index
    %77 = vector.load %arg4[%c2_31, %c0_32, %c0_33] : memref<5x162x160xf32, #tpu.memory_space<vmem>>, vector<1x162x160xf32>
    %78 = vector.shape_cast %77 : vector<1x162x160xf32> to vector<162x160xf32>
    %cst_34 = arith.constant dense<0.000000e+00> : vector<64x160xf32>
    %79 = tpu.matmul %67, %78, %cst_34 {dimension_numbers = #tpu.dot_dimension_numbers<[1], [0], [0], [1], [0, 0, 1, 1], [], []>} : vector<64x162xf32>, vector<162x160xf32>, vector<64x160xf32> -> vector<64x160xf32>
    %c3_35 = arith.constant 3 : index
    %c0_36 = arith.constant 0 : index
    %c0_37 = arith.constant 0 : index
    %80 = vector.load %arg4[%c3_35, %c0_36, %c0_37] : memref<5x162x160xf32, #tpu.memory_space<vmem>>, vector<1x162x160xf32>
    %81 = vector.shape_cast %80 : vector<1x162x160xf32> to vector<162x160xf32>
    %cst_38 = arith.constant dense<0.000000e+00> : vector<64x160xf32>
    %82 = tpu.matmul %67, %81, %cst_38 {dimension_numbers = #tpu.dot_dimension_numbers<[1], [0], [0], [1], [0, 0, 1, 1], [], []>} : vector<64x162xf32>, vector<162x160xf32>, vector<64x160xf32> -> vector<64x160xf32>
    %c4_39 = arith.constant 4 : index
    %c0_40 = arith.constant 0 : index
    %c0_41 = arith.constant 0 : index
    %83 = vector.load %arg4[%c4_39, %c0_40, %c0_41] : memref<5x162x160xf32, #tpu.memory_space<vmem>>, vector<1x162x160xf32>
    %84 = vector.shape_cast %83 : vector<1x162x160xf32> to vector<162x160xf32>
    %cst_42 = arith.constant dense<0.000000e+00> : vector<64x160xf32>
    %85 = tpu.matmul %67, %84, %cst_42 {dimension_numbers = #tpu.dot_dimension_numbers<[1], [0], [0], [1], [0, 0, 1, 1], [], []>} : vector<64x162xf32>, vector<162x160xf32>, vector<64x160xf32> -> vector<64x160xf32>
    %c0_43 = arith.constant 0 : index
    %c0_44 = arith.constant 0 : index
    %c0_45 = arith.constant 0 : index
    %86 = vector.load %arg4[%c0_43, %c0_44, %c0_45] : memref<5x162x160xf32, #tpu.memory_space<vmem>>, vector<1x162x160xf32>
    %87 = vector.shape_cast %86 : vector<1x162x160xf32> to vector<162x160xf32>
    %cst_46 = arith.constant dense<0.000000e+00> : vector<64x160xf32>
    %88 = tpu.matmul %70, %87, %cst_46 {dimension_numbers = #tpu.dot_dimension_numbers<[1], [0], [0], [1], [0, 0, 1, 1], [], []>} : vector<64x162xf32>, vector<162x160xf32>, vector<64x160xf32> -> vector<64x160xf32>
    %c1_47 = arith.constant 1 : index
    %c0_48 = arith.constant 0 : index
    %c0_49 = arith.constant 0 : index
    %89 = vector.load %arg4[%c1_47, %c0_48, %c0_49] : memref<5x162x160xf32, #tpu.memory_space<vmem>>, vector<1x162x160xf32>
    %90 = vector.shape_cast %89 : vector<1x162x160xf32> to vector<162x160xf32>
    %cst_50 = arith.constant dense<0.000000e+00> : vector<64x160xf32>
    %91 = tpu.matmul %70, %90, %cst_50 {dimension_numbers = #tpu.dot_dimension_numbers<[1], [0], [0], [1], [0, 0, 1, 1], [], []>} : vector<64x162xf32>, vector<162x160xf32>, vector<64x160xf32> -> vector<64x160xf32>
    %c2_51 = arith.constant 2 : index
    %c0_52 = arith.constant 0 : index
    %c0_53 = arith.constant 0 : index
    %92 = vector.load %arg4[%c2_51, %c0_52, %c0_53] : memref<5x162x160xf32, #tpu.memory_space<vmem>>, vector<1x162x160xf32>
    %93 = vector.shape_cast %92 : vector<1x162x160xf32> to vector<162x160xf32>
    %cst_54 = arith.constant dense<0.000000e+00> : vector<64x160xf32>
    %94 = tpu.matmul %70, %93, %cst_54 {dimension_numbers = #tpu.dot_dimension_numbers<[1], [0], [0], [1], [0, 0, 1, 1], [], []>} : vector<64x162xf32>, vector<162x160xf32>, vector<64x160xf32> -> vector<64x160xf32>
    %c3_55 = arith.constant 3 : index
    %c0_56 = arith.constant 0 : index
    %c0_57 = arith.constant 0 : index
    %95 = vector.load %arg4[%c3_55, %c0_56, %c0_57] : memref<5x162x160xf32, #tpu.memory_space<vmem>>, vector<1x162x160xf32>
    %96 = vector.shape_cast %95 : vector<1x162x160xf32> to vector<162x160xf32>
    %cst_58 = arith.constant dense<0.000000e+00> : vector<64x160xf32>
    %97 = tpu.matmul %70, %96, %cst_58 {dimension_numbers = #tpu.dot_dimension_numbers<[1], [0], [0], [1], [0, 0, 1, 1], [], []>} : vector<64x162xf32>, vector<162x160xf32>, vector<64x160xf32> -> vector<64x160xf32>
    %c4_59 = arith.constant 4 : index
    %c0_60 = arith.constant 0 : index
    %c0_61 = arith.constant 0 : index
    %98 = vector.load %arg4[%c4_59, %c0_60, %c0_61] : memref<5x162x160xf32, #tpu.memory_space<vmem>>, vector<1x162x160xf32>
    %99 = vector.shape_cast %98 : vector<1x162x160xf32> to vector<162x160xf32>
    %cst_62 = arith.constant dense<0.000000e+00> : vector<64x160xf32>
    %100 = tpu.matmul %70, %99, %cst_62 {dimension_numbers = #tpu.dot_dimension_numbers<[1], [0], [0], [1], [0, 0, 1, 1], [], []>} : vector<64x162xf32>, vector<162x160xf32>, vector<64x160xf32> -> vector<64x160xf32>
    %101 = vector.extract_strided_slice %73 {offsets = [0, 0], sizes = [40, 160], strides = [1, 1]} : vector<64x160xf32> to vector<40x160xf32>
    %102 = vector.extract_strided_slice %91 {offsets = [0, 0], sizes = [40, 160], strides = [1, 1]} : vector<64x160xf32> to vector<40x160xf32>
    %103 = arith.addf %101, %102 : vector<40x160xf32>
    %104 = vector.extract_strided_slice %79 {offsets = [8, 0], sizes = [40, 160], strides = [1, 1]} : vector<64x160xf32> to vector<40x160xf32>
    %105 = arith.addf %103, %104 : vector<40x160xf32>
    %106 = vector.extract_strided_slice %97 {offsets = [8, 0], sizes = [40, 160], strides = [1, 1]} : vector<64x160xf32> to vector<40x160xf32>
    %107 = arith.addf %105, %106 : vector<40x160xf32>
    %108 = vector.extract_strided_slice %85 {offsets = [16, 0], sizes = [40, 160], strides = [1, 1]} : vector<64x160xf32> to vector<40x160xf32>
    %109 = arith.addf %107, %108 : vector<40x160xf32>
    %110 = vector.extract_strided_slice %88 {offsets = [0, 0], sizes = [40, 160], strides = [1, 1]} : vector<64x160xf32> to vector<40x160xf32>
    %111 = vector.extract_strided_slice %76 {offsets = [8, 0], sizes = [40, 160], strides = [1, 1]} : vector<64x160xf32> to vector<40x160xf32>
    %112 = arith.addf %110, %111 : vector<40x160xf32>
    %113 = vector.extract_strided_slice %94 {offsets = [8, 0], sizes = [40, 160], strides = [1, 1]} : vector<64x160xf32> to vector<40x160xf32>
    %114 = arith.addf %112, %113 : vector<40x160xf32>
    %115 = vector.extract_strided_slice %82 {offsets = [16, 0], sizes = [40, 160], strides = [1, 1]} : vector<64x160xf32> to vector<40x160xf32>
    %116 = arith.addf %114, %115 : vector<40x160xf32>
    %117 = vector.extract_strided_slice %100 {offsets = [16, 0], sizes = [40, 160], strides = [1, 1]} : vector<64x160xf32> to vector<40x160xf32>
    %118 = arith.addf %116, %117 : vector<40x160xf32>
    %119 = arith.maximumf %109, %118 : vector<40x160xf32>
    %c0_63 = arith.constant 0 : index
    %c0_64 = arith.constant 0 : index
    %120 = vector.load %arg5[%c0_63, %c0_64] : memref<1x160xf32, #tpu.memory_space<vmem>>, vector<1x160xf32>
    %121 = vector.broadcast %120 : vector<1x160xf32> to vector<40x160xf32>
    %122 = arith.addf %119, %121 : vector<40x160xf32>
    %cst_65 = arith.constant 0.000000e+00 : f32
    %123 = vector.broadcast %cst_65 : f32 to vector<40x160xf32>
    %124 = arith.maximumf %122, %123 : vector<40x160xf32>
    %125 = vector.extract_strided_slice %124 {offsets = [0, 0], sizes = [40, 144], strides = [1, 1]} : vector<40x160xf32> to vector<40x144xf32>
    %126 = vector.extract_strided_slice %124 {offsets = [0, 16], sizes = [40, 144], strides = [1, 1]} : vector<40x160xf32> to vector<40x144xf32>
    %127 = arith.maximumf %125, %126 : vector<40x144xf32>
    %128 = vector.extract_strided_slice %127 {offsets = [0, 0], sizes = [8, 144], strides = [1, 1]} : vector<40x144xf32> to vector<8x144xf32>
    %129 = vector.extract_strided_slice %127 {offsets = [8, 0], sizes = [8, 144], strides = [1, 1]} : vector<40x144xf32> to vector<8x144xf32>
    %130 = vector.extract_strided_slice %127 {offsets = [16, 0], sizes = [8, 144], strides = [1, 1]} : vector<40x144xf32> to vector<8x144xf32>
    %131 = vector.extract_strided_slice %127 {offsets = [24, 0], sizes = [8, 144], strides = [1, 1]} : vector<40x144xf32> to vector<8x144xf32>
    %132 = vector.extract_strided_slice %127 {offsets = [32, 0], sizes = [8, 144], strides = [1, 1]} : vector<40x144xf32> to vector<8x144xf32>
    %133 = tpu.concatenate %128, %129, %130, %131, %132 in 1 : vector<8x144xf32>, vector<8x144xf32>, vector<8x144xf32>, vector<8x144xf32>, vector<8x144xf32> -> vector<8x720xf32>
    %c0_66 = arith.constant 0 : index
    %c0_67 = arith.constant 0 : index
    %134 = vector.load %arg6[%c0_66, %c0_67] : memref<720x120xf32, #tpu.memory_space<vmem>>, vector<720x120xf32>
    %cst_68 = arith.constant dense<0.000000e+00> : vector<8x120xf32>
    %135 = tpu.matmul %133, %134, %cst_68 {dimension_numbers = #tpu.dot_dimension_numbers<[1], [0], [0], [1], [0, 0, 1, 1], [], []>} : vector<8x720xf32>, vector<720x120xf32>, vector<8x120xf32> -> vector<8x120xf32>
    %c0_69 = arith.constant 0 : index
    %c0_70 = arith.constant 0 : index
    %136 = vector.load %arg7[%c0_69, %c0_70] : memref<1x120xf32, #tpu.memory_space<vmem>>, vector<1x120xf32>
    %137 = vector.broadcast %136 : vector<1x120xf32> to vector<8x120xf32>
    %138 = arith.addf %135, %137 : vector<8x120xf32>
    %cst_71 = arith.constant 0.000000e+00 : f32
    %139 = vector.broadcast %cst_71 : f32 to vector<8x120xf32>
    %140 = arith.maximumf %138, %139 : vector<8x120xf32>
    %c0_72 = arith.constant 0 : index
    %c0_73 = arith.constant 0 : index
    %141 = vector.load %arg8[%c0_72, %c0_73] : memref<120x84xf32, #tpu.memory_space<vmem>>, vector<120x84xf32>
    %cst_74 = arith.constant dense<0.000000e+00> : vector<8x84xf32>
    %142 = tpu.matmul %140, %141, %cst_74 {dimension_numbers = #tpu.dot_dimension_numbers<[1], [0], [0], [1], [0, 0, 1, 1], [], []>} : vector<8x120xf32>, vector<120x84xf32>, vector<8x84xf32> -> vector<8x84xf32>
    %c0_75 = arith.constant 0 : index
    %c0_76 = arith.constant 0 : index
    %143 = vector.load %arg9[%c0_75, %c0_76] : memref<1x84xf32, #tpu.memory_space<vmem>>, vector<1x84xf32>
    %144 = vector.broadcast %143 : vector<1x84xf32> to vector<8x84xf32>
    %145 = arith.addf %142, %144 : vector<8x84xf32>
    %cst_77 = arith.constant 0.000000e+00 : f32
    %146 = vector.broadcast %cst_77 : f32 to vector<8x84xf32>
    %147 = arith.maximumf %145, %146 : vector<8x84xf32>
    %c0_78 = arith.constant 0 : index
    %c0_79 = arith.constant 0 : index
    %148 = vector.load %arg10[%c0_78, %c0_79] : memref<84x128xf32, #tpu.memory_space<vmem>>, vector<84x128xf32>
    %cst_80 = arith.constant dense<0.000000e+00> : vector<8x128xf32>
    %149 = tpu.matmul %147, %148, %cst_80 {dimension_numbers = #tpu.dot_dimension_numbers<[1], [0], [0], [1], [0, 0, 1, 1], [], []>} : vector<8x84xf32>, vector<84x128xf32>, vector<8x128xf32> -> vector<8x128xf32>
    %c0_81 = arith.constant 0 : index
    %c0_82 = arith.constant 0 : index
    %150 = vector.load %arg11[%c0_81, %c0_82] : memref<1x128xf32, #tpu.memory_space<vmem>>, vector<1x128xf32>
    %151 = vector.broadcast %150 : vector<1x128xf32> to vector<8x128xf32>
    %152 = arith.addf %149, %151 : vector<8x128xf32>
    %c0_83 = arith.constant 0 : index
    %c0_84 = arith.constant 0 : index
    %c0_85 = arith.constant 0 : index
    %153 = vector.load %arg12[%c0_83, %c0_84, %c0_85] : memref<1x8x128xf32, #tpu.memory_space<vmem>>, vector<1x8x128xf32>
    %154 = vector.shape_cast %153 : vector<1x8x128xf32> to vector<8x128xf32>
    %155 = vector.shape_cast %152 : vector<8x128xf32> to vector<1x8x128xf32>
    tpu.vector_store %arg12[%c0_83, %c0_84, %c0_85], %155 {strides = array<i32>} : memref<1x8x128xf32, #tpu.memory_space<vmem>>, vector<1x8x128xf32>,
    return
  }
  func.func @transform_0(%arg0: i32) -> (i32, i32, i32) {
    %c0_i32 = arith.constant 0 : i32
    %c0_i32_0 = arith.constant 0 : i32
    %c0_i32_1 = arith.constant 0 : i32
    return %arg0, %c0_i32, %c0_i32_0 : i32, i32, i32
  }
  func.func @transform_1(%arg0: i32) -> (i32, i32, i32) {
    %c0_i32 = arith.constant 0 : i32
    %c0_i32_0 = arith.constant 0 : i32
    %c0_i32_1 = arith.constant 0 : i32
    %c0_i32_2 = arith.constant 0 : i32
    return %c0_i32, %c0_i32_0, %c0_i32_1 : i32, i32, i32
  }
  func.func @transform_2(%arg0: i32) -> (i32, i32) {
    %c0_i32 = arith.constant 0 : i32
    %c0_i32_0 = arith.constant 0 : i32
    %c0_i32_1 = arith.constant 0 : i32
    return %c0_i32, %c0_i32_0 : i32, i32
  }
  func.func @transform_3(%arg0: i32) -> (i32, i32, i32) {
    %c0_i32 = arith.constant 0 : i32
    %c0_i32_0 = arith.constant 0 : i32
    %c0_i32_1 = arith.constant 0 : i32
    %c0_i32_2 = arith.constant 0 : i32
    return %c0_i32, %c0_i32_0, %c0_i32_1 : i32, i32, i32
  }
  func.func @transform_4(%arg0: i32) -> (i32, i32) {
    %c0_i32 = arith.constant 0 : i32
    %c0_i32_0 = arith.constant 0 : i32
    %c0_i32_1 = arith.constant 0 : i32
    return %c0_i32, %c0_i32_0 : i32, i32
  }
  func.func @transform_5(%arg0: i32) -> (i32, i32) {
    %c0_i32 = arith.constant 0 : i32
    %c0_i32_0 = arith.constant 0 : i32
    %c0_i32_1 = arith.constant 0 : i32
    return %c0_i32, %c0_i32_0 : i32, i32
  }
  func.func @transform_6(%arg0: i32) -> (i32, i32) {
    %c0_i32 = arith.constant 0 : i32
    %c0_i32_0 = arith.constant 0 : i32
    %c0_i32_1 = arith.constant 0 : i32
    return %c0_i32, %c0_i32_0 : i32, i32
  }
  func.func @transform_7(%arg0: i32) -> (i32, i32) {
    %c0_i32 = arith.constant 0 : i32
    %c0_i32_0 = arith.constant 0 : i32
    %c0_i32_1 = arith.constant 0 : i32
    return %c0_i32, %c0_i32_0 : i32, i32
  }
  func.func @transform_8(%arg0: i32) -> (i32, i32) {
    %c0_i32 = arith.constant 0 : i32
    %c0_i32_0 = arith.constant 0 : i32
    %c0_i32_1 = arith.constant 0 : i32
    return %c0_i32, %c0_i32_0 : i32, i32
  }
  func.func @transform_9(%arg0: i32) -> (i32, i32) {
    %c0_i32 = arith.constant 0 : i32
    %c0_i32_0 = arith.constant 0 : i32
    %c0_i32_1 = arith.constant 0 : i32
    return %c0_i32, %c0_i32_0 : i32, i32
  }
  func.func @transform_10(%arg0: i32) -> (i32, i32) {
    %c0_i32 = arith.constant 0 : i32
    %c0_i32_0 = arith.constant 0 : i32
    %c0_i32_1 = arith.constant 0 : i32
    return %c0_i32, %c0_i32_0 : i32, i32
  }
  func.func @transform_11(%arg0: i32) -> (i32, i32, i32) {
    %c0_i32 = arith.constant 0 : i32
    %c0_i32_0 = arith.constant 0 : i32
    %c0_i32_1 = arith.constant 0 : i32
    return %arg0, %c0_i32, %c0_i32_0 : i32, i32, i32
  }
}

</mosaic_0001>

<llo_original>
// kernel: tile.13
$region0: #{tile.13}
  #allocation0 [shape = 's32[1]{0}', space=sflag, size = 0x4, scoped, tag = 'scoped memory for tile.13']
  %s0 = inlined_call_operand.vmem [shape: f32[6], index: 0, kind: input, shape index: {}]
  %s1 = inlined_call_operand.vmem [shape: f32[28,6], index: 1, kind: output, shape index: {}]
  // Predicated region
  $region2: #{tile.13} parent=0 // pred_check
    _
  $region3: #{tile.13} parent=0 // pred_check_branch
    %3 = sbr.rel (0) target = $region5
  $region4: #{tile.13} parent=0 // pred_region
    _
  $region5: #{tile.13} parent=0 // pred_fallthru
    _
  %v4 = vld [vmem:[%s0] ss:$0 sm:$0xff]
  %5 = vst [vmem:[%s1] sm:$0xff] %v4
  %s6 = scalar_lea.vmem %s1, 8
  %7 = vst [vmem:[%s6] sm:$0xff] %v4
  %s8 = scalar_lea.vmem %s1, 16
  %9 = vst [vmem:[%s8] sm:$0xff] %v4
  %s10 = scalar_lea.vmem %s1, 24
  %11 = vst [vmem:[%s10] sm:$0xff] %v4

// kernel: tile.14
$region0: #{tile.14}
  %s0 = inlined_call_operand.vmem [shape: f32[28,6], index: 0, kind: input, shape index: {}]
  %s1 = inlined_call_operand.vmem [shape: f32[1,168], index: 1, kind: output, shape index: {}]
  $region1: #{tile.14} parent=0
    #allocation0 [shape = 'u8[8192]{0}', space=vmem, size = 0x2000, scoped, tag = 'scoped mem for output reshape']
    %v2 = vld [vmem:[%s0] sm:$0x1]
    %vm3 = vcmask 48128
    %4 = vst.msk [vmem:[#allocation0] sm:$0x1] %vm3, %v2
    %s5 = scalar_lea.vmem %s0, 21
    %v6 = vld [vmem:[%s5] sm:$0x1]
    %s7 = scalar_lea.vmem %s0, 21
    %v8 = vld [vmem:[%s7] sm:$0x1]
    %vm9 = vcmask 15360
    %v10 = vsel %vm9, %v8, %v6
    %11 = vrot.lane.b32.xlu0 %v10, 126
    %v12 = vpop.permute.xlu0 %11
    %vm13 = vcmask 31744
    %s14 = scalar_lea.vmem [#allocation0], 8
    %15 = vst.msk [vmem:[%s14] sm:$0x1] %vm13, %v12
    %vm16 = vcmask 1048560
    %17 = vst.msk [vmem:[#allocation0] sm:$0x1] %vm16, %v12
    %s18 = scalar_lea.vmem %s0, 20
    %v19 = vld [vmem:[%s18] sm:$0x1]
    %20 = vrot.lane.b32.xlu0 %v19, 120
    %v21 = vpop.permute.xlu0 %20
    %vm22 = vcmask 1032128
    %23 = vst.msk [vmem:[#allocation0] sm:$0x1] %vm22, %v21
    %s24 = scalar_lea.vmem %s0, 19
    %v25 = vld [vmem:[%s24] sm:$0x1]
    %26 = vrot.lane.b32.xlu0 %v25, 114
    %v27 = vpop.permute.xlu0 %26
    %vm28 = vcmask 982928
    %29 = vst.msk [vmem:[#allocation0] sm:$0x1] %vm28, %v27
    %s30 = scalar_lea.vmem %s0, 18
    %v31 = vld [vmem:[%s30] sm:$0x1]
    %32 = vrot.lane.b32.xlu0 %v31, 108
    %v33 = vpop.permute.xlu0 %32
    %vm34 = vcmask 933728
    %35 = vst.msk [vmem:[#allocation0] sm:$0x1] %vm34, %v33
    %s36 = scalar_lea.vmem %s0, 17
    %v37 = vld [vmem:[%s36] sm:$0x1]
    %38 = vrot.lane.b32.xlu0 %v37, 102
    %v39 = vpop.permute.xlu0 %38
    %vm40 = vcmask 884528
    %41 = vst.msk [vmem:[#allocation0] sm:$0x1] %vm40, %v39
    %s42 = scalar_lea.vmem %s0, 16
    %v43 = vld [vmem:[%s42] sm:$0x1]
    %44 = vrot.lane.b32.xlu0 %v43, 96
    %v45 = vpop.permute.xlu0 %44
    %vm46 = vcmask 835328
    %47 = vst.msk [vmem:[#allocation0] sm:$0x1] %vm46, %v45
    %s48 = scalar_lea.vmem %s0, 15
    %v49 = vld [vmem:[%s48] sm:$0x1]
    %50 = vrot.lane.b32.xlu0 %v49, 90
    %v51 = vpop.permute.xlu0 %50
    %vm52 = vcmask 786128
    %53 = vst.msk [vmem:[#allocation0] sm:$0x1] %vm52, %v51
    %s54 = scalar_lea.vmem %s0, 14
    %v55 = vld [vmem:[%s54] sm:$0x1]
    %56 = vrot.lane.b32.xlu0 %v55, 84
    %v57 = vpop.permute.xlu0 %56
    %vm58 = vcmask 736928
    %59 = vst.msk [vmem:[#allocation0] sm:$0x1] %vm58, %v57
    %s60 = scalar_lea.vmem %s0, 13
    %v61 = vld [vmem:[%s60] sm:$0x1]
    %62 = vrot.lane.b32.xlu0 %v61, 78
    %v63 = vpop.permute.xlu0 %62
    %vm64 = vcmask 687728
    %65 = vst.msk [vmem:[#allocation0] sm:$0x1] %vm64, %v63
    %s66 = scalar_lea.vmem %s0, 12
    %v67 = vld [vmem:[%s66] sm:$0x1]
    %68 = vrot.lane.b32.xlu0 %v67, 72
    %v69 = vpop.permute.xlu0 %68
    %vm70 = vcmask 638528
    %71 = vst.msk [vmem:[#allocation0] sm:$0x1] %vm70, %v69
    %s72 = scalar_lea.vmem %s0, 11
    %v73 = vld [vmem:[%s72] sm:$0x1]
    %74 = vrot.lane.b32.xlu0 %v73, 66
    %v75 = vpop.permute.xlu0 %74
    %vm76 = vcmask 589328
    %77 = vst.msk [vmem:[#allocation0] sm:$0x1] %vm76, %v75
    %s78 = scalar_lea.vmem %s0, 10
    %v79 = vld [vmem:[%s78] sm:$0x1]
    %80 = vrot.lane.b32.xlu0 %v79, 60
    %v81 = vpop.permute.xlu0 %80
    %vm82 = vcmask 540128
    %83 = vst.msk [vmem:[#allocation0] sm:$0x1] %vm82, %v81
    %s84 = scalar_lea.vmem %s0, 9
    %v85 = vld [vmem:[%s84] sm:$0x1]
    %86 = vrot.lane.b32.xlu0 %v85, 54
    %v87 = vpop.permute.xlu0 %86
    %vm88 = vcmask 490928
    %89 = vst.msk [vmem:[#allocation0] sm:$0x1] %vm88, %v87
    %s90 = scalar_lea.vmem %s0, 8
    %v91 = vld [vmem:[%s90] sm:$0x1]
    %92 = vrot.lane.b32.xlu0 %v91, 48
    %v93 = vpop.permute.xlu0 %92
    %vm94 = vcmask 441728
    %95 = vst.msk [vmem:[#allocation0] sm:$0x1] %vm94, %v93
    %s96 = scalar_lea.vmem %s0, 7
    %v97 = vld [vmem:[%s96] sm:$0x1]
    %98 = vrot.lane.b32.xlu0 %v97, 42
    %v99 = vpop.permute.xlu0 %98
    %vm100 = vcmask 392528
    %101 = vst.msk [vmem:[#allocation0] sm:$0x1] %vm100, %v99
    %s102 = scalar_lea.vmem %s0, 6
    %v103 = vld [vmem:[%s102] sm:$0x1]
    %104 = vrot.lane.b32.xlu0 %v103, 36
    %v105 = vpop.permute.xlu0 %104
    %vm106 = vcmask 343328
    %107 = vst.msk [vmem:[#allocation0] sm:$0x1] %vm106, %v105
    %s108 = scalar_lea.vmem %s0, 27
    %v109 = vld [vmem:[%s108] sm:$0x1]
    %110 = vrot.lane.b32.xlu0 %v109, 34
    %v111 = vpop.permute.xlu0 %110
    %vm112 = vcmask 326928
    %s113 = scalar_lea.vmem [#allocation0], 8
    %114 = vst.msk [vmem:[%s113] sm:$0x1] %vm112, %v111
    %s115 = scalar_lea.vmem %s0, 5
    %v116 = vld [vmem:[%s115] sm:$0x1]
    %117 = vrot.lane.b32.xlu0 %v116, 30
    %v118 = vpop.permute.xlu0 %117
    %vm119 = vcmask 294128
    %120 = vst.msk [vmem:[#allocation0] sm:$0x1] %vm119, %v118
    %s121 = scalar_lea.vmem %s0, 26
    %v122 = vld [vmem:[%s121] sm:$0x1]
    %123 = vrot.lane.b32.xlu0 %v122, 28
    %v124 = vpop.permute.xlu0 %123
    %vm125 = vcmask 277728
    %s126 = scalar_lea.vmem [#allocation0], 8
    %127 = vst.msk [vmem:[%s126] sm:$0x1] %vm125, %v124
    %s128 = scalar_lea.vmem %s0, 4
    %v129 = vld [vmem:[%s128] sm:$0x1]
    %130 = vrot.lane.b32.xlu0 %v129, 24
    %v131 = vpop.permute.xlu0 %130
    %vm132 = vcmask 244928
    %133 = vst.msk [vmem:[#allocation0] sm:$0x1] %vm132, %v131
    %s134 = scalar_lea.vmem %s0, 25
    %v135 = vld [vmem:[%s134] sm:$0x1]
    %136 = vrot.lane.b32.xlu0 %v135, 22
    %v137 = vpop.permute.xlu0 %136
    %vm138 = vcmask 228528
    %s139 = scalar_lea.vmem [#allocation0], 8
    %140 = vst.msk [vmem:[%s139] sm:$0x1] %vm138, %v137
    %s141 = scalar_lea.vmem %s0, 3
    %v142 = vld [vmem:[%s141] sm:$0x1]
    %143 = vrot.lane.b32.xlu0 %v142, 18
    %v144 = vpop.permute.xlu0 %143
    %vm145 = vcmask 195728
    %146 = vst.msk [vmem:[#allocation0] sm:$0x1] %vm145, %v144
    %s147 = scalar_lea.vmem %s0, 24
    %v148 = vld [vmem:[%s147] sm:$0x1]
    %149 = vrot.lane.b32.xlu0 %v148, 16
    %v150 = vpop.permute.xlu0 %149
    %vm151 = vcmask 179328
    %s152 = scalar_lea.vmem [#allocation0], 8
    %153 = vst.msk [vmem:[%s152] sm:$0x1] %vm151, %v150
    %s154 = scalar_lea.vmem %s0, 2
    %v155 = vld [vmem:[%s154] sm:$0x1]
    %156 = vrot.lane.b32.xlu0 %v155, 12
    %v157 = vpop.permute.xlu0 %156
    %vm158 = vcmask 146528
    %159 = vst.msk [vmem:[#allocation0] sm:$0x1] %vm158, %v157
    %s160 = scalar_lea.vmem %s0, 23
    %v161 = vld [vmem:[%s160] sm:$0x1]
    %162 = vrot.lane.b32.xlu0 %v161, 10
    %v163 = vpop.permute.xlu0 %162
    %vm164 = vcmask 130128
    %s165 = scalar_lea.vmem [#allocation0], 8
    %166 = vst.msk [vmem:[%s165] sm:$0x1] %vm164, %v163
    %s167 = scalar_lea.vmem %s0, 1
    %v168 = vld [vmem:[%s167] sm:$0x1]
    %169 = vrot.lane.b32.xlu0 %v168, 6
    %v170 = vpop.permute.xlu0 %169
    %vm171 = vcmask 97328
    %172 = vst.msk [vmem:[#allocation0] sm:$0x1] %vm171, %v170
    %s173 = scalar_lea.vmem %s0, 22
    %v174 = vld [vmem:[%s173] sm:$0x1]
    %175 = vrot.lane.b32.xlu0 %v174, 4
    %v176 = vpop.permute.xlu0 %175
    %vm177 = vcmask 80928
    %s178 = scalar_lea.vmem [#allocation0], 8
    %179 = vst.msk [vmem:[%s178] sm:$0x1] %vm177, %v176
    %s181 = sshllo.u32 0, 1
    %v183 = vld [vmem:[#allocation0] sm:%s181]
    %s184 = sshllo.u32 0, 1
    %185 = vst [vmem:[%s1] sm:%s184] %v183
    %s186 = scalar_lea.vmem [#allocation0], 8
    %v187 = vld [vmem:[%s186] sm:%s181]
    %s188 = sshllo.u32 0, 1
    %s189 = scalar_lea.vmem %s1, 1
    %190 = vst [vmem:[%s189] sm:%s188] %v187

// kernel: tile.18
$region0: #{tile.18}
  #allocation0 [shape = 's32[1]{0}', space=sflag, size = 0x4, scoped, tag = 'scoped memory for tile.18']
  %s0 = inlined_call_operand.vmem [shape: f32[16], index: 0, kind: input, shape index: {}]
  %s1 = inlined_call_operand.vmem [shape: f32[10,16], index: 1, kind: output, shape index: {}]
  // Predicated region
  $region2: #{tile.18} parent=0 // pred_check
    _
  $region3: #{tile.18} parent=0 // pred_check_branch
    %3 = sbr.rel (0) target = $region5
  $region4: #{tile.18} parent=0 // pred_region
    _
  $region5: #{tile.18} parent=0 // pred_fallthru
    _
  %v4 = vld [vmem:[%s0] ss:$0 sm:$0xff]
  %5 = vst [vmem:[%s1] sm:$0xff] %v4
  %s6 = scalar_lea.vmem %s1, 8
  %7 = vst [vmem:[%s6] sm:$0xff] %v4

// kernel: tile.19
$region0: #{tile.19}
  %s0 = inlined_call_operand.vmem [shape: f32[10,16], index: 0, kind: input, shape index: {}]
  %s1 = inlined_call_operand.vmem [shape: f32[1,160], index: 1, kind: output, shape index: {}]
  $region1: #{tile.19} parent=0
    #allocation0 [shape = 'u8[8192]{0}', space=vmem, size = 0x2000, scoped, tag = 'scoped mem for output reshape']
    %s2 = smov 3
    %v3 = vld [vmem:[%s0] ss:$8 sm:%s2]
    %vm4 = vcmask 130048
    %5 = vst.msk [vmem:[#allocation0] ss:$8 sm:$0x3] %vm4, %v3
    %s6 = scalar_lea.vmem %s0, 7
    %v7 = vld [vmem:[%s6] sm:$0x1]
    %8 = vrot.lane.b32.xlu0 %v7, 112
    %v9 = vpop.permute.xlu0 %8
    %vm10 = vcmask 1048448
    %11 = vst.msk [vmem:[#allocation0] sm:$0x1] %vm10, %v9
    %s12 = scalar_lea.vmem %s0, 6
    %v13 = vld [vmem:[%s12] sm:$0x1]
    %14 = vrot.lane.b32.xlu0 %v13, 96
    %v15 = vpop.permute.xlu0 %14
    %vm16 = vcmask 917248
    %17 = vst.msk [vmem:[#allocation0] sm:$0x1] %vm16, %v15
    %s18 = scalar_lea.vmem %s0, 5
    %v19 = vld [vmem:[%s18] sm:$0x1]
    %20 = vrot.lane.b32.xlu0 %v19, 80
    %v21 = vpop.permute.xlu0 %20
    %vm22 = vcmask 786048
    %23 = vst.msk [vmem:[#allocation0] sm:$0x1] %vm22, %v21
    %s24 = scalar_lea.vmem %s0, 4
    %v25 = vld [vmem:[%s24] sm:$0x1]
    %26 = vrot.lane.b32.xlu0 %v25, 64
    %v27 = vpop.permute.xlu0 %26
    %vm28 = vcmask 654848
    %29 = vst.msk [vmem:[#allocation0] sm:$0x1] %vm28, %v27
    %s30 = scalar_lea.vmem %s0, 3
    %v31 = vld [vmem:[%s30] sm:$0x1]
    %32 = vrot.lane.b32.xlu0 %v31, 48
    %v33 = vpop.permute.xlu0 %32
    %vm34 = vcmask 523648
    %35 = vst.msk [vmem:[#allocation0] sm:$0x1] %vm34, %v33
    %s36 = scalar_lea.vmem %s0, 2
    %v37 = vld [vmem:[%s36] sm:$0x1]
    %38 = vrot.lane.b32.xlu0 %v37, 32
    %v39 = vpop.permute.xlu0 %38
    %vm40 = vcmask 392448
    %41 = vst.msk [vmem:[#allocation0] sm:$0x1] %vm40, %v39
    %s42 = scalar_lea.vmem %s0, 1
    %s43 = smov 3
    %v44 = vld [vmem:[%s42] ss:$8 sm:%s43]
    %45 = vrot.lane.b32.xlu0 %v44, 16
    %v46 = vpop.permute.xlu0 %45
    %vm47 = vcmask 261248
    %48 = vst.msk [vmem:[#allocation0] ss:$8 sm:$0x3] %vm47, %v46
    %s50 = sshllo.u32 0, 1
    %v52 = vld [vmem:[#allocation0] sm:%s50]
    %s53 = sshllo.u32 0, 1
    %54 = vst [vmem:[%s1] sm:%s53] %v52
    %s55 = scalar_lea.vmem [#allocation0], 8
    %v56 = vld [vmem:[%s55] sm:%s50]
    %s57 = sshllo.u32 0, 1
    %s58 = scalar_lea.vmem %s1, 1
    %59 = vst [vmem:[%s58] sm:%s57] %v56

// kernel: lenet_forward.1
$region0: #{lenet_forward.1}
  #allocation0 [shape = 'u32[]', space=smem, size = 0x4, offset = 0x4, fixed_abs, tag = 'smem constant byte address 0x4 - core index']
  #allocation1 [shape = 'u32[144,128]{1,0:T(1,128)}', space=vmem, size = 0x12000, scoped, tag = 'internal scratch']
  %s0 = inlined_call_operand.vmem [shape: f32[2,320,128], index: 0, kind: input, shape index: {}]
  %s1 = inlined_call_operand.vmem [shape: f32[5,128,168], index: 1, kind: input, shape index: {}]
  %s2 = inlined_call_operand.vmem [shape: f32[1,168], index: 2, kind: input, shape index: {}]
  %s3 = inlined_call_operand.vmem [shape: f32[5,162,160], index: 3, kind: input, shape index: {}]
  %s4 = inlined_call_operand.vmem [shape: f32[1,160], index: 4, kind: input, shape index: {}]
  %s5 = inlined_call_operand.vmem [shape: f32[720,120], index: 5, kind: input, shape index: {}]
  %s6 = inlined_call_operand.vmem [shape: f32[1,120], index: 6, kind: input, shape index: {}]
  %s7 = inlined_call_operand.vmem [shape: f32[120,84], index: 7, kind: input, shape index: {}]
  %s8 = inlined_call_operand.vmem [shape: f32[1,84], index: 8, kind: input, shape index: {}]
  %s9 = inlined_call_operand.vmem [shape: f32[84,128], index: 9, kind: input, shape index: {}]
  %s10 = inlined_call_operand.vmem [shape: f32[1,128], index: 10, kind: input, shape index: {}]
  %s11 = inlined_call_operand.hbm [shape: f32[2,8,128], index: 11, kind: output, shape index: {}]
  %s12 = sld [smem:[#allocation0]]
  $region77: #{lenet_forward.1} parent=0
    _
  %s14 = ssub.s32 1, %s12
  %s15 = scalar_select 0, %s14, %s12
  $region1: #{lenet_forward.1} parent=0
    #allocation2 [shape = 'u8[8192]{0}', space=vmem, size = 0x2000, scoped, tag = 'output window, operand 0']
    #allocation3 [shape = 's32[2]{0}', space=sflag, size = 0x8, scoped, tag = 'scoped memory for lenet_forward.1']
    %16 = vsyncpa [#allocation3], 0
    %s17 = scalar_lea.sflag [#allocation3], 1
    %18 = vsyncpa %s17, 0
    loop: start=0, step=1, limit=4
    $region2: #{lenet_forward.1} parent=1 // loop_pre_header
      _
    $region3: #{lenet_forward.1} parent=1 // loop_header
      %s20 = sphi 0, %s24
      %p21 = scmp.ge.s32.totalorder %s20, 4
      %s30 = sphi 0, %s32
      %s33 = sphi 0, %s30
      %s34 = sphi 0, %s33
      %s50 = sphi 0, %s34
      %s54 = sphi 0, %s54
      %s56 = sphi 0, %s54
      %s57 = sphi 0, %s56
      %s71 = sphi 0, %s57
      %s75 = sphi 0, %s75
      %s77 = sphi 0, %s75
      %s78 = sphi 0, %s77
      %s92 = sphi 0, %s78
      %s96 = sphi 0, %s96
      %s98 = sphi 0, %s96
      %s99 = sphi 0, %s98
      %s113 = sphi 0, %s99
      %s117 = sphi 0, %s117
      %s119 = sphi 0, %s117
      %s120 = sphi 0, %s119
      %s134 = sphi 0, %s120
      %s138 = sphi 0, %s138
      %s140 = sphi 0, %s138
      %s141 = sphi 0, %s140
      %s155 = sphi 0, %s141
      %s159 = sphi 0, %s159
      %s161 = sphi 0, %s159
      %s162 = sphi 0, %s161
      %s176 = sphi 0, %s162
      %s180 = sphi 0, %s180
      %s182 = sphi 0, %s180
      %s183 = sphi 0, %s182
      %s197 = sphi 0, %s183
      %s201 = sphi 0, %s201
      %s203 = sphi 0, %s201
      %s204 = sphi 0, %s203
      %s218 = sphi 0, %s204
      %s222 = sphi 0, %s222
      %s224 = sphi 0, %s222
      %s225 = sphi 0, %s224
      %s239 = sphi 0, %s225
      %s243 = sphi 0, %s243
      %s245 = sphi 0, %s243
      %s246 = sphi 0, %s245
      %s260 = sphi 0, %s246
      %s266 = sphi 0, %s268
      %s269 = sphi 0, %s266
      %s270 = sphi 0, %s269
      %s286 = sphi 0, %s270
    $region4: #{lenet_forward.1} parent=1 // loop_header_branch
      %23 = sbr.rel (%p21) target = $region8
    $region5: #{lenet_forward.1} parent=1 // loop_body
      %s25 = ssub.s32 %s20, 1
      %s26 = ssub.s32 %s20, 2
      %s27 = sadd.s32 %s20, 1
      %s28 = ssub.s32 %s20, %s27
      %p29 = scmp.eq.s32.totalorder %s28, 0
      %s31 = sadd.s32 %s30, 1
      %s32 = scalar_select %p29, %s30, %s31
      %p35 = pneg %p29
      %p36 = scmp.eq.s32.totalorder %s20, 1
      %p37 = por %p35, %p36
      %p38 = scmp.ne.s32.totalorder %s30, %s33
      %p39 = scmp.eq.s32.totalorder %s20, 0
      %p40 = por %p38, %p39
      %p41 = scmp.ne.s32.totalorder %s30, %s33
      %p42 = scmp.eq.s32.totalorder %s25, 1
      %p43 = por %p41, %p42
      %p44 = scmp.ne.s32.totalorder %s33, %s34
      %p45 = scmp.eq.s32.totalorder %s25, 0
      %p46 = por %p44, %p45
      %p47 = scmp.ne.s32.totalorder %s33, %s34
      %p48 = scmp.eq.s32.totalorder %s26, 1
      %p49 = por %p47, %p48
      %p51 = scmp.ne.s32.totalorder %s34, %s50
      %p52 = scmp.eq.s32.totalorder %s26, 0
      %p53 = por %p51, %p52
      %s55 = sadd.s32 %s54, 1
      %p58 = scmp.eq.s32.totalorder %s20, 1
      %p59 = scmp.ne.s32.totalorder %s54, %s56
      %p60 = scmp.eq.s32.totalorder %s20, 0
      %p61 = por %p59, %p60
      %p62 = scmp.ne.s32.totalorder %s54, %s56
      %p63 = scmp.eq.s32.totalorder %s25, 1
      %p64 = por %p62, %p63
      %p65 = scmp.ne.s32.totalorder %s56, %s57
      %p66 = scmp.eq.s32.totalorder %s25, 0
      %p67 = por %p65, %p66
      %p68 = scmp.ne.s32.totalorder %s56, %s57
      %p69 = scmp.eq.s32.totalorder %s26, 1
      %p70 = por %p68, %p69
      %p72 = scmp.ne.s32.totalorder %s57, %s71
      %p73 = scmp.eq.s32.totalorder %s26, 0
      %p74 = por %p72, %p73
      %s76 = sadd.s32 %s75, 1
      %p79 = scmp.eq.s32.totalorder %s20, 1
      %p80 = scmp.ne.s32.totalorder %s75, %s77
      %p81 = scmp.eq.s32.totalorder %s20, 0
      %p82 = por %p80, %p81
      %p83 = scmp.ne.s32.totalorder %s75, %s77
      %p84 = scmp.eq.s32.totalorder %s25, 1
      %p85 = por %p83, %p84
      %p86 = scmp.ne.s32.totalorder %s77, %s78
      %p87 = scmp.eq.s32.totalorder %s25, 0
      %p88 = por %p86, %p87
      %p89 = scmp.ne.s32.totalorder %s77, %s78
      %p90 = scmp.eq.s32.totalorder %s26, 1
      %p91 = por %p89, %p90
      %p93 = scmp.ne.s32.totalorder %s78, %s92
      %p94 = scmp.eq.s32.totalorder %s26, 0
      %p95 = por %p93, %p94
      %s97 = sadd.s32 %s96, 1
      %p100 = scmp.eq.s32.totalorder %s20, 1
      %p101 = scmp.ne.s32.totalorder %s96, %s98
      %p102 = scmp.eq.s32.totalorder %s20, 0
      %p103 = por %p101, %p102
      %p104 = scmp.ne.s32.totalorder %s96, %s98
      %p105 = scmp.eq.s32.totalorder %s25, 1
      %p106 = por %p104, %p105
      %p107 = scmp.ne.s32.totalorder %s98, %s99
      %p108 = scmp.eq.s32.totalorder %s25, 0
      %p109 = por %p107, %p108
      %p110 = scmp.ne.s32.totalorder %s98, %s99
      %p111 = scmp.eq.s32.totalorder %s26, 1
      %p112 = por %p110, %p111
      %p114 = scmp.ne.s32.totalorder %s99, %s113
      %p115 = scmp.eq.s32.totalorder %s26, 0
      %p116 = por %p114, %p115
      %s118 = sadd.s32 %s117, 1
      %p121 = scmp.eq.s32.totalorder %s20, 1
      %p122 = scmp.ne.s32.totalorder %s117, %s119
      %p123 = scmp.eq.s32.totalorder %s20, 0
      %p124 = por %p122, %p123
      %p125 = scmp.ne.s32.totalorder %s117, %s119
      %p126 = scmp.eq.s32.totalorder %s25, 1
      %p127 = por %p125, %p126
      %p128 = scmp.ne.s32.totalorder %s119, %s120
      %p129 = scmp.eq.s32.totalorder %s25, 0
      %p130 = por %p128, %p129
      %p131 = scmp.ne.s32.totalorder %s119, %s120
      %p132 = scmp.eq.s32.totalorder %s26, 1
      %p133 = por %p131, %p132
      %p135 = scmp.ne.s32.totalorder %s120, %s134
      %p136 = scmp.eq.s32.totalorder %s26, 0
      %p137 = por %p135, %p136
      %s139 = sadd.s32 %s138, 1
      %p142 = scmp.eq.s32.totalorder %s20, 1
      %p143 = scmp.ne.s32.totalorder %s138, %s140
      %p144 = scmp.eq.s32.totalorder %s20, 0
      %p145 = por %p143, %p144
      %p146 = scmp.ne.s32.totalorder %s138, %s140
      %p147 = scmp.eq.s32.totalorder %s25, 1
      %p148 = por %p146, %p147
      %p149 = scmp.ne.s32.totalorder %s140, %s141
      %p150 = scmp.eq.s32.totalorder %s25, 0
      %p151 = por %p149, %p150
      %p152 = scmp.ne.s32.totalorder %s140, %s141
      %p153 = scmp.eq.s32.totalorder %s26, 1
      %p154 = por %p152, %p153
      %p156 = scmp.ne.s32.totalorder %s141, %s155
      %p157 = scmp.eq.s32.totalorder %s26, 0
      %p158 = por %p156, %p157
      %s160 = sadd.s32 %s159, 1
      %p163 = scmp.eq.s32.totalorder %s20, 1
      %p164 = scmp.ne.s32.totalorder %s159, %s161
      %p165 = scmp.eq.s32.totalorder %s20, 0
      %p166 = por %p164, %p165
      %p167 = scmp.ne.s32.totalorder %s159, %s161
      %p168 = scmp.eq.s32.totalorder %s25, 1
      %p169 = por %p167, %p168
      %p170 = scmp.ne.s32.totalorder %s161, %s162
      %p171 = scmp.eq.s32.totalorder %s25, 0
      %p172 = por %p170, %p171
      %p173 = scmp.ne.s32.totalorder %s161, %s162
      %p174 = scmp.eq.s32.totalorder %s26, 1
      %p175 = por %p173, %p174
      %p177 = scmp.ne.s32.totalorder %s162, %s176
      %p178 = scmp.eq.s32.totalorder %s26, 0
      %p179 = por %p177, %p178
      %s181 = sadd.s32 %s180, 1
      %p184 = scmp.eq.s32.totalorder %s20, 1
      %p185 = scmp.ne.s32.totalorder %s180, %s182
      %p186 = scmp.eq.s32.totalorder %s20, 0
      %p187 = por %p185, %p186
      %p188 = scmp.ne.s32.totalorder %s180, %s182
      %p189 = scmp.eq.s32.totalorder %s25, 1
      %p190 = por %p188, %p189
      %p191 = scmp.ne.s32.totalorder %s182, %s183
      %p192 = scmp.eq.s32.totalorder %s25, 0
      %p193 = por %p191, %p192
      %p194 = scmp.ne.s32.totalorder %s182, %s183
      %p195 = scmp.eq.s32.totalorder %s26, 1
      %p196 = por %p194, %p195
      %p198 = scmp.ne.s32.totalorder %s183, %s197
      %p199 = scmp.eq.s32.totalorder %s26, 0
      %p200 = por %p198, %p199
      %s202 = sadd.s32 %s201, 1
      %p205 = scmp.eq.s32.totalorder %s20, 1
      %p206 = scmp.ne.s32.totalorder %s201, %s203
      %p207 = scmp.eq.s32.totalorder %s20, 0
      %p208 = por %p206, %p207
      %p209 = scmp.ne.s32.totalorder %s201, %s203
      %p210 = scmp.eq.s32.totalorder %s25, 1
      %p211 = por %p209, %p210
      %p212 = scmp.ne.s32.totalorder %s203, %s204
      %p213 = scmp.eq.s32.totalorder %s25, 0
      %p214 = por %p212, %p213
      %p215 = scmp.ne.s32.totalorder %s203, %s204
      %p216 = scmp.eq.s32.totalorder %s26, 1
      %p217 = por %p215, %p216
      %p219 = scmp.ne.s32.totalorder %s204, %s218
      %p220 = scmp.eq.s32.totalorder %s26, 0
      %p221 = por %p219, %p220
      %s223 = sadd.s32 %s222, 1
      %p226 = scmp.eq.s32.totalorder %s20, 1
      %p227 = scmp.ne.s32.totalorder %s222, %s224
      %p228 = scmp.eq.s32.totalorder %s20, 0
      %p229 = por %p227, %p228
      %p230 = scmp.ne.s32.totalorder %s222, %s224
      %p231 = scmp.eq.s32.totalorder %s25, 1
      %p232 = por %p230, %p231
      %p233 = scmp.ne.s32.totalorder %s224, %s225
      %p234 = scmp.eq.s32.totalorder %s25, 0
      %p235 = por %p233, %p234
      %p236 = scmp.ne.s32.totalorder %s224, %s225
      %p237 = scmp.eq.s32.totalorder %s26, 1
      %p238 = por %p236, %p237
      %p240 = scmp.ne.s32.totalorder %s225, %s239
      %p241 = scmp.eq.s32.totalorder %s26, 0
      %p242 = por %p240, %p241
      %s244 = sadd.s32 %s243, 1
      %p247 = scmp.eq.s32.totalorder %s20, 1
      %p248 = scmp.ne.s32.totalorder %s243, %s245
      %p249 = scmp.eq.s32.totalorder %s20, 0
      %p250 = por %p248, %p249
      %p251 = scmp.ne.s32.totalorder %s243, %s245
      %p252 = scmp.eq.s32.totalorder %s25, 1
      %p253 = por %p251, %p252
      %p254 = scmp.ne.s32.totalorder %s245, %s246
      %p255 = scmp.eq.s32.totalorder %s25, 0
      %p256 = por %p254, %p255
      %p257 = scmp.ne.s32.totalorder %s245, %s246
      %p258 = scmp.eq.s32.totalorder %s26, 1
      %p259 = por %p257, %p258
      %p261 = scmp.ne.s32.totalorder %s246, %s260
      %p262 = scmp.eq.s32.totalorder %s26, 0
      %p263 = por %p261, %p262
      %s264 = ssub.s32 %s20, %s27
      %p265 = scmp.eq.s32.totalorder %s264, 0
      %s267 = sadd.s32 %s266, 1
      %s268 = scalar_select %p265, %s266, %s267
      %p271 = pneg %p265
      %p272 = scmp.eq.s32.totalorder %s20, 1
      %p273 = por %p271, %p272
      %p274 = scmp.ne.s32.totalorder %s266, %s269
      %p275 = scmp.eq.s32.totalorder %s20, 0
      %p276 = por %p274, %p275
      %p277 = scmp.ne.s32.totalorder %s266, %s269
      %p278 = scmp.eq.s32.totalorder %s25, 1
      %p279 = por %p277, %p278
      %p280 = scmp.ne.s32.totalorder %s269, %s270
      %p281 = scmp.eq.s32.totalorder %s25, 0
      %p282 = por %p280, %p281
      %p283 = scmp.ne.s32.totalorder %s269, %s270
      %p284 = scmp.eq.s32.totalorder %s26, 1
      %p285 = por %p283, %p284
      %p287 = scmp.ne.s32.totalorder %s270, %s286
      %p288 = scmp.eq.s32.totalorder %s26, 0
      %p289 = por %p287, %p288
      %p290 = scmp.le.s32.totalorder 1, %s20
      %p291 = scmp.lt.s32.totalorder %s20, 3
      %p292 = pnand %p290, %p291
      %p293 = pneg %p292
      // Predicated region
      $region9: #{lenet_forward.1} parent=5 // pred_check
        _
      $region10: #{lenet_forward.1} parent=5 // pred_check_branch
        %295 = sbr.rel (%p292) target = $region12
      $region11: #{lenet_forward.1} parent=5 // pred_region
        %s296 = ssub.s32 %s20, 1
        // Predicated region
        $region13: #{lenet_forward.1} parent=11 // pred_check
          %p297 = pneg %p67
        $region14: #{lenet_forward.1} parent=11 // pred_check_branch
          %299 = sbr.rel (%p297) target = $region16
        $region15: #{lenet_forward.1} parent=11 // pred_region
          _
        $region16: #{lenet_forward.1} parent=11 // pred_fallthru
          _
        // Predicated region
        $region17: #{lenet_forward.1} parent=11 // pred_check
          %p300 = pneg %p88
        $region18: #{lenet_forward.1} parent=11 // pred_check_branch
          %302 = sbr.rel (%p300) target = $region20
        $region19: #{lenet_forward.1} parent=11 // pred_region
          _
        $region20: #{lenet_forward.1} parent=11 // pred_fallthru
          _
        // Predicated region
        $region21: #{lenet_forward.1} parent=11 // pred_check
          %p303 = pneg %p109
        $region22: #{lenet_forward.1} parent=11 // pred_check_branch
          %305 = sbr.rel (%p303) target = $region24
        $region23: #{lenet_forward.1} parent=11 // pred_region
          _
        $region24: #{lenet_forward.1} parent=11 // pred_fallthru
          _
        // Predicated region
        $region25: #{lenet_forward.1} parent=11 // pred_check
          %p306 = pneg %p130
        $region26: #{lenet_forward.1} parent=11 // pred_check_branch
          %308 = sbr.rel (%p306) target = $region28
        $region27: #{lenet_forward.1} parent=11 // pred_region
          _
        $region28: #{lenet_forward.1} parent=11 // pred_fallthru
          _
        // Predicated region
        $region29: #{lenet_forward.1} parent=11 // pred_check
          %p309 = pneg %p151
        $region30: #{lenet_forward.1} parent=11 // pred_check_branch
          %311 = sbr.rel (%p309) target = $region32
        $region31: #{lenet_forward.1} parent=11 // pred_region
          _
        $region32: #{lenet_forward.1} parent=11 // pred_fallthru
          _
        // Predicated region
        $region33: #{lenet_forward.1} parent=11 // pred_check
          %p312 = pneg %p172
        $region34: #{lenet_forward.1} parent=11 // pred_check_branch
          %314 = sbr.rel (%p312) target = $region36
        $region35: #{lenet_forward.1} parent=11 // pred_region
          _
        $region36: #{lenet_forward.1} parent=11 // pred_fallthru
          _
        // Predicated region
        $region37: #{lenet_forward.1} parent=11 // pred_check
          %p315 = pneg %p193
        $region38: #{lenet_forward.1} parent=11 // pred_check_branch
          %317 = sbr.rel (%p315) target = $region40
        $region39: #{lenet_forward.1} parent=11 // pred_region
          _
        $region40: #{lenet_forward.1} parent=11 // pred_fallthru
          _
        // Predicated region
        $region41: #{lenet_forward.1} parent=11 // pred_check
          %p318 = pneg %p214
        $region42: #{lenet_forward.1} parent=11 // pred_check_branch
          %320 = sbr.rel (%p318) target = $region44
        $region43: #{lenet_forward.1} parent=11 // pred_region
          _
        $region44: #{lenet_forward.1} parent=11 // pred_fallthru
          _
        // Predicated region
        $region45: #{lenet_forward.1} parent=11 // pred_check
          %p321 = pneg %p235
        $region46: #{lenet_forward.1} parent=11 // pred_check_branch
          %323 = sbr.rel (%p321) target = $region48
        $region47: #{lenet_forward.1} parent=11 // pred_region
          _
        $region48: #{lenet_forward.1} parent=11 // pred_fallthru
          _
        // Predicated region
        $region49: #{lenet_forward.1} parent=11 // pred_check
          %p324 = pneg %p256
        $region50: #{lenet_forward.1} parent=11 // pred_check_branch
          %326 = sbr.rel (%p324) target = $region52
        $region51: #{lenet_forward.1} parent=11 // pred_region
          _
        $region52: #{lenet_forward.1} parent=11 // pred_fallthru
          _
      $region12: #{lenet_forward.1} parent=5 // pred_fallthru
        _
      %p327 = scmp.lt.s32.totalorder %s20, 2
      // Predicated region
      $region53: #{lenet_forward.1} parent=5 // pred_check
        %p328 = pneg %p327
      $region54: #{lenet_forward.1} parent=5 // pred_check_branch
        %330 = sbr.rel (%p328) target = $region56
      $region55: #{lenet_forward.1} parent=5 // pred_region
        // Predicated region
        $region57: #{lenet_forward.1} parent=55 // pred_check
          %p331 = pneg %p40
        $region58: #{lenet_forward.1} parent=55 // pred_check_branch
          %333 = sbr.rel (%p331) target = $region60
        $region59: #{lenet_forward.1} parent=55 // pred_region
          %p334 = scmp.lt.s32.totalorder %s20, 1
          %s335 = scalar_select %p334, %s20, 1
          %s336 = smul.addr %s335, 40
          %s337 = smul.addr %s336, 8
          %s338 = scalar_lea.vmem %s0, %s337
        $region60: #{lenet_forward.1} parent=55 // pred_fallthru
          _
      $region56: #{lenet_forward.1} parent=5 // pred_fallthru
        _
      %p339 = scmp.le.s32.totalorder 1, %s20
      %p340 = scmp.lt.s32.totalorder %s20, 3
      %p341 = pnand %p339, %p340
      %p342 = pneg %p341
      // Predicated region
      $region61: #{lenet_forward.1} parent=5 // pred_check
        _
      $region62: #{lenet_forward.1} parent=5 // pred_check_branch
        %344 = sbr.rel (%p341) target = $region64
      $region63: #{lenet_forward.1} parent=5 // pred_region
        %s345 = ssub.s32 %s20, 1
        %p346 = scmp.lt.s32.totalorder %s25, 1
        %s347 = scalar_select %p346, %s25, 1
        %s348 = smul.addr %s347, 40
        %s349 = smul.addr %s348, 8
        %s350 = scalar_lea.vmem %s0, %s349
        %p351 = pneg %p46
        %p352 = pneg %p43
        %p353 = pneg %p67
        %p354 = pneg %p64
        %p355 = pneg %p88
        %p356 = pneg %p85
        %p357 = pneg %p109
        %p358 = pneg %p106
        %p359 = pneg %p130
        %p360 = pneg %p127
        %p361 = pneg %p151
        %p362 = pneg %p148
        %p363 = pneg %p172
        %p364 = pneg %p169
        %p365 = pneg %p193
        %p366 = pneg %p190
        %p367 = pneg %p214
        %p368 = pneg %p211
        %p369 = pneg %p235
        %p370 = pneg %p232
        %p371 = pneg %p256
        %p372 = pneg %p253
        %p373 = pneg %p282
        %p374 = pneg %p279
        %s375 = sand.u32 %s269, 1
        %s376 = scalar_lea.sflag [#allocation3], %s375
        %s377 = sand.u32 %s269, 1
        %s378 = smul.addr %s377, 8
        %s379 = scalar_lea.vmem [#allocation2], %s378
        %p380 = scmp.lt.s32.totalorder %s25, 1
        %s381 = scalar_select %p380, %s25, 1
        %s382 = smul.addr %s381, 40
        %s383 = smul.addr %s382, 8
        %s384 = scalar_lea.vmem %s0, %s383
        %v385 = vld [vmem:[%s384] sm:$0xff]
        %v386 = vld [vmem:[%s384 + $0x8] sm:$0xff]
        %v387 = vld [vmem:[%s384 + $0x10] sm:$0xff]
        %v388 = vld [vmem:[%s384 + $0x18] sm:$0xff]
        %v389 = vld [vmem:[%s384 + $0x20] sm:$0xff]
        %v390 = vld [vmem:[%s384 + $0x28] sm:$0xff]
        %v391 = vld [vmem:[%s384 + $0x30] sm:$0xff]
        %v392 = vld [vmem:[%s384 + $0x38] sm:$0xff]
        %v393 = vld [vmem:[%s384 + $0x40] sm:$0xff]
        %v394 = vld [vmem:[%s384 + $0x48] sm:$0xff]
        %v395 = vld [vmem:[%s384 + $0x50] sm:$0xff]
        %v396 = vld [vmem:[%s384 + $0x58] sm:$0xff]
        %v397 = vld [vmem:[%s384 + $0x60] sm:$0xff]
        %v398 = vld [vmem:[%s384 + $0x68] sm:$0xff]
        %v399 = vld [vmem:[%s384 + $0x70] sm:$0xff]
        %v400 = vld [vmem:[%s384 + $0x78] sm:$0xff]
        %v401 = vld [vmem:[%s384 + $0x80] sm:$0xff]
        %v402 = vld [vmem:[%s384 + $0x88] sm:$0xff]
        %v403 = vld [vmem:[%s384 + $0x90] sm:$0xff]
        %v404 = vld [vmem:[%s384 + $0x98] sm:$0xff]
        %v405 = vld [vmem:[%s384 + $0xa0] sm:$0xff]
        %v406 = vld [vmem:[%s384 + $0xa8] sm:$0xff]
        %v407 = vld [vmem:[%s384 + $0xb0] sm:$0xff]
        %v408 = vld [vmem:[%s384 + $0xb8] sm:$0xff]
        %v409 = vld [vmem:[%s384 + $0xc0] sm:$0xff]
        %v410 = vld [vmem:[%s384 + $0xc8] sm:$0xff]
        %v411 = vld [vmem:[%s384 + $0xd0] sm:$0xff]
        %v412 = vld [vmem:[%s384 + $0xd8] sm:$0xff]
        %v413 = vld [vmem:[%s384 + $0xe0] sm:$0xff]
        %v414 = vld [vmem:[%s384 + $0xe8] sm:$0xff]
        %v415 = vld [vmem:[%s384 + $0xf0] sm:$0xff]
        %v416 = vld [vmem:[%s384 + $0xf8] sm:$0xff]
        %v417 = vld [vmem:[%s384 + $0x100] sm:$0xff]
        %v418 = vld [vmem:[%s384 + $0x108] sm:$0xff]
        %v419 = vld [vmem:[%s384 + $0x110] sm:$0xff]
        %v420 = vld [vmem:[%s384 + $0x118] sm:$0xff]
        %v421 = vld [vmem:[%s384 + $0x120] sm:$0xff]
        %v422 = vld [vmem:[%s384 + $0x128] sm:$0xff]
        %v423 = vld [vmem:[%s384 + $0x130] sm:$0xff]
        %v424 = vld [vmem:[%s384 + $0x138] sm:$0xff]
        %v425 = vld [vmem:[%s1] sm:$0xff]
        %v426 = vld [vmem:[%s1 + $0x8] sm:$0xff]
        %v427 = vld [vmem:[%s1 + $0x10] sm:$0xff]
        %v428 = vld [vmem:[%s1 + $0x18] sm:$0xff]
        %v429 = vld [vmem:[%s1 + $0x20] sm:$0xff]
        %v430 = vld [vmem:[%s1 + $0x28] sm:$0xff]
        %v431 = vld [vmem:[%s1 + $0x30] sm:$0xff]
        %v432 = vld [vmem:[%s1 + $0x38] sm:$0xff]
        %v433 = vld [vmem:[%s1 + $0x40] sm:$0xff]
        %v434 = vld [vmem:[%s1 + $0x48] sm:$0xff]
        %v435 = vld [vmem:[%s1 + $0x50] sm:$0xff]
        %v436 = vld [vmem:[%s1 + $0x58] sm:$0xff]
        %v437 = vld [vmem:[%s1 + $0x60] sm:$0xff]
        %v438 = vld [vmem:[%s1 + $0x68] sm:$0xff]
        %v439 = vld [vmem:[%s1 + $0x70] sm:$0xff]
        %v440 = vld [vmem:[%s1 + $0x78] sm:$0xff]
        %v441 = vld [vmem:[%s1 + $0x80] sm:$0xff]
        %v442 = vld [vmem:[%s1 + $0x88] sm:$0xff]
        %v443 = vld [vmem:[%s1 + $0x90] sm:$0xff]
        %v444 = vld [vmem:[%s1 + $0x98] sm:$0xff]
        %v445 = vld [vmem:[%s1 + $0xa0] sm:$0xff]
        %v446 = vld [vmem:[%s1 + $0xa8] sm:$0xff]
        %v447 = vld [vmem:[%s1 + $0xb0] sm:$0xff]
        %v448 = vld [vmem:[%s1 + $0xb8] sm:$0xff]
        %v449 = vld [vmem:[%s1 + $0xc0] sm:$0xff]
        %v450 = vld [vmem:[%s1 + $0xc8] sm:$0xff]
        %v451 = vld [vmem:[%s1 + $0xd0] sm:$0xff]
        %v452 = vld [vmem:[%s1 + $0xd8] sm:$0xff]
        %v453 = vld [vmem:[%s1 + $0xe0] sm:$0xff]
        %v454 = vld [vmem:[%s1 + $0xe8] sm:$0xff]
        %v455 = vld [vmem:[%s1 + $0xf0] sm:$0xff]
        %v456 = vld [vmem:[%s1 + $0xf8] sm:$0xff]
        %457 = vmatprep.subr.mxu0 %v426
        %458 = vmatpush1.msra.mxu0 %v425
        %459 = vmatprep.subr.mxu0 %v428
        %460 = vmatpush1.msra.mxu0 %v427
        %461 = vmatprep.subr.mxu0 %v430
        %462 = vmatpush1.msra.mxu0 %v429
        %463 = vmatprep.subr.mxu0 %v432
        %464 = vmatpush1.msra.mxu0 %v431
        %465 = vmatprep.subr.mxu0 %v434
        %466 = vmatpush1.msra.mxu0 %v433
        %467 = vmatprep.subr.mxu0 %v436
        %468 = vmatpush1.msra.mxu0 %v435
        %469 = vmatprep.subr.mxu0 %v438
        %470 = vmatpush1.msra.mxu0 %v437
        %471 = vmatprep.subr.mxu0 %v440
        %472 = vmatpush1.msra.mxu0 %v439
        %473 = vmatprep.subr.mxu0 %v442
        %474 = vmatpush1.msra.mxu0 %v441
        %475 = vmatprep.subr.mxu0 %v444
        %476 = vmatpush1.msra.mxu0 %v443
        %477 = vmatprep.subr.mxu0 %v446
        %478 = vmatpush1.msra.mxu0 %v445
        %479 = vmatprep.subr.mxu0 %v448
        %480 = vmatpush1.msra.mxu0 %v447
        %481 = vmatprep.subr.mxu0 %v450
        %482 = vmatpush1.msra.mxu0 %v449
        %483 = vmatprep.subr.mxu0 %v452
        %484 = vmatpush1.msra.mxu0 %v451
        %485 = vmatprep.subr.mxu0 %v454
        %486 = vmatpush1.msra.mxu0 %v453
        %487 = vmatprep.subr.mxu0 %v456
        %488 = vmatpush1.msra.mxu0 %v455
        %489 = vmatprep.subr.mxu0 0.0
        %490 = vmatpush1.msra.mxu0 0.0
        %491 = vmatprep.subr.mxu0 0.0
        %492 = vmatpush1.msra.mxu0 0.0
        %493 = vmatprep.subr.mxu0 0.0
        %494 = vmatpush1.msra.mxu0 0.0
        %495 = vmatprep.subr.mxu0 0.0
        %496 = vmatpush1.msra.mxu0 0.0
        %497 = vmatprep.subr.mxu0 0.0
        %498 = vmatpush1.msra.mxu0 0.0
        %499 = vmatprep.subr.mxu0 0.0
        %500 = vmatpush1.msra.mxu0 0.0
        %501 = vmatprep.subr.mxu0 0.0
        %502 = vmatpush1.msra.mxu0 0.0
        %503 = vmatprep.subr.mxu0 0.0
        %504 = vmatpush1.msra.mxu0 0.0
        %505 = vmatprep.subr.mxu0 0.0
        %506 = vmatpush1.msra.mxu0 0.0
        %507 = vmatprep.subr.mxu0 0.0
        %508 = vmatpush1.msra.mxu0 0.0
        %509 = vmatprep.subr.mxu0 0.0
        %510 = vmatpush1.msra.mxu0 0.0
        %511 = vmatprep.subr.mxu0 0.0
        %512 = vmatpush1.msra.mxu0 0.0
        %513 = vmatprep.subr.mxu0 0.0
        %514 = vmatpush1.msra.mxu0 0.0
        %515 = vmatprep.subr.mxu0 0.0
        %516 = vmatpush1.msra.mxu0 0.0
        %517 = vmatprep.subr.mxu0 0.0
        %518 = vmatpush1.msra.mxu0 0.0
        %519 = vmatprep.subr.mxu0 0.0
        %520 = vmatpush1.msra.mxu0 0.0
        %521 = vmatprep.mubr.f32.mxu0 0.0
        %522 = vmatmul.mubr.f32.gmra.mrb[0].mxu0 %v385
        %v523 = vpop.f32.mrb[0].mxu0
        %v524 = vadd.f32 0.0, %v523
        %v525 = vpop.f32.mrb[0].mxu0
        %v526 = vadd.f32 0.0, %v525
        %527 = vmatprep.mubr.f32.mxu0 0.0
        %528 = vmatmul.mubr.f32.gmra.mrb[0].mxu0 %v386
        %v529 = vpop.f32.mrb[0].mxu0
        %v530 = vadd.f32 0.0, %v529
        %v531 = vpop.f32.mrb[0].mxu0
        %v532 = vadd.f32 0.0, %v531
        %533 = vmatprep.mubr.f32.mxu0 0.0
        %534 = vmatmul.mubr.f32.gmra.mrb[0].mxu0 %v387
        %v535 = vpop.f32.mrb[0].mxu0
        %v536 = vadd.f32 0.0, %v535
        %v537 = vpop.f32.mrb[0].mxu0
        %v538 = vadd.f32 0.0, %v537
        %539 = vmatprep.mubr.f32.mxu0 0.0
        %540 = vmatmul.mubr.f32.gmra.mrb[0].mxu0 %v388
        %v541 = vpop.f32.mrb[0].mxu0
        %v542 = vadd.f32 0.0, %v541
        %v543 = vpop.f32.mrb[0].mxu0
        %v544 = vadd.f32 0.0, %v543
        %545 = vmatprep.mubr.f32.mxu0 0.0
        %546 = vmatmul.mubr.f32.gmra.mrb[0].mxu0 %v389
        %v547 = vpop.f32.mrb[0].mxu0
        %v548 = vadd.f32 0.0, %v547
        %v549 = vpop.f32.mrb[0].mxu0
        %v550 = vadd.f32 0.0, %v549
        %551 = vmatprep.mubr.f32.mxu0 0.0
        %552 = vmatmul.mubr.f32.gmra.mrb[0].mxu0 %v390
        %v553 = vpop.f32.mrb[0].mxu0
        %v554 = vadd.f32 0.0, %v553
        %v555 = vpop.f32.mrb[0].mxu0
        %v556 = vadd.f32 0.0, %v555
        %557 = vmatprep.mubr.f32.mxu0 0.0
        %558 = vmatmul.mubr.f32.gmra.mrb[0].mxu0 %v391
        %v559 = vpop.f32.mrb[0].mxu0
        %v560 = vadd.f32 0.0, %v559
        %v561 = vpop.f32.mrb[0].mxu0
        %v562 = vadd.f32 0.0, %v561
        %563 = vmatprep.mubr.f32.mxu0 0.0
        %564 = vmatmul.mubr.f32.gmra.mrb[0].mxu0 %v392
        %v565 = vpop.f32.mrb[0].mxu0
        %v566 = vadd.f32 0.0, %v565
        %v567 = vpop.f32.mrb[0].mxu0
        %v568 = vadd.f32 0.0, %v567
        %569 = vmatprep.mubr.f32.mxu0 0.0
        %570 = vmatmul.mubr.f32.gmra.mrb[0].mxu0 %v393
        %v571 = vpop.f32.mrb[0].mxu0
        %v572 = vpop.f32.mrb[0].mxu0
        %573 = vmatprep.mubr.f32.mxu0 0.0
        %574 = vmatmul.mubr.f32.gmra.mrb[0].mxu0 %v394
        %v575 = vpop.f32.mrb[0].mxu0
        %v576 = vpop.f32.mrb[0].mxu0
        %577 = vmatprep.mubr.f32.mxu0 0.0
        %578 = vmatmul.mubr.f32.gmra.mrb[0].mxu0 %v395
        %v579 = vpop.f32.mrb[0].mxu0
        %v580 = vadd.f32 0.0, %v579
        %v581 = vpop.f32.mrb[0].mxu0
        %v582 = vadd.f32 0.0, %v581
        %583 = vmatprep.mubr.f32.mxu0 0.0
        %584 = vmatmul.mubr.f32.gmra.mrb[0].mxu0 %v396
        %v585 = vpop.f32.mrb[0].mxu0
        %v586 = vadd.f32 0.0, %v585
        %v587 = vpop.f32.mrb[0].mxu0
        %v588 = vadd.f32 0.0, %v587
        %589 = vmatprep.mubr.f32.mxu0 0.0
        %590 = vmatmul.mubr.f32.gmra.mrb[0].mxu0 %v397
        %v591 = vpop.f32.mrb[0].mxu0
        %v592 = vadd.f32 0.0, %v591
        %v593 = vpop.f32.mrb[0].mxu0
        %v594 = vadd.f32 0.0, %v593
        %595 = vmatprep.mubr.f32.mxu0 0.0
        %596 = vmatmul.mubr.f32.gmra.mrb[0].mxu0 %v398
        %v597 = vpop.f32.mrb[0].mxu0
        %v598 = vadd.f32 0.0, %v597
        %v599 = vpop.f32.mrb[0].mxu0
        %v600 = vadd.f32 0.0, %v599
        %601 = vmatprep.mubr.f32.mxu0 0.0
        %602 = vmatmul.mubr.f32.gmra.mrb[0].mxu0 %v399
        %v603 = vpop.f32.mrb[0].mxu0
        %v604 = vadd.f32 0.0, %v603
        %v605 = vpop.f32.mrb[0].mxu0
        %v606 = vadd.f32 0.0, %v605
        %607 = vmatprep.mubr.f32.mxu0 0.0
        %608 = vmatmul.mubr.f32.gmra.mrb[0].mxu0 %v400
        %v609 = vpop.f32.mrb[0].mxu0
        %v610 = vadd.f32 0.0, %v609
        %v611 = vpop.f32.mrb[0].mxu0
        %v612 = vadd.f32 0.0, %v611
        %613 = vmatprep.mubr.f32.mxu0 0.0
        %614 = vmatmul.mubr.f32.gmra.mrb[0].mxu0 %v401
        %v615 = vpop.f32.mrb[0].mxu0
        %v616 = vadd.f32 0.0, %v615
        %v617 = vpop.f32.mrb[0].mxu0
        %v618 = vadd.f32 0.0, %v617
        %619 = vmatprep.mubr.f32.mxu0 0.0
        %620 = vmatmul.mubr.f32.gmra.mrb[0].mxu0 %v402
        %v621 = vpop.f32.mrb[0].mxu0
        %v622 = vadd.f32 0.0, %v621
        %v623 = vpop.f32.mrb[0].mxu0
        %v624 = vadd.f32 0.0, %v623
        %625 = vmatprep.mubr.f32.mxu0 0.0
        %626 = vmatmul.mubr.f32.gmra.mrb[0].mxu0 %v403
        %v627 = vpop.f32.mrb[0].mxu0
        %v628 = vpop.f32.mrb[0].mxu0
        %629 = vmatprep.mubr.f32.mxu0 0.0
        %630 = vmatmul.mubr.f32.gmra.mrb[0].mxu0 %v404
        %v631 = vpop.f32.mrb[0].mxu0
        %v632 = vpop.f32.mrb[0].mxu0
        %633 = vmatprep.mubr.f32.mxu0 0.0
        %634 = vmatmul.mubr.f32.gmra.mrb[0].mxu0 %v405
        %v635 = vpop.f32.mrb[0].mxu0
        %v636 = vadd.f32 0.0, %v635
        %v637 = vpop.f32.mrb[0].mxu0
        %v638 = vadd.f32 0.0, %v637
        %639 = vmatprep.mubr.f32.mxu0 0.0
        %640 = vmatmul.mubr.f32.gmra.mrb[0].mxu0 %v406
        %v641 = vpop.f32.mrb[0].mxu0
        %v642 = vadd.f32 0.0, %v641
        %v643 = vpop.f32.mrb[0].mxu0
        %v644 = vadd.f32 0.0, %v643
        %645 = vmatprep.mubr.f32.mxu0 0.0
        %646 = vmatmul.mubr.f32.gmra.mrb[0].mxu0 %v407
        %v647 = vpop.f32.mrb[0].mxu0
        %v648 = vadd.f32 0.0, %v647
        %v649 = vpop.f32.mrb[0].mxu0
        %v650 = vadd.f32 0.0, %v649
        %651 = vmatprep.mubr.f32.mxu0 0.0
        %652 = vmatmul.mubr.f32.gmra.mrb[0].mxu0 %v408
        %v653 = vpop.f32.mrb[0].mxu0
        %v654 = vadd.f32 0.0, %v653
        %v655 = vpop.f32.mrb[0].mxu0
        %v656 = vadd.f32 0.0, %v655
        %657 = vmatprep.mubr.f32.mxu0 0.0
        %658 = vmatmul.mubr.f32.gmra.mrb[0].mxu0 %v409
        %v659 = vpop.f32.mrb[0].mxu0
        %v660 = vadd.f32 0.0, %v659
        %v661 = vpop.f32.mrb[0].mxu0
        %v662 = vadd.f32 0.0, %v661
        %663 = vmatprep.mubr.f32.mxu0 0.0
        %664 = vmatmul.mubr.f32.gmra.mrb[0].mxu0 %v410
        %v665 = vpop.f32.mrb[0].mxu0
        %v666 = vadd.f32 0.0, %v665
        %v667 = vpop.f32.mrb[0].mxu0
        %v668 = vadd.f32 0.0, %v667
        %669 = vmatprep.mubr.f32.mxu0 0.0
        %670 = vmatmul.mubr.f32.gmra.mrb[0].mxu0 %v411
        %v671 = vpop.f32.mrb[0].mxu0
        %v672 = vadd.f32 0.0, %v671
        %v673 = vpop.f32.mrb[0].mxu0
        %v674 = vadd.f32 0.0, %v673
        %675 = vmatprep.mubr.f32.mxu0 0.0
        %676 = vmatmul.mubr.f32.gmra.mrb[0].mxu0 %v412
        %v677 = vpop.f32.mrb[0].mxu0
        %v678 = vadd.f32 0.0, %v677
        %v679 = vpop.f32.mrb[0].mxu0
        %v680 = vadd.f32 0.0, %v679
        %681 = vmatprep.mubr.f32.mxu0 0.0
        %682 = vmatmul.mubr.f32.gmra.mrb[0].mxu0 %v413
        %v683 = vpop.f32.mrb[0].mxu0
        %v684 = vpop.f32.mrb[0].mxu0
        %685 = vmatprep.mubr.f32.mxu0 0.0
        %686 = vmatmul.mubr.f32.gmra.mrb[0].mxu0 %v414
        %v687 = vpop.f32.mrb[0].mxu0
        %v688 = vpop.f32.mrb[0].mxu0
        %689 = vmatprep.mubr.f32.mxu0 0.0
        %690 = vmatmul.mubr.f32.gmra.mrb[0].mxu0 %v415
        %v691 = vpop.f32.mrb[0].mxu0
        %v692 = vadd.f32 0.0, %v691
        %v693 = vpop.f32.mrb[0].mxu0
        %v694 = vadd.f32 0.0, %v693
        %695 = vmatprep.mubr.f32.mxu0 0.0
        %696 = vmatmul.mubr.f32.gmra.mrb[0].mxu0 %v416
        %v697 = vpop.f32.mrb[0].mxu0
        %v698 = vadd.f32 0.0, %v697
        %v699 = vpop.f32.mrb[0].mxu0
        %v700 = vadd.f32 0.0, %v699
        %701 = vmatprep.mubr.f32.mxu0 0.0
        %702 = vmatmul.mubr.f32.gmra.mrb[0].mxu0 %v417
        %v703 = vpop.f32.mrb[0].mxu0
        %v704 = vadd.f32 0.0, %v703
        %v705 = vpop.f32.mrb[0].mxu0
        %v706 = vadd.f32 0.0, %v705
        %707 = vmatprep.mubr.f32.mxu0 0.0
        %708 = vmatmul.mubr.f32.gmra.mrb[0].mxu0 %v418
        %v709 = vpop.f32.mrb[0].mxu0
        %v710 = vadd.f32 0.0, %v709
        %v711 = vpop.f32.mrb[0].mxu0
        %v712 = vadd.f32 0.0, %v711
        %713 = vmatprep.mubr.f32.mxu0 0.0
        %714 = vmatmul.mubr.f32.gmra.mrb[0].mxu0 %v419
        %v715 = vpop.f32.mrb[0].mxu0
        %v716 = vadd.f32 0.0, %v715
        %v717 = vpop.f32.mrb[0].mxu0
        %v718 = vadd.f32 0.0, %v717
        %719 = vmatprep.mubr.f32.mxu0 0.0
        %720 = vmatmul.mubr.f32.gmra.mrb[0].mxu0 %v420
        %v721 = vpop.f32.mrb[0].mxu0
        %v722 = vadd.f32 0.0, %v721
        %v723 = vpop.f32.mrb[0].mxu0
        %v724 = vadd.f32 0.0, %v723
        %725 = vmatprep.mubr.f32.mxu0 0.0
        %726 = vmatmul.mubr.f32.gmra.mrb[0].mxu0 %v421
        %v727 = vpop.f32.mrb[0].mxu0
        %v728 = vadd.f32 0.0, %v727
        %v729 = vpop.f32.mrb[0].mxu0
        %v730 = vadd.f32 0.0, %v729
        %731 = vmatprep.mubr.f32.mxu0 0.0
        %732 = vmatmul.mubr.f32.gmra.mrb[0].mxu0 %v422
        %v733 = vpop.f32.mrb[0].mxu0
        %v734 = vadd.f32 0.0, %v733
        %v735 = vpop.f32.mrb[0].mxu0
        %v736 = vadd.f32 0.0, %v735
        %737 = vmatprep.mubr.f32.mxu0 0.0
        %738 = vmatmul.mubr.f32.gmra.mrb[0].mxu0 %v423
        %v739 = vpop.f32.mrb[0].mxu0
        %v740 = vpop.f32.mrb[0].mxu0
        %741 = vmatprep.mubr.f32.mxu0 0.0
        %742 = vmatmul.mubr.f32.gmra.mrb[0].mxu0 %v424
        %v743 = vpop.f32.mrb[0].mxu0
        %v744 = vpop.f32.mrb[0].mxu0
        %745 = vdwg.mxu0
        %s746 = scalar_lea.vmem %s1, 256
        %v747 = vld [vmem:[%s746] sm:$0xff]
        %v748 = vld [vmem:[%s746 + $0x8] sm:$0xff]
        %v749 = vld [vmem:[%s746 + $0x10] sm:$0xff]
        %v750 = vld [vmem:[%s746 + $0x18] sm:$0xff]
        %v751 = vld [vmem:[%s746 + $0x20] sm:$0xff]
        %v752 = vld [vmem:[%s746 + $0x28] sm:$0xff]
        %v753 = vld [vmem:[%s746 + $0x30] sm:$0xff]
        %v754 = vld [vmem:[%s746 + $0x38] sm:$0xff]
        %v755 = vld [vmem:[%s746 + $0x40] sm:$0xff]
        %v756 = vld [vmem:[%s746 + $0x48] sm:$0xff]
        %v757 = vld [vmem:[%s746 + $0x50] sm:$0xff]
        %v758 = vld [vmem:[%s746 + $0x58] sm:$0xff]
        %v759 = vld [vmem:[%s746 + $0x60] sm:$0xff]
        %v760 = vld [vmem:[%s746 + $0x68] sm:$0xff]
        %v761 = vld [vmem:[%s746 + $0x70] sm:$0xff]
        %v762 = vld [vmem:[%s746 + $0x78] sm:$0xff]
        %v763 = vld [vmem:[%s746 + $0x80] sm:$0xff]
        %v764 = vld [vmem:[%s746 + $0x88] sm:$0xff]
        %v765 = vld [vmem:[%s746 + $0x90] sm:$0xff]
        %v766 = vld [vmem:[%s746 + $0x98] sm:$0xff]
        %v767 = vld [vmem:[%s746 + $0xa0] sm:$0xff]
        %v768 = vld [vmem:[%s746 + $0xa8] sm:$0xff]
        %v769 = vld [vmem:[%s746 + $0xb0] sm:$0xff]
        %v770 = vld [vmem:[%s746 + $0xb8] sm:$0xff]
        %v771 = vld [vmem:[%s746 + $0xc0] sm:$0xff]
        %v772 = vld [vmem:[%s746 + $0xc8] sm:$0xff]
        %v773 = vld [vmem:[%s746 + $0xd0] sm:$0xff]
        %v774 = vld [vmem:[%s746 + $0xd8] sm:$0xff]
        %v775 = vld [vmem:[%s746 + $0xe0] sm:$0xff]
        %v776 = vld [vmem:[%s746 + $0xe8] sm:$0xff]
        %v777 = vld [vmem:[%s746 + $0xf0] sm:$0xff]
        %v778 = vld [vmem:[%s746 + $0xf8] sm:$0xff]
        %779 = vmatprep.subr.mxu0 %v748
        %780 = vmatpush1.msra.mxu0 %v747
        %781 = vmatprep.subr.mxu0 %v750
        %782 = vmatpush1.msra.mxu0 %v749
        %783 = vmatprep.subr.mxu0 %v752
        %784 = vmatpush1.msra.mxu0 %v751
        %785 = vmatprep.subr.mxu0 %v754
        %786 = vmatpush1.msra.mxu0 %v753
        %787 = vmatprep.subr.mxu0 %v756
        %788 = vmatpush1.msra.mxu0 %v755
        %789 = vmatprep.subr.mxu0 %v758
        %790 = vmatpush1.msra.mxu0 %v757
        %791 = vmatprep.subr.mxu0 %v760
        %792 = vmatpush1.msra.mxu0 %v759
        %793 = vmatprep.subr.mxu0 %v762
        %794 = vmatpush1.msra.mxu0 %v761
        %795 = vmatprep.subr.mxu0 %v764
        %796 = vmatpush1.msra.mxu0 %v763
        %797 = vmatprep.subr.mxu0 %v766
        %798 = vmatpush1.msra.mxu0 %v765
        %799 = vmatprep.subr.mxu0 %v768
        %800 = vmatpush1.msra.mxu0 %v767
        %801 = vmatprep.subr.mxu0 %v770
        %802 = vmatpush1.msra.mxu0 %v769
        %803 = vmatprep.subr.mxu0 %v772
        %804 = vmatpush1.msra.mxu0 %v771
        %805 = vmatprep.subr.mxu0 %v774
        %806 = vmatpush1.msra.mxu0 %v773
        %807 = vmatprep.subr.mxu0 %v776
        %808 = vmatpush1.msra.mxu0 %v775
        %809 = vmatprep.subr.mxu0 %v778
        %810 = vmatpush1.msra.mxu0 %v777
        %811 = vmatprep.subr.mxu0 0.0
        %812 = vmatpush1.msra.mxu0 0.0
        %813 = vmatprep.subr.mxu0 0.0
        %814 = vmatpush1.msra.mxu0 0.0
        %815 = vmatprep.subr.mxu0 0.0
        %816 = vmatpush1.msra.mxu0 0.0
        %817 = vmatprep.subr.mxu0 0.0
        %818 = vmatpush1.msra.mxu0 0.0
        %819 = vmatprep.subr.mxu0 0.0
        %820 = vmatpush1.msra.mxu0 0.0
        %821 = vmatprep.subr.mxu0 0.0
        %822 = vmatpush1.msra.mxu0 0.0
        %823 = vmatprep.subr.mxu0 0.0
        %824 = vmatpush1.msra.mxu0 0.0
        %825 = vmatprep.subr.mxu0 0.0
        %826 = vmatpush1.msra.mxu0 0.0
        %827 = vmatprep.subr.mxu0 0.0
        %828 = vmatpush1.msra.mxu0 0.0
        %829 = vmatprep.subr.mxu0 0.0
        %830 = vmatpush1.msra.mxu0 0.0
        %831 = vmatprep.subr.mxu0 0.0
        %832 = vmatpush1.msra.mxu0 0.0
        %833 = vmatprep.subr.mxu0 0.0
        %834 = vmatpush1.msra.mxu0 0.0
        %835 = vmatprep.subr.mxu0 0.0
        %836 = vmatpush1.msra.mxu0 0.0
        %837 = vmatprep.subr.mxu0 0.0
        %838 = vmatpush1.msra.mxu0 0.0
        %839 = vmatprep.subr.mxu0 0.0
        %840 = vmatpush1.msra.mxu0 0.0
        %841 = vmatprep.subr.mxu0 0.0
        %842 = vmatpush1.msra.mxu0 0.0
        %843 = vmatprep.mubr.f32.mxu0 0.0
        %844 = vmatmul.mubr.f32.gmra.mrb[0].mxu0 %v385
        %v845 = vpop.f32.mrb[0].mxu0
        %v846 = vpop.f32.mrb[0].mxu0
        %847 = vmatprep.mubr.f32.mxu0 0.0
        %848 = vmatmul.mubr.f32.gmra.mrb[0].mxu0 %v386
        %v849 = vpop.f32.mrb[0].mxu0
        %v850 = vadd.f32 0.0, %v849
        %v851 = vpop.f32.mrb[0].mxu0
        %v852 = vadd.f32 0.0, %v851
        %853 = vmatprep.mubr.f32.mxu0 0.0
        %854 = vmatmul.mubr.f32.gmra.mrb[0].mxu0 %v387
        %v855 = vpop.f32.mrb[0].mxu0
        %v856 = vadd.f32 0.0, %v855
        %v857 = vpop.f32.mrb[0].mxu0
        %v858 = vadd.f32 0.0, %v857
        %859 = vmatprep.mubr.f32.mxu0 0.0
        %860 = vmatmul.mubr.f32.gmra.mrb[0].mxu0 %v388
        %v861 = vpop.f32.mrb[0].mxu0
        %v862 = vadd.f32 0.0, %v861
        %v863 = vpop.f32.mrb[0].mxu0
        %v864 = vadd.f32 0.0, %v863
        %865 = vmatprep.mubr.f32.mxu0 0.0
        %866 = vmatmul.mubr.f32.gmra.mrb[0].mxu0 %v389
        %v867 = vpop.f32.mrb[0].mxu0
        %v868 = vadd.f32 0.0, %v867
        %v869 = vpop.f32.mrb[0].mxu0
        %v870 = vadd.f32 0.0, %v869
        %871 = vmatprep.mubr.f32.mxu0 0.0
        %872 = vmatmul.mubr.f32.gmra.mrb[0].mxu0 %v390
        %v873 = vpop.f32.mrb[0].mxu0
        %v874 = vadd.f32 0.0, %v873
        %v875 = vpop.f32.mrb[0].mxu0
        %v876 = vadd.f32 0.0, %v875
        %877 = vmatprep.mubr.f32.mxu0 0.0
        %878 = vmatmul.mubr.f32.gmra.mrb[0].mxu0 %v391
        %v879 = vpop.f32.mrb[0].mxu0
        %v880 = vadd.f32 0.0, %v879
        %v881 = vpop.f32.mrb[0].mxu0
        %v882 = vadd.f32 0.0, %v881
        %883 = vmatprep.mubr.f32.mxu0 0.0
        %884 = vmatmul.mubr.f32.gmra.mrb[0].mxu0 %v392
        %v885 = vpop.f32.mrb[0].mxu0
        %v886 = vadd.f32 0.0, %v885
        %v887 = vpop.f32.mrb[0].mxu0
        %v888 = vadd.f32 0.0, %v887
        %889 = vmatprep.mubr.f32.mxu0 0.0
        %890 = vmatmul.mubr.f32.gmra.mrb[0].mxu0 %v393
        %v891 = vpop.f32.mrb[0].mxu0
        %v892 = vadd.f32 0.0, %v891
        %v893 = vpop.f32.mrb[0].mxu0
        %v894 = vadd.f32 0.0, %v893
        %895 = vmatprep.mubr.f32.mxu0 0.0
        %896 = vmatmul.mubr.f32.gmra.mrb[0].mxu0 %v394
        %v897 = vpop.f32.mrb[0].mxu0
        %v898 = vpop.f32.mrb[0].mxu0
        %899 = vmatprep.mubr.f32.mxu0 0.0
        %900 = vmatmul.mubr.f32.gmra.mrb[0].mxu0 %v395
        %v901 = vpop.f32.mrb[0].mxu0
        %v902 = vadd.f32 0.0, %v901
        %v903 = vpop.f32.mrb[0].mxu0
        %v904 = vadd.f32 0.0, %v903
        %905 = vmatprep.mubr.f32.mxu0 0.0
        %906 = vmatmul.mubr.f32.gmra.mrb[0].mxu0 %v396
        %v907 = vpop.f32.mrb[0].mxu0
        %v908 = vadd.f32 0.0, %v907
        %v909 = vpop.f32.mrb[0].mxu0
        %v910 = vadd.f32 0.0, %v909
        %911 = vmatprep.mubr.f32.mxu0 0.0
        %912 = vmatmul.mubr.f32.gmra.mrb[0].mxu0 %v397
        %v913 = vpop.f32.mrb[0].mxu0
        %v914 = vadd.f32 0.0, %v913
        %v915 = vpop.f32.mrb[0].mxu0
        %v916 = vadd.f32 0.0, %v915
        %917 = vmatprep.mubr.f32.mxu0 0.0
        %918 = vmatmul.mubr.f32.gmra.mrb[0].mxu0 %v398
        %v919 = vpop.f32.mrb[0].mxu0
        %v920 = vadd.f32 0.0, %v919
        %v921 = vpop.f32.mrb[0].mxu0
        %v922 = vadd.f32 0.0, %v921
        %923 = vmatprep.mubr.f32.mxu0 0.0
        %924 = vmatmul.mubr.f32.gmra.mrb[0].mxu0 %v399
        %v925 = vpop.f32.mrb[0].mxu0
        %v926 = vadd.f32 0.0, %v925
        %v927 = vpop.f32.mrb[0].mxu0
        %v928 = vadd.f32 0.0, %v927
        %929 = vmatprep.mubr.f32.mxu0 0.0
        %930 = vmatmul.mubr.f32.gmra.mrb[0].mxu0 %v400
        %v931 = vpop.f32.mrb[0].mxu0
        %v932 = vadd.f32 0.0, %v931
        %v933 = vpop.f32.mrb[0].mxu0
        %v934 = vadd.f32 0.0, %v933
        %935 = vmatprep.mubr.f32.mxu0 0.0
        %936 = vmatmul.mubr.f32.gmra.mrb[0].mxu0 %v401
        %v937 = vpop.f32.mrb[0].mxu0
        %v938 = vadd.f32 0.0, %v937
        %v939 = vpop.f32.mrb[0].mxu0
        %v940 = vadd.f32 0.0, %v939
        %941 = vmatprep.mubr.f32.mxu0 0.0
        %942 = vmatmul.mubr.f32.gmra.mrb[0].mxu0 %v402
        %v943 = vpop.f32.mrb[0].mxu0
        %v944 = vadd.f32 0.0, %v943
        %v945 = vpop.f32.mrb[0].mxu0
        %v946 = vadd.f32 0.0, %v945
        %947 = vmatprep.mubr.f32.mxu0 0.0
        %948 = vmatmul.mubr.f32.gmra.mrb[0].mxu0 %v403
        %v949 = vpop.f32.mrb[0].mxu0
        %v950 = vpop.f32.mrb[0].mxu0
        %951 = vmatprep.mubr.f32.mxu0 0.0
        %952 = vmatmul.mubr.f32.gmra.mrb[0].mxu0 %v404
        %v953 = vpop.f32.mrb[0].mxu0
        %v954 = vpop.f32.mrb[0].mxu0
        %955 = vmatprep.mubr.f32.mxu0 0.0
        %956 = vmatmul.mubr.f32.gmra.mrb[0].mxu0 %v405
        %v957 = vpop.f32.mrb[0].mxu0
        %v958 = vadd.f32 0.0, %v957
        %v959 = vpop.f32.mrb[0].mxu0
        %v960 = vadd.f32 0.0, %v959
        %961 = vmatprep.mubr.f32.mxu0 0.0
        %962 = vmatmul.mubr.f32.gmra.mrb[0].mxu0 %v406
        %v963 = vpop.f32.mrb[0].mxu0
        %v964 = vadd.f32 0.0, %v963
        %v965 = vpop.f32.mrb[0].mxu0
        %v966 = vadd.f32 0.0, %v965
        %967 = vmatprep.mubr.f32.mxu0 0.0
        %968 = vmatmul.mubr.f32.gmra.mrb[0].mxu0 %v407
        %v969 = vpop.f32.mrb[0].mxu0
        %v970 = vadd.f32 0.0, %v969
        %v971 = vpop.f32.mrb[0].mxu0
        %v972 = vadd.f32 0.0, %v971
        %973 = vmatprep.mubr.f32.mxu0 0.0
        %974 = vmatmul.mubr.f32.gmra.mrb[0].mxu0 %v408
        %v975 = vpop.f32.mrb[0].mxu0
        %v976 = vadd.f32 0.0, %v975
        %v977 = vpop.f32.mrb[0].mxu0
        %v978 = vadd.f32 0.0, %v977
        %979 = vmatprep.mubr.f32.mxu0 0.0
        %980 = vmatmul.mubr.f32.gmra.mrb[0].mxu0 %v409
        %v981 = vpop.f32.mrb[0].mxu0
        %v982 = vadd.f32 0.0, %v981
        %v983 = vpop.f32.mrb[0].mxu0
        %v984 = vadd.f32 0.0, %v983
        %985 = vmatprep.mubr.f32.mxu0 0.0
        %986 = vmatmul.mubr.f32.gmra.mrb[0].mxu0 %v410
        %v987 = vpop.f32.mrb[0].mxu0
        %v988 = vadd.f32 0.0, %v987
        %v989 = vpop.f32.mrb[0].mxu0
        %v990 = vadd.f32 0.0, %v989
        %991 = vmatprep.mubr.f32.mxu0 0.0
        %992 = vmatmul.mubr.f32.gmra.mrb[0].mxu0 %v411
        %v993 = vpop.f32.mrb[0].mxu0
        %v994 = vadd.f32 0.0, %v993
        %v995 = vpop.f32.mrb[0].mxu0
        %v996 = vadd.f32 0.0, %v995
        %997 = vmatprep.mubr.f32.mxu0 0.0
        %998 = vmatmul.mubr.f32.gmra.mrb[0].mxu0 %v412
        %v999 = vpop.f32.mrb[0].mxu0
        %v1000 = vadd.f32 0.0, %v999
        %v1001 = vpop.f32.mrb[0].mxu0
        %v1002 = vadd.f32 0.0, %v1001
        %1003 = vmatprep.mubr.f32.mxu0 0.0
        %1004 = vmatmul.mubr.f32.gmra.mrb[0].mxu0 %v413
        %v1005 = vpop.f32.mrb[0].mxu0
        %v1006 = vpop.f32.mrb[0].mxu0
        %1007 = vmatprep.mubr.f32.mxu0 0.0
        %1008 = vmatmul.mubr.f32.gmra.mrb[0].mxu0 %v414
        %v1009 = vpop.f32.mrb[0].mxu0
        %v1010 = vpop.f32.mrb[0].mxu0
        %1011 = vmatprep.mubr.f32.mxu0 0.0
        %1012 = vmatmul.mubr.f32.gmra.mrb[0].mxu0 %v415
        %v1013 = vpop.f32.mrb[0].mxu0
        %v1014 = vadd.f32 0.0, %v1013
        %v1015 = vpop.f32.mrb[0].mxu0
        %v1016 = vadd.f32 0.0, %v1015
        %1017 = vmatprep.mubr.f32.mxu0 0.0
        %1018 = vmatmul.mubr.f32.gmra.mrb[0].mxu0 %v416
        %v1019 = vpop.f32.mrb[0].mxu0
        %v1020 = vadd.f32 0.0, %v1019
        %v1021 = vpop.f32.mrb[0].mxu0
        %v1022 = vadd.f32 0.0, %v1021
        %1023 = vmatprep.mubr.f32.mxu0 0.0
        %1024 = vmatmul.mubr.f32.gmra.mrb[0].mxu0 %v417
        %v1025 = vpop.f32.mrb[0].mxu0
        %v1026 = vadd.f32 0.0, %v1025
        %v1027 = vpop.f32.mrb[0].mxu0
        %v1028 = vadd.f32 0.0, %v1027
        %1029 = vmatprep.mubr.f32.mxu0 0.0
        %1030 = vmatmul.mubr.f32.gmra.mrb[0].mxu0 %v418
        %v1031 = vpop.f32.mrb[0].mxu0
        %v1032 = vadd.f32 0.0, %v1031
        %v1033 = vpop.f32.mrb[0].mxu0
        %v1034 = vadd.f32 0.0, %v1033
        %1035 = vmatprep.mubr.f32.mxu0 0.0
        %1036 = vmatmul.mubr.f32.gmra.mrb[0].mxu0 %v419
        %v1037 = vpop.f32.mrb[0].mxu0
        %v1038 = vadd.f32 0.0, %v1037
        %v1039 = vpop.f32.mrb[0].mxu0
        %v1040 = vadd.f32 0.0, %v1039
        %1041 = vmatprep.mubr.f32.mxu0 0.0
        %1042 = vmatmul.mubr.f32.gmra.mrb[0].mxu0 %v420
        %v1043 = vpop.f32.mrb[0].mxu0
        %v1044 = vadd.f32 0.0, %v1043
        %v1045 = vpop.f32.mrb[0].mxu0
        %v1046 = vadd.f32 0.0, %v1045
        %1047 = vmatprep.mubr.f32.mxu0 0.0
        %1048 = vmatmul.mubr.f32.gmra.mrb[0].mxu0 %v421
        %v1049 = vpop.f32.mrb[0].mxu0
        %v1050 = vadd.f32 0.0, %v1049
        %v1051 = vpop.f32.mrb[0].mxu0
        %v1052 = vadd.f32 0.0, %v1051
        %1053 = vmatprep.mubr.f32.mxu0 0.0
        %1054 = vmatmul.mubr.f32.gmra.mrb[0].mxu0 %v422
        %v1055 = vpop.f32.mrb[0].mxu0
        %v1056 = vadd.f32 0.0, %v1055
        %v1057 = vpop.f32.mrb[0].mxu0
        %v1058 = vadd.f32 0.0, %v1057
        %1059 = vmatprep.mubr.f32.mxu0 0.0
        %1060 = vmatmul.mubr.f32.gmra.mrb[0].mxu0 %v423
        %v1061 = vpop.f32.mrb[0].mxu0
        %v1062 = vpop.f32.mrb[0].mxu0
        %1063 = vmatprep.mubr.f32.mxu0 0.0
        %1064 = vmatmul.mubr.f32.gmra.mrb[0].mxu0 %v424
        %v1065 = vpop.f32.mrb[0].mxu0
        %v1066 = vpop.f32.mrb[0].mxu0
        %1067 = vdwg.mxu0
        %s1068 = scalar_lea.vmem %s1, 512
        %v1069 = vld [vmem:[%s1068] sm:$0xff]
        %v1070 = vld [vmem:[%s1068 + $0x8] sm:$0xff]
        %v1071 = vld [vmem:[%s1068 + $0x10] sm:$0xff]
        %v1072 = vld [vmem:[%s1068 + $0x18] sm:$0xff]
        %v1073 = vld [vmem:[%s1068 + $0x20] sm:$0xff]
        %v1074 = vld [vmem:[%s1068 + $0x28] sm:$0xff]
        %v1075 = vld [vmem:[%s1068 + $0x30] sm:$0xff]
        %v1076 = vld [vmem:[%s1068 + $0x38] sm:$0xff]
        %v1077 = vld [vmem:[%s1068 + $0x40] sm:$0xff]
        %v1078 = vld [vmem:[%s1068 + $0x48] sm:$0xff]
        %v1079 = vld [vmem:[%s1068 + $0x50] sm:$0xff]
        %v1080 = vld [vmem:[%s1068 + $0x58] sm:$0xff]
        %v1081 = vld [vmem:[%s1068 + $0x60] sm:$0xff]
        %v1082 = vld [vmem:[%s1068 + $0x68] sm:$0xff]
        %v1083 = vld [vmem:[%s1068 + $0x70] sm:$0xff]
        %v1084 = vld [vmem:[%s1068 + $0x78] sm:$0xff]
        %v1085 = vld [vmem:[%s1068 + $0x80] sm:$0xff]
        %v1086 = vld [vmem:[%s1068 + $0x88] sm:$0xff]
        %v1087 = vld [vmem:[%s1068 + $0x90] sm:$0xff]
        %v1088 = vld [vmem:[%s1068 + $0x98] sm:$0xff]
        %v1089 = vld [vmem:[%s1068 + $0xa0] sm:$0xff]
        %v1090 = vld [vmem:[%s1068 + $0xa8] sm:$0xff]
        %v1091 = vld [vmem:[%s1068 + $0xb0] sm:$0xff]
        %v1092 = vld [vmem:[%s1068 + $0xb8] sm:$0xff]
        %v1093 = vld [vmem:[%s1068 + $0xc0] sm:$0xff]
        %v1094 = vld [vmem:[%s1068 + $0xc8] sm:$0xff]
        %v1095 = vld [vmem:[%s1068 + $0xd0] sm:$0xff]
        %v1096 = vld [vmem:[%s1068 + $0xd8] sm:$0xff]
        %v1097 = vld [vmem:[%s1068 + $0xe0] sm:$0xff]
        %v1098 = vld [vmem:[%s1068 + $0xe8] sm:$0xff]
        %v1099 = vld [vmem:[%s1068 + $0xf0] sm:$0xff]
        %v1100 = vld [vmem:[%s1068 + $0xf8] sm:$0xff]
        %1101 = vmatprep.subr.mxu0 %v1070
        %1102 = vmatpush1.msra.mxu0 %v1069
        %1103 = vmatprep.subr.mxu0 %v1072
        %1104 = vmatpush1.msra.mxu0 %v1071
        %1105 = vmatprep.subr.mxu0 %v1074
        %1106 = vmatpush1.msra.mxu0 %v1073
        %1107 = vmatprep.subr.mxu0 %v1076
        %1108 = vmatpush1.msra.mxu0 %v1075
        %1109 = vmatprep.subr.mxu0 %v1078
        %1110 = vmatpush1.msra.mxu0 %v1077
        %1111 = vmatprep.subr.mxu0 %v1080
        %1112 = vmatpush1.msra.mxu0 %v1079
        %1113 = vmatprep.subr.mxu0 %v1082
        %1114 = vmatpush1.msra.mxu0 %v1081
        %1115 = vmatprep.subr.mxu0 %v1084
        %1116 = vmatpush1.msra.mxu0 %v1083
        %1117 = vmatprep.subr.mxu0 %v1086
        %1118 = vmatpush1.msra.mxu0 %v1085
        %1119 = vmatprep.subr.mxu0 %v1088
        %1120 = vmatpush1.msra.mxu0 %v1087
        %1121 = vmatprep.subr.mxu0 %v1090
        %1122 = vmatpush1.msra.mxu0 %v1089
        %1123 = vmatprep.subr.mxu0 %v1092
        %1124 = vmatpush1.msra.mxu0 %v1091
        %1125 = vmatprep.subr.mxu0 %v1094
        %1126 = vmatpush1.msra.mxu0 %v1093
        %1127 = vmatprep.subr.mxu0 %v1096
        %1128 = vmatpush1.msra.mxu0 %v1095
        %1129 = vmatprep.subr.mxu0 %v1098
        %1130 = vmatpush1.msra.mxu0 %v1097
        %1131 = vmatprep.subr.mxu0 %v1100
        %1132 = vmatpush1.msra.mxu0 %v1099
        %1133 = vmatprep.subr.mxu0 0.0
        %1134 = vmatpush1.msra.mxu0 0.0
        %1135 = vmatprep.subr.mxu0 0.0
        %1136 = vmatpush1.msra.mxu0 0.0
        %1137 = vmatprep.subr.mxu0 0.0
        %1138 = vmatpush1.msra.mxu0 0.0
        %1139 = vmatprep.subr.mxu0 0.0
        %1140 = vmatpush1.msra.mxu0 0.0
        %1141 = vmatprep.subr.mxu0 0.0
        %1142 = vmatpush1.msra.mxu0 0.0
        %1143 = vmatprep.subr.mxu0 0.0
        %1144 = vmatpush1.msra.mxu0 0.0
        %1145 = vmatprep.subr.mxu0 0.0
        %1146 = vmatpush1.msra.mxu0 0.0
        %1147 = vmatprep.subr.mxu0 0.0
        %1148 = vmatpush1.msra.mxu0 0.0
        %1149 = vmatprep.subr.mxu0 0.0
        %1150 = vmatpush1.msra.mxu0 0.0
        %1151 = vmatprep.subr.mxu0 0.0
        %1152 = vmatpush1.msra.mxu0 0.0
        %1153 = vmatprep.subr.mxu0 0.0
        %1154 = vmatpush1.msra.mxu0 0.0
        %1155 = vmatprep.subr.mxu0 0.0
        %1156 = vmatpush1.msra.mxu0 0.0
        %1157 = vmatprep.subr.mxu0 0.0
        %1158 = vmatpush1.msra.mxu0 0.0
        %1159 = vmatprep.subr.mxu0 0.0
        %1160 = vmatpush1.msra.mxu0 0.0
        %1161 = vmatprep.subr.mxu0 0.0
        %1162 = vmatpush1.msra.mxu0 0.0
        %1163 = vmatprep.subr.mxu0 0.0
        %1164 = vmatpush1.msra.mxu0 0.0
        %1165 = vmatprep.mubr.f32.mxu0 0.0
        %1166 = vmatmul.mubr.f32.gmra.mrb[0].mxu0 %v385
        %v1167 = vpop.f32.mrb[0].mxu0
        %v1168 = vpop.f32.mrb[0].mxu0
        %1169 = vmatprep.mubr.f32.mxu0 0.0
        %1170 = vmatmul.mubr.f32.gmra.mrb[0].mxu0 %v386
        %v1171 = vpop.f32.mrb[0].mxu0
        %v1172 = vadd.f32 0.0, %v1171
        %v1173 = vpop.f32.mrb[0].mxu0
        %v1174 = vadd.f32 0.0, %v1173
        %1175 = vmatprep.mubr.f32.mxu0 0.0
        %1176 = vmatmul.mubr.f32.gmra.mrb[0].mxu0 %v387
        %v1177 = vpop.f32.mrb[0].mxu0
        %v1178 = vadd.f32 0.0, %v1177
        %v1179 = vpop.f32.mrb[0].mxu0
        %v1180 = vadd.f32 0.0, %v1179
        %1181 = vmatprep.mubr.f32.mxu0 0.0
        %1182 = vmatmul.mubr.f32.gmra.mrb[0].mxu0 %v388
        %v1183 = vpop.f32.mrb[0].mxu0
        %v1184 = vadd.f32 0.0, %v1183
        %v1185 = vpop.f32.mrb[0].mxu0
        %v1186 = vadd.f32 0.0, %v1185
        %1187 = vmatprep.mubr.f32.mxu0 0.0
        %1188 = vmatmul.mubr.f32.gmra.mrb[0].mxu0 %v389
        %v1189 = vpop.f32.mrb[0].mxu0
        %v1190 = vadd.f32 0.0, %v1189
        %v1191 = vpop.f32.mrb[0].mxu0
        %v1192 = vadd.f32 0.0, %v1191
        %1193 = vmatprep.mubr.f32.mxu0 0.0
        %1194 = vmatmul.mubr.f32.gmra.mrb[0].mxu0 %v390
        %v1195 = vpop.f32.mrb[0].mxu0
        %v1196 = vadd.f32 0.0, %v1195
        %v1197 = vpop.f32.mrb[0].mxu0
        %v1198 = vadd.f32 0.0, %v1197
        %1199 = vmatprep.mubr.f32.mxu0 0.0
        %1200 = vmatmul.mubr.f32.gmra.mrb[0].mxu0 %v391
        %v1201 = vpop.f32.mrb[0].mxu0
        %v1202 = vadd.f32 0.0, %v1201
        %v1203 = vpop.f32.mrb[0].mxu0
        %v1204 = vadd.f32 0.0, %v1203
        %1205 = vmatprep.mubr.f32.mxu0 0.0
        %1206 = vmatmul.mubr.f32.gmra.mrb[0].mxu0 %v392
        %v1207 = vpop.f32.mrb[0].mxu0
        %v1208 = vadd.f32 0.0, %v1207
        %v1209 = vpop.f32.mrb[0].mxu0
        %v1210 = vadd.f32 0.0, %v1209
        %1211 = vmatprep.mubr.f32.mxu0 0.0
        %1212 = vmatmul.mubr.f32.gmra.mrb[0].mxu0 %v393
        %v1213 = vpop.f32.mrb[0].mxu0
        %v1214 = vadd.f32 0.0, %v1213
        %v1215 = vpop.f32.mrb[0].mxu0
        %v1216 = vadd.f32 0.0, %v1215
        %1217 = vmatprep.mubr.f32.mxu0 0.0
        %1218 = vmatmul.mubr.f32.gmra.mrb[0].mxu0 %v394
        %v1219 = vpop.f32.mrb[0].mxu0
        %v1220 = vpop.f32.mrb[0].mxu0
        %1221 = vmatprep.mubr.f32.mxu0 0.0
        %1222 = vmatmul.mubr.f32.gmra.mrb[0].mxu0 %v395
        %v1223 = vpop.f32.mrb[0].mxu0
        %v1224 = vpop.f32.mrb[0].mxu0
        %1225 = vmatprep.mubr.f32.mxu0 0.0
        %1226 = vmatmul.mubr.f32.gmra.mrb[0].mxu0 %v396
        %v1227 = vpop.f32.mrb[0].mxu0
        %v1228 = vadd.f32 0.0, %v1227
        %v1229 = vpop.f32.mrb[0].mxu0
        %v1230 = vadd.f32 0.0, %v1229
        %1231 = vmatprep.mubr.f32.mxu0 0.0
        %1232 = vmatmul.mubr.f32.gmra.mrb[0].mxu0 %v397
        %v1233 = vpop.f32.mrb[0].mxu0
        %v1234 = vadd.f32 0.0, %v1233
        %v1235 = vpop.f32.mrb[0].mxu0
        %v1236 = vadd.f32 0.0, %v1235
        %1237 = vmatprep.mubr.f32.mxu0 0.0
        %1238 = vmatmul.mubr.f32.gmra.mrb[0].mxu0 %v398
        %v1239 = vpop.f32.mrb[0].mxu0
        %v1240 = vadd.f32 0.0, %v1239
        %v1241 = vpop.f32.mrb[0].mxu0
        %v1242 = vadd.f32 0.0, %v1241
        %1243 = vmatprep.mubr.f32.mxu0 0.0
        %1244 = vmatmul.mubr.f32.gmra.mrb[0].mxu0 %v399
        %v1245 = vpop.f32.mrb[0].mxu0
        %v1246 = vadd.f32 0.0, %v1245
        %v1247 = vpop.f32.mrb[0].mxu0
        %v1248 = vadd.f32 0.0, %v1247
        %1249 = vmatprep.mubr.f32.mxu0 0.0
        %1250 = vmatmul.mubr.f32.gmra.mrb[0].mxu0 %v400
        %v1251 = vpop.f32.mrb[0].mxu0
        %v1252 = vadd.f32 0.0, %v1251
        %v1253 = vpop.f32.mrb[0].mxu0
        %v1254 = vadd.f32 0.0, %v1253
        %1255 = vmatprep.mubr.f32.mxu0 0.0
        %1256 = vmatmul.mubr.f32.gmra.mrb[0].mxu0 %v401
        %v1257 = vpop.f32.mrb[0].mxu0
        %v1258 = vadd.f32 0.0, %v1257
        %v1259 = vpop.f32.mrb[0].mxu0
        %v1260 = vadd.f32 0.0, %v1259
        %1261 = vmatprep.mubr.f32.mxu0 0.0
        %1262 = vmatmul.mubr.f32.gmra.mrb[0].mxu0 %v402
        %v1263 = vpop.f32.mrb[0].mxu0
        %v1264 = vadd.f32 0.0, %v1263
        %v1265 = vpop.f32.mrb[0].mxu0
        %v1266 = vadd.f32 0.0, %v1265
        %1267 = vmatprep.mubr.f32.mxu0 0.0
        %1268 = vmatmul.mubr.f32.gmra.mrb[0].mxu0 %v403
        %v1269 = vpop.f32.mrb[0].mxu0
        %v1270 = vadd.f32 0.0, %v1269
        %v1271 = vpop.f32.mrb[0].mxu0
        %v1272 = vadd.f32 0.0, %v1271
        %1273 = vmatprep.mubr.f32.mxu0 0.0
        %1274 = vmatmul.mubr.f32.gmra.mrb[0].mxu0 %v404
        %v1275 = vpop.f32.mrb[0].mxu0
        %v1276 = vpop.f32.mrb[0].mxu0
        %1277 = vmatprep.mubr.f32.mxu0 0.0
        %1278 = vmatmul.mubr.f32.gmra.mrb[0].mxu0 %v405
        %v1279 = vpop.f32.mrb[0].mxu0
        %v1280 = vadd.f32 0.0, %v1279
        %v1281 = vpop.f32.mrb[0].mxu0
        %v1282 = vadd.f32 0.0, %v1281
        %1283 = vmatprep.mubr.f32.mxu0 0.0
        %1284 = vmatmul.mubr.f32.gmra.mrb[0].mxu0 %v406
        %v1285 = vpop.f32.mrb[0].mxu0
        %v1286 = vadd.f32 0.0, %v1285
        %v1287 = vpop.f32.mrb[0].mxu0
        %v1288 = vadd.f32 0.0, %v1287
        %1289 = vmatprep.mubr.f32.mxu0 0.0
        %1290 = vmatmul.mubr.f32.gmra.mrb[0].mxu0 %v407
        %v1291 = vpop.f32.mrb[0].mxu0
        %v1292 = vadd.f32 0.0, %v1291
        %v1293 = vpop.f32.mrb[0].mxu0
        %v1294 = vadd.f32 0.0, %v1293
        %1295 = vmatprep.mubr.f32.mxu0 0.0
        %1296 = vmatmul.mubr.f32.gmra.mrb[0].mxu0 %v408
        %v1297 = vpop.f32.mrb[0].mxu0
        %v1298 = vadd.f32 0.0, %v1297
        %v1299 = vpop.f32.mrb[0].mxu0
        %v1300 = vadd.f32 0.0, %v1299
        %1301 = vmatprep.mubr.f32.mxu0 0.0
        %1302 = vmatmul.mubr.f32.gmra.mrb[0].mxu0 %v409
        %v1303 = vpop.f32.mrb[0].mxu0
        %v1304 = vadd.f32 0.0, %v1303
        %v1305 = vpop.f32.mrb[0].mxu0
        %v1306 = vadd.f32 0.0, %v1305
        %1307 = vmatprep.mubr.f32.mxu0 0.0
        %1308 = vmatmul.mubr.f32.gmra.mrb[0].mxu0 %v410
        %v1309 = vpop.f32.mrb[0].mxu0
        %v1310 = vadd.f32 0.0, %v1309
        %v1311 = vpop.f32.mrb[0].mxu0
        %v1312 = vadd.f32 0.0, %v1311
        %1313 = vmatprep.mubr.f32.mxu0 0.0
        %1314 = vmatmul.mubr.f32.gmra.mrb[0].mxu0 %v411
        %v1315 = vpop.f32.mrb[0].mxu0
        %v1316 = vadd.f32 0.0, %v1315
        %v1317 = vpop.f32.mrb[0].mxu0
        %v1318 = vadd.f32 0.0, %v1317
        %1319 = vmatprep.mubr.f32.mxu0 0.0
        %1320 = vmatmul.mubr.f32.gmra.mrb[0].mxu0 %v412
        %v1321 = vpop.f32.mrb[0].mxu0
        %v1322 = vadd.f32 0.0, %v1321
        %v1323 = vpop.f32.mrb[0].mxu0
        %v1324 = vadd.f32 0.0, %v1323
        %1325 = vmatprep.mubr.f32.mxu0 0.0
        %1326 = vmatmul.mubr.f32.gmra.mrb[0].mxu0 %v413
        %v1327 = vpop.f32.mrb[0].mxu0
        %v1328 = vpop.f32.mrb[0].mxu0
        %1329 = vmatprep.mubr.f32.mxu0 0.0
        %1330 = vmatmul.mubr.f32.gmra.mrb[0].mxu0 %v414
        %v1331 = vpop.f32.mrb[0].mxu0
        %v1332 = vpop.f32.mrb[0].mxu0
        %1333 = vmatprep.mubr.f32.mxu0 0.0
        %1334 = vmatmul.mubr.f32.gmra.mrb[0].mxu0 %v415
        %v1335 = vpop.f32.mrb[0].mxu0
        %v1336 = vadd.f32 0.0, %v1335
        %v1337 = vpop.f32.mrb[0].mxu0
        %v1338 = vadd.f32 0.0, %v1337
        %1339 = vmatprep.mubr.f32.mxu0 0.0
        %1340 = vmatmul.mubr.f32.gmra.mrb[0].mxu0 %v416
        %v1341 = vpop.f32.mrb[0].mxu0
        %v1342 = vadd.f32 0.0, %v1341
        %v1343 = vpop.f32.mrb[0].mxu0
        %v1344 = vadd.f32 0.0, %v1343
        %1345 = vmatprep.mubr.f32.mxu0 0.0
        %1346 = vmatmul.mubr.f32.gmra.mrb[0].mxu0 %v417
        %v1347 = vpop.f32.mrb[0].mxu0
        %v1348 = vadd.f32 0.0, %v1347
        %v1349 = vpop.f32.mrb[0].mxu0
        %v1350 = vadd.f32 0.0, %v1349
        %1351 = vmatprep.mubr.f32.mxu0 0.0
        %1352 = vmatmul.mubr.f32.gmra.mrb[0].mxu0 %v418
        %v1353 = vpop.f32.mrb[0].mxu0
        %v1354 = vadd.f32 0.0, %v1353
        %v1355 = vpop.f32.mrb[0].mxu0
        %v1356 = vadd.f32 0.0, %v1355
        %1357 = vmatprep.mubr.f32.mxu0 0.0
        %1358 = vmatmul.mubr.f32.gmra.mrb[0].mxu0 %v419
        %v1359 = vpop.f32.mrb[0].mxu0
        %v1360 = vadd.f32 0.0, %v1359
        %v1361 = vpop.f32.mrb[0].mxu0
        %v1362 = vadd.f32 0.0, %v1361
        %1363 = vmatprep.mubr.f32.mxu0 0.0
        %1364 = vmatmul.mubr.f32.gmra.mrb[0].mxu0 %v420
        %v1365 = vpop.f32.mrb[0].mxu0
        %v1366 = vadd.f32 0.0, %v1365
        %v1367 = vpop.f32.mrb[0].mxu0
        %v1368 = vadd.f32 0.0, %v1367
        %1369 = vmatprep.mubr.f32.mxu0 0.0
        %1370 = vmatmul.mubr.f32.gmra.mrb[0].mxu0 %v421
        %v1371 = vpop.f32.mrb[0].mxu0
        %v1372 = vadd.f32 0.0, %v1371
        %v1373 = vpop.f32.mrb[0].mxu0
        %v1374 = vadd.f32 0.0, %v1373
        %1375 = vmatprep.mubr.f32.mxu0 0.0
        %1376 = vmatmul.mubr.f32.gmra.mrb[0].mxu0 %v422
        %v1377 = vpop.f32.mrb[0].mxu0
        %v1378 = vadd.f32 0.0, %v1377
        %v1379 = vpop.f32.mrb[0].mxu0
        %v1380 = vadd.f32 0.0, %v1379
        %1381 = vmatprep.mubr.f32.mxu0 0.0
        %1382 = vmatmul.mubr.f32.gmra.mrb[0].mxu0 %v423
        %v1383 = vpop.f32.mrb[0].mxu0
        %v1384 = vpop.f32.mrb[0].mxu0
        %1385 = vmatprep.mubr.f32.mxu0 0.0
        %1386 = vmatmul.mubr.f32.gmra.mrb[0].mxu0 %v424
        %v1387 = vpop.f32.mrb[0].mxu0
        %v1388 = vpop.f32.mrb[0].mxu0
        %1389 = vdwg.mxu0
        %s1390 = scalar_lea.vmem %s1, 768
        %v1391 = vld [vmem:[%s1390] sm:$0xff]
        %v1392 = vld [vmem:[%s1390 + $0x8] sm:$0xff]
        %v1393 = vld [vmem:[%s1390 + $0x10] sm:$0xff]
        %v1394 = vld [vmem:[%s1390 + $0x18] sm:$0xff]
        %v1395 = vld [vmem:[%s1390 + $0x20] sm:$0xff]
        %v1396 = vld [vmem:[%s1390 + $0x28] sm:$0xff]
        %v1397 = vld [vmem:[%s1390 + $0x30] sm:$0xff]
        %v1398 = vld [vmem:[%s1390 + $0x38] sm:$0xff]
        %v1399 = vld [vmem:[%s1390 + $0x40] sm:$0xff]
        %v1400 = vld [vmem:[%s1390 + $0x48] sm:$0xff]
        %v1401 = vld [vmem:[%s1390 + $0x50] sm:$0xff]
        %v1402 = vld [vmem:[%s1390 + $0x58] sm:$0xff]
        %v1403 = vld [vmem:[%s1390 + $0x60] sm:$0xff]
        %v1404 = vld [vmem:[%s1390 + $0x68] sm:$0xff]
        %v1405 = vld [vmem:[%s1390 + $0x70] sm:$0xff]
        %v1406 = vld [vmem:[%s1390 + $0x78] sm:$0xff]
        %v1407 = vld [vmem:[%s1390 + $0x80] sm:$0xff]
        %v1408 = vld [vmem:[%s1390 + $0x88] sm:$0xff]
        %v1409 = vld [vmem:[%s1390 + $0x90] sm:$0xff]
        %v1410 = vld [vmem:[%s1390 + $0x98] sm:$0xff]
        %v1411 = vld [vmem:[%s1390 + $0xa0] sm:$0xff]
        %v1412 = vld [vmem:[%s1390 + $0xa8] sm:$0xff]
        %v1413 = vld [vmem:[%s1390 + $0xb0] sm:$0xff]
        %v1414 = vld [vmem:[%s1390 + $0xb8] sm:$0xff]
        %v1415 = vld [vmem:[%s1390 + $0xc0] sm:$0xff]
        %v1416 = vld [vmem:[%s1390 + $0xc8] sm:$0xff]
        %v1417 = vld [vmem:[%s1390 + $0xd0] sm:$0xff]
        %v1418 = vld [vmem:[%s1390 + $0xd8] sm:$0xff]
        %v1419 = vld [vmem:[%s1390 + $0xe0] sm:$0xff]
        %v1420 = vld [vmem:[%s1390 + $0xe8] sm:$0xff]
        %v1421 = vld [vmem:[%s1390 + $0xf0] sm:$0xff]
        %v1422 = vld [vmem:[%s1390 + $0xf8] sm:$0xff]
        %1423 = vmatprep.subr.mxu0 %v1392
        %1424 = vmatpush1.msra.mxu0 %v1391
        %1425 = vmatprep.subr.mxu0 %v1394
        %1426 = vmatpush1.msra.mxu0 %v1393
        %1427 = vmatprep.subr.mxu0 %v1396
        %1428 = vmatpush1.msra.mxu0 %v1395
        %1429 = vmatprep.subr.mxu0 %v1398
        %1430 = vmatpush1.msra.mxu0 %v1397
        %1431 = vmatprep.subr.mxu0 %v1400
        %1432 = vmatpush1.msra.mxu0 %v1399
        %1433 = vmatprep.subr.mxu0 %v1402
        %1434 = vmatpush1.msra.mxu0 %v1401
        %1435 = vmatprep.subr.mxu0 %v1404
        %1436 = vmatpush1.msra.mxu0 %v1403
        %1437 = vmatprep.subr.mxu0 %v1406
        %1438 = vmatpush1.msra.mxu0 %v1405
        %1439 = vmatprep.subr.mxu0 %v1408
        %1440 = vmatpush1.msra.mxu0 %v1407
        %1441 = vmatprep.subr.mxu0 %v1410
        %1442 = vmatpush1.msra.mxu0 %v1409
        %1443 = vmatprep.subr.mxu0 %v1412
        %1444 = vmatpush1.msra.mxu0 %v1411
        %1445 = vmatprep.subr.mxu0 %v1414
        %1446 = vmatpush1.msra.mxu0 %v1413
        %1447 = vmatprep.subr.mxu0 %v1416
        %1448 = vmatpush1.msra.mxu0 %v1415
        %1449 = vmatprep.subr.mxu0 %v1418
        %1450 = vmatpush1.msra.mxu0 %v1417
        %1451 = vmatprep.subr.mxu0 %v1420
        %1452 = vmatpush1.msra.mxu0 %v1419
        %1453 = vmatprep.subr.mxu0 %v1422
        %1454 = vmatpush1.msra.mxu0 %v1421
        %1455 = vmatprep.subr.mxu0 0.0
        %1456 = vmatpush1.msra.mxu0 0.0
        %1457 = vmatprep.subr.mxu0 0.0
        %1458 = vmatpush1.msra.mxu0 0.0
        %1459 = vmatprep.subr.mxu0 0.0
        %1460 = vmatpush1.msra.mxu0 0.0
        %1461 = vmatprep.subr.mxu0 0.0
        %1462 = vmatpush1.msra.mxu0 0.0
        %1463 = vmatprep.subr.mxu0 0.0
        %1464 = vmatpush1.msra.mxu0 0.0
        %1465 = vmatprep.subr.mxu0 0.0
        %1466 = vmatpush1.msra.mxu0 0.0
        %1467 = vmatprep.subr.mxu0 0.0
        %1468 = vmatpush1.msra.mxu0 0.0
        %1469 = vmatprep.subr.mxu0 0.0
        %1470 = vmatpush1.msra.mxu0 0.0
        %1471 = vmatprep.subr.mxu0 0.0
        %1472 = vmatpush1.msra.mxu0 0.0
        %1473 = vmatprep.subr.mxu0 0.0
        %1474 = vmatpush1.msra.mxu0 0.0
        %1475 = vmatprep.subr.mxu0 0.0
        %1476 = vmatpush1.msra.mxu0 0.0
        %1477 = vmatprep.subr.mxu0 0.0
        %1478 = vmatpush1.msra.mxu0 0.0
        %1479 = vmatprep.subr.mxu0 0.0
        %1480 = vmatpush1.msra.mxu0 0.0
        %1481 = vmatprep.subr.mxu0 0.0
        %1482 = vmatpush1.msra.mxu0 0.0
        %1483 = vmatprep.subr.mxu0 0.0
        %1484 = vmatpush1.msra.mxu0 0.0
        %1485 = vmatprep.subr.mxu0 0.0
        %1486 = vmatpush1.msra.mxu0 0.0
        %1487 = vmatprep.mubr.f32.mxu0 0.0
        %1488 = vmatmul.mubr.f32.gmra.mrb[0].mxu0 %v385
        %v1489 = vpop.f32.mrb[0].mxu0
        %v1490 = vpop.f32.mrb[0].mxu0
        %1491 = vmatprep.mubr.f32.mxu0 0.0
        %1492 = vmatmul.mubr.f32.gmra.mrb[0].mxu0 %v386
        %v1493 = vpop.f32.mrb[0].mxu0
        %v1494 = vadd.f32 0.0, %v1493
        %v1495 = vpop.f32.mrb[0].mxu0
        %v1496 = vadd.f32 0.0, %v1495
        %1497 = vmatprep.mubr.f32.mxu0 0.0
        %1498 = vmatmul.mubr.f32.gmra.mrb[0].mxu0 %v387
        %v1499 = vpop.f32.mrb[0].mxu0
        %v1500 = vadd.f32 0.0, %v1499
        %v1501 = vpop.f32.mrb[0].mxu0
        %v1502 = vadd.f32 0.0, %v1501
        %1503 = vmatprep.mubr.f32.mxu0 0.0
        %1504 = vmatmul.mubr.f32.gmra.mrb[0].mxu0 %v388
        %v1505 = vpop.f32.mrb[0].mxu0
        %v1506 = vadd.f32 0.0, %v1505
        %v1507 = vpop.f32.mrb[0].mxu0
        %v1508 = vadd.f32 0.0, %v1507
        %1509 = vmatprep.mubr.f32.mxu0 0.0
        %1510 = vmatmul.mubr.f32.gmra.mrb[0].mxu0 %v389
        %v1511 = vpop.f32.mrb[0].mxu0
        %v1512 = vadd.f32 0.0, %v1511
        %v1513 = vpop.f32.mrb[0].mxu0
        %v1514 = vadd.f32 0.0, %v1513
        %1515 = vmatprep.mubr.f32.mxu0 0.0
        %1516 = vmatmul.mubr.f32.gmra.mrb[0].mxu0 %v390
        %v1517 = vpop.f32.mrb[0].mxu0
        %v1518 = vadd.f32 0.0, %v1517
        %v1519 = vpop.f32.mrb[0].mxu0
        %v1520 = vadd.f32 0.0, %v1519
        %1521 = vmatprep.mubr.f32.mxu0 0.0
        %1522 = vmatmul.mubr.f32.gmra.mrb[0].mxu0 %v391
        %v1523 = vpop.f32.mrb[0].mxu0
        %v1524 = vadd.f32 0.0, %v1523
        %v1525 = vpop.f32.mrb[0].mxu0
        %v1526 = vadd.f32 0.0, %v1525
        %1527 = vmatprep.mubr.f32.mxu0 0.0
        %1528 = vmatmul.mubr.f32.gmra.mrb[0].mxu0 %v392
        %v1529 = vpop.f32.mrb[0].mxu0
        %v1530 = vadd.f32 0.0, %v1529
        %v1531 = vpop.f32.mrb[0].mxu0
        %v1532 = vadd.f32 0.0, %v1531
        %1533 = vmatprep.mubr.f32.mxu0 0.0
        %1534 = vmatmul.mubr.f32.gmra.mrb[0].mxu0 %v393
        %v1535 = vpop.f32.mrb[0].mxu0
        %v1536 = vadd.f32 0.0, %v1535
        %v1537 = vpop.f32.mrb[0].mxu0
        %v1538 = vadd.f32 0.0, %v1537
        %1539 = vmatprep.mubr.f32.mxu0 0.0
        %1540 = vmatmul.mubr.f32.gmra.mrb[0].mxu0 %v394
        %v1541 = vpop.f32.mrb[0].mxu0
        %v1542 = vpop.f32.mrb[0].mxu0
        %1543 = vmatprep.mubr.f32.mxu0 0.0
        %1544 = vmatmul.mubr.f32.gmra.mrb[0].mxu0 %v395
        %v1545 = vpop.f32.mrb[0].mxu0
        %v1546 = vpop.f32.mrb[0].mxu0
        %1547 = vmatprep.mubr.f32.mxu0 0.0
        %1548 = vmatmul.mubr.f32.gmra.mrb[0].mxu0 %v396
        %v1549 = vpop.f32.mrb[0].mxu0
        %v1550 = vadd.f32 0.0, %v1549
        %v1551 = vpop.f32.mrb[0].mxu0
        %v1552 = vadd.f32 0.0, %v1551
        %1553 = vmatprep.mubr.f32.mxu0 0.0
        %1554 = vmatmul.mubr.f32.gmra.mrb[0].mxu0 %v397
        %v1555 = vpop.f32.mrb[0].mxu0
        %v1556 = vadd.f32 0.0, %v1555
        %v1557 = vpop.f32.mrb[0].mxu0
        %v1558 = vadd.f32 0.0, %v1557
        %1559 = vmatprep.mubr.f32.mxu0 0.0
        %1560 = vmatmul.mubr.f32.gmra.mrb[0].mxu0 %v398
        %v1561 = vpop.f32.mrb[0].mxu0
        %v1562 = vadd.f32 0.0, %v1561
        %v1563 = vpop.f32.mrb[0].mxu0
        %v1564 = vadd.f32 0.0, %v1563
        %1565 = vmatprep.mubr.f32.mxu0 0.0
        %1566 = vmatmul.mubr.f32.gmra.mrb[0].mxu0 %v399
        %v1567 = vpop.f32.mrb[0].mxu0
        %v1568 = vadd.f32 0.0, %v1567
        %v1569 = vpop.f32.mrb[0].mxu0
        %v1570 = vadd.f32 0.0, %v1569
        %1571 = vmatprep.mubr.f32.mxu0 0.0
        %1572 = vmatmul.mubr.f32.gmra.mrb[0].mxu0 %v400
        %v1573 = vpop.f32.mrb[0].mxu0
        %v1574 = vadd.f32 0.0, %v1573
        %v1575 = vpop.f32.mrb[0].mxu0
        %v1576 = vadd.f32 0.0, %v1575
        %1577 = vmatprep.mubr.f32.mxu0 0.0
        %1578 = vmatmul.mubr.f32.gmra.mrb[0].mxu0 %v401
        %v1579 = vpop.f32.mrb[0].mxu0
        %v1580 = vadd.f32 0.0, %v1579
        %v1581 = vpop.f32.mrb[0].mxu0
        %v1582 = vadd.f32 0.0, %v1581
        %1583 = vmatprep.mubr.f32.mxu0 0.0
        %1584 = vmatmul.mubr.f32.gmra.mrb[0].mxu0 %v402
        %v1585 = vpop.f32.mrb[0].mxu0
        %v1586 = vadd.f32 0.0, %v1585
        %v1587 = vpop.f32.mrb[0].mxu0
        %v1588 = vadd.f32 0.0, %v1587
        %1589 = vmatprep.mubr.f32.mxu0 0.0
        %1590 = vmatmul.mubr.f32.gmra.mrb[0].mxu0 %v403
        %v1591 = vpop.f32.mrb[0].mxu0
        %v1592 = vadd.f32 0.0, %v1591
        %v1593 = vpop.f32.mrb[0].mxu0
        %v1594 = vadd.f32 0.0, %v1593
        %1595 = vmatprep.mubr.f32.mxu0 0.0
        %1596 = vmatmul.mubr.f32.gmra.mrb[0].mxu0 %v404
        %v1597 = vpop.f32.mrb[0].mxu0
        %v1598 = vpop.f32.mrb[0].mxu0
        %1599 = vmatprep.mubr.f32.mxu0 0.0
        %1600 = vmatmul.mubr.f32.gmra.mrb[0].mxu0 %v405
        %v1601 = vpop.f32.mrb[0].mxu0
        %v1602 = vpop.f32.mrb[0].mxu0
        %1603 = vmatprep.mubr.f32.mxu0 0.0
        %1604 = vmatmul.mubr.f32.gmra.mrb[0].mxu0 %v406
        %v1605 = vpop.f32.mrb[0].mxu0
        %v1606 = vadd.f32 0.0, %v1605
        %v1607 = vpop.f32.mrb[0].mxu0
        %v1608 = vadd.f32 0.0, %v1607
        %1609 = vmatprep.mubr.f32.mxu0 0.0
        %1610 = vmatmul.mubr.f32.gmra.mrb[0].mxu0 %v407
        %v1611 = vpop.f32.mrb[0].mxu0
        %v1612 = vadd.f32 0.0, %v1611
        %v1613 = vpop.f32.mrb[0].mxu0
        %v1614 = vadd.f32 0.0, %v1613
        %1615 = vmatprep.mubr.f32.mxu0 0.0
        %1616 = vmatmul.mubr.f32.gmra.mrb[0].mxu0 %v408
        %v1617 = vpop.f32.mrb[0].mxu0
        %v1618 = vadd.f32 0.0, %v1617
        %v1619 = vpop.f32.mrb[0].mxu0
        %v1620 = vadd.f32 0.0, %v1619
        %1621 = vmatprep.mubr.f32.mxu0 0.0
        %1622 = vmatmul.mubr.f32.gmra.mrb[0].mxu0 %v409
        %v1623 = vpop.f32.mrb[0].mxu0
        %v1624 = vadd.f32 0.0, %v1623
        %v1625 = vpop.f32.mrb[0].mxu0
        %v1626 = vadd.f32 0.0, %v1625
        %1627 = vmatprep.mubr.f32.mxu0 0.0
        %1628 = vmatmul.mubr.f32.gmra.mrb[0].mxu0 %v410
        %v1629 = vpop.f32.mrb[0].mxu0
        %v1630 = vadd.f32 0.0, %v1629
        %v1631 = vpop.f32.mrb[0].mxu0
        %v1632 = vadd.f32 0.0, %v1631
        %1633 = vmatprep.mubr.f32.mxu0 0.0
        %1634 = vmatmul.mubr.f32.gmra.mrb[0].mxu0 %v411
        %v1635 = vpop.f32.mrb[0].mxu0
        %v1636 = vadd.f32 0.0, %v1635
        %v1637 = vpop.f32.mrb[0].mxu0
        %v1638 = vadd.f32 0.0, %v1637
        %1639 = vmatprep.mubr.f32.mxu0 0.0
        %1640 = vmatmul.mubr.f32.gmra.mrb[0].mxu0 %v412
        %v1641 = vpop.f32.mrb[0].mxu0
        %v1642 = vadd.f32 0.0, %v1641
        %v1643 = vpop.f32.mrb[0].mxu0
        %v1644 = vadd.f32 0.0, %v1643
        %1645 = vmatprep.mubr.f32.mxu0 0.0
        %1646 = vmatmul.mubr.f32.gmra.mrb[0].mxu0 %v413
        %v1647 = vpop.f32.mrb[0].mxu0
        %v1648 = vadd.f32 0.0, %v1647
        %v1649 = vpop.f32.mrb[0].mxu0
        %v1650 = vadd.f32 0.0, %v1649
        %1651 = vmatprep.mubr.f32.mxu0 0.0
        %1652 = vmatmul.mubr.f32.gmra.mrb[0].mxu0 %v414
        %v1653 = vpop.f32.mrb[0].mxu0
        %v1654 = vpop.f32.mrb[0].mxu0
        %1655 = vmatprep.mubr.f32.mxu0 0.0
        %1656 = vmatmul.mubr.f32.gmra.mrb[0].mxu0 %v415
        %v1657 = vpop.f32.mrb[0].mxu0
        %v1658 = vadd.f32 0.0, %v1657
        %v1659 = vpop.f32.mrb[0].mxu0
        %v1660 = vadd.f32 0.0, %v1659
        %1661 = vmatprep.mubr.f32.mxu0 0.0
        %1662 = vmatmul.mubr.f32.gmra.mrb[0].mxu0 %v416
        %v1663 = vpop.f32.mrb[0].mxu0
        %v1664 = vadd.f32 0.0, %v1663
        %v1665 = vpop.f32.mrb[0].mxu0
        %v1666 = vadd.f32 0.0, %v1665
        %1667 = vmatprep.mubr.f32.mxu0 0.0
        %1668 = vmatmul.mubr.f32.gmra.mrb[0].mxu0 %v417
        %v1669 = vpop.f32.mrb[0].mxu0
        %v1670 = vadd.f32 0.0, %v1669
        %v1671 = vpop.f32.mrb[0].mxu0
        %v1672 = vadd.f32 0.0, %v1671
        %1673 = vmatprep.mubr.f32.mxu0 0.0
        %1674 = vmatmul.mubr.f32.gmra.mrb[0].mxu0 %v418
        %v1675 = vpop.f32.mrb[0].mxu0
        %v1676 = vadd.f32 0.0, %v1675
        %v1677 = vpop.f32.mrb[0].mxu0
        %v1678 = vadd.f32 0.0, %v1677
        %1679 = vmatprep.mubr.f32.mxu0 0.0
        %1680 = vmatmul.mubr.f32.gmra.mrb[0].mxu0 %v419
        %v1681 = vpop.f32.mrb[0].mxu0
        %v1682 = vadd.f32 0.0, %v1681
        %v1683 = vpop.f32.mrb[0].mxu0
        %v1684 = vadd.f32 0.0, %v1683
        %1685 = vmatprep.mubr.f32.mxu0 0.0
        %1686 = vmatmul.mubr.f32.gmra.mrb[0].mxu0 %v420
        %v1687 = vpop.f32.mrb[0].mxu0
        %v1688 = vadd.f32 0.0, %v1687
        %v1689 = vpop.f32.mrb[0].mxu0
        %v1690 = vadd.f32 0.0, %v1689
        %1691 = vmatprep.mubr.f32.mxu0 0.0
        %1692 = vmatmul.mubr.f32.gmra.mrb[0].mxu0 %v421
        %v1693 = vpop.f32.mrb[0].mxu0
        %v1694 = vadd.f32 0.0, %v1693
        %v1695 = vpop.f32.mrb[0].mxu0
        %v1696 = vadd.f32 0.0, %v1695
        %1697 = vmatprep.mubr.f32.mxu0 0.0
        %1698 = vmatmul.mubr.f32.gmra.mrb[0].mxu0 %v422
        %v1699 = vpop.f32.mrb[0].mxu0
        %v1700 = vadd.f32 0.0, %v1699
        %v1701 = vpop.f32.mrb[0].mxu0
        %v1702 = vadd.f32 0.0, %v1701
        %1703 = vmatprep.mubr.f32.mxu0 0.0
        %1704 = vmatmul.mubr.f32.gmra.mrb[0].mxu0 %v423
        %v1705 = vpop.f32.mrb[0].mxu0
        %v1706 = vpop.f32.mrb[0].mxu0
        %1707 = vmatprep.mubr.f32.mxu0 0.0
        %1708 = vmatmul.mubr.f32.gmra.mrb[0].mxu0 %v424
        %v1709 = vpop.f32.mrb[0].mxu0
        %v1710 = vpop.f32.mrb[0].mxu0
        %1711 = vdwg.mxu0
        %s1712 = scalar_lea.vmem %s1, 1024
        %v1713 = vld [vmem:[%s1712] sm:$0xff]
        %v1714 = vld [vmem:[%s1712 + $0x8] sm:$0xff]
        %v1715 = vld [vmem:[%s1712 + $0x10] sm:$0xff]
        %v1716 = vld [vmem:[%s1712 + $0x18] sm:$0xff]
        %v1717 = vld [vmem:[%s1712 + $0x20] sm:$0xff]
        %v1718 = vld [vmem:[%s1712 + $0x28] sm:$0xff]
        %v1719 = vld [vmem:[%s1712 + $0x30] sm:$0xff]
        %v1720 = vld [vmem:[%s1712 + $0x38] sm:$0xff]
        %v1721 = vld [vmem:[%s1712 + $0x40] sm:$0xff]
        %v1722 = vld [vmem:[%s1712 + $0x48] sm:$0xff]
        %v1723 = vld [vmem:[%s1712 + $0x50] sm:$0xff]
        %v1724 = vld [vmem:[%s1712 + $0x58] sm:$0xff]
        %v1725 = vld [vmem:[%s1712 + $0x60] sm:$0xff]
        %v1726 = vld [vmem:[%s1712 + $0x68] sm:$0xff]
        %v1727 = vld [vmem:[%s1712 + $0x70] sm:$0xff]
        %v1728 = vld [vmem:[%s1712 + $0x78] sm:$0xff]
        %v1729 = vld [vmem:[%s1712 + $0x80] sm:$0xff]
        %v1730 = vld [vmem:[%s1712 + $0x88] sm:$0xff]
        %v1731 = vld [vmem:[%s1712 + $0x90] sm:$0xff]
        %v1732 = vld [vmem:[%s1712 + $0x98] sm:$0xff]
        %v1733 = vld [vmem:[%s1712 + $0xa0] sm:$0xff]
        %v1734 = vld [vmem:[%s1712 + $0xa8] sm:$0xff]
        %v1735 = vld [vmem:[%s1712 + $0xb0] sm:$0xff]
        %v1736 = vld [vmem:[%s1712 + $0xb8] sm:$0xff]
        %v1737 = vld [vmem:[%s1712 + $0xc0] sm:$0xff]
        %v1738 = vld [vmem:[%s1712 + $0xc8] sm:$0xff]
        %v1739 = vld [vmem:[%s1712 + $0xd0] sm:$0xff]
        %v1740 = vld [vmem:[%s1712 + $0xd8] sm:$0xff]
        %v1741 = vld [vmem:[%s1712 + $0xe0] sm:$0xff]
        %v1742 = vld [vmem:[%s1712 + $0xe8] sm:$0xff]
        %v1743 = vld [vmem:[%s1712 + $0xf0] sm:$0xff]
        %v1744 = vld [vmem:[%s1712 + $0xf8] sm:$0xff]
        %1745 = vmatprep.subr.mxu0 %v1714
        %1746 = vmatpush1.msra.mxu0 %v1713
        %1747 = vmatprep.subr.mxu0 %v1716
        %1748 = vmatpush1.msra.mxu0 %v1715
        %1749 = vmatprep.subr.mxu0 %v1718
        %1750 = vmatpush1.msra.mxu0 %v1717
        %1751 = vmatprep.subr.mxu0 %v1720
        %1752 = vmatpush1.msra.mxu0 %v1719
        %1753 = vmatprep.subr.mxu0 %v1722
        %1754 = vmatpush1.msra.mxu0 %v1721
        %1755 = vmatprep.subr.mxu0 %v1724
        %1756 = vmatpush1.msra.mxu0 %v1723
        %1757 = vmatprep.subr.mxu0 %v1726
        %1758 = vmatpush1.msra.mxu0 %v1725
        %1759 = vmatprep.subr.mxu0 %v1728
        %1760 = vmatpush1.msra.mxu0 %v1727
        %1761 = vmatprep.subr.mxu0 %v1730
        %1762 = vmatpush1.msra.mxu0 %v1729
        %1763 = vmatprep.subr.mxu0 %v1732
        %1764 = vmatpush1.msra.mxu0 %v1731
        %1765 = vmatprep.subr.mxu0 %v1734
        %1766 = vmatpush1.msra.mxu0 %v1733
        %1767 = vmatprep.subr.mxu0 %v1736
        %1768 = vmatpush1.msra.mxu0 %v1735
        %1769 = vmatprep.subr.mxu0 %v1738
        %1770 = vmatpush1.msra.mxu0 %v1737
        %1771 = vmatprep.subr.mxu0 %v1740
        %1772 = vmatpush1.msra.mxu0 %v1739
        %1773 = vmatprep.subr.mxu0 %v1742
        %1774 = vmatpush1.msra.mxu0 %v1741
        %1775 = vmatprep.subr.mxu0 %v1744
        %1776 = vmatpush1.msra.mxu0 %v1743
        %1777 = vmatprep.subr.mxu0 0.0
        %1778 = vmatpush1.msra.mxu0 0.0
        %1779 = vmatprep.subr.mxu0 0.0
        %1780 = vmatpush1.msra.mxu0 0.0
        %1781 = vmatprep.subr.mxu0 0.0
        %1782 = vmatpush1.msra.mxu0 0.0
        %1783 = vmatprep.subr.mxu0 0.0
        %1784 = vmatpush1.msra.mxu0 0.0
        %1785 = vmatprep.subr.mxu0 0.0
        %1786 = vmatpush1.msra.mxu0 0.0
        %1787 = vmatprep.subr.mxu0 0.0
        %1788 = vmatpush1.msra.mxu0 0.0
        %1789 = vmatprep.subr.mxu0 0.0
        %1790 = vmatpush1.msra.mxu0 0.0
        %1791 = vmatprep.subr.mxu0 0.0
        %1792 = vmatpush1.msra.mxu0 0.0
        %1793 = vmatprep.subr.mxu0 0.0
        %1794 = vmatpush1.msra.mxu0 0.0
        %1795 = vmatprep.subr.mxu0 0.0
        %1796 = vmatpush1.msra.mxu0 0.0
        %1797 = vmatprep.subr.mxu0 0.0
        %1798 = vmatpush1.msra.mxu0 0.0
        %1799 = vmatprep.subr.mxu0 0.0
        %1800 = vmatpush1.msra.mxu0 0.0
        %1801 = vmatprep.subr.mxu0 0.0
        %1802 = vmatpush1.msra.mxu0 0.0
        %1803 = vmatprep.subr.mxu0 0.0
        %1804 = vmatpush1.msra.mxu0 0.0
        %1805 = vmatprep.subr.mxu0 0.0
        %1806 = vmatpush1.msra.mxu0 0.0
        %1807 = vmatprep.subr.mxu0 0.0
        %1808 = vmatpush1.msra.mxu0 0.0
        %1809 = vmatprep.mubr.f32.mxu0 0.0
        %1810 = vmatmul.mubr.f32.gmra.mrb[0].mxu0 %v385
        %v1811 = vpop.f32.mrb[0].mxu0
        %v1812 = vpop.f32.mrb[0].mxu0
        %1813 = vmatprep.mubr.f32.mxu0 0.0
        %1814 = vmatmul.mubr.f32.gmra.mrb[0].mxu0 %v386
        %v1815 = vpop.f32.mrb[0].mxu0
        %v1816 = vadd.f32 0.0, %v1815
        %v1817 = vpop.f32.mrb[0].mxu0
        %v1818 = vadd.f32 0.0, %v1817
        %1819 = vmatprep.mubr.f32.mxu0 0.0
        %1820 = vmatmul.mubr.f32.gmra.mrb[0].mxu0 %v387
        %v1821 = vpop.f32.mrb[0].mxu0
        %v1822 = vadd.f32 0.0, %v1821
        %v1823 = vpop.f32.mrb[0].mxu0
        %v1824 = vadd.f32 0.0, %v1823
        %1825 = vmatprep.mubr.f32.mxu0 0.0
        %1826 = vmatmul.mubr.f32.gmra.mrb[0].mxu0 %v388
        %v1827 = vpop.f32.mrb[0].mxu0
        %v1828 = vadd.f32 0.0, %v1827
        %v1829 = vpop.f32.mrb[0].mxu0
        %v1830 = vadd.f32 0.0, %v1829
        %1831 = vmatprep.mubr.f32.mxu0 0.0
        %1832 = vmatmul.mubr.f32.gmra.mrb[0].mxu0 %v389
        %v1833 = vpop.f32.mrb[0].mxu0
        %v1834 = vadd.f32 0.0, %v1833
        %v1835 = vpop.f32.mrb[0].mxu0
        %v1836 = vadd.f32 0.0, %v1835
        %1837 = vmatprep.mubr.f32.mxu0 0.0
        %1838 = vmatmul.mubr.f32.gmra.mrb[0].mxu0 %v390
        %v1839 = vpop.f32.mrb[0].mxu0
        %v1840 = vadd.f32 0.0, %v1839
        %v1841 = vpop.f32.mrb[0].mxu0
        %v1842 = vadd.f32 0.0, %v1841
        %1843 = vmatprep.mubr.f32.mxu0 0.0
        %1844 = vmatmul.mubr.f32.gmra.mrb[0].mxu0 %v391
        %v1845 = vpop.f32.mrb[0].mxu0
        %v1846 = vadd.f32 0.0, %v1845
        %v1847 = vpop.f32.mrb[0].mxu0
        %v1848 = vadd.f32 0.0, %v1847
        %1849 = vmatprep.mubr.f32.mxu0 0.0
        %1850 = vmatmul.mubr.f32.gmra.mrb[0].mxu0 %v392
        %v1851 = vpop.f32.mrb[0].mxu0
        %v1852 = vadd.f32 0.0, %v1851
        %v1853 = vpop.f32.mrb[0].mxu0
        %v1854 = vadd.f32 0.0, %v1853
        %1855 = vmatprep.mubr.f32.mxu0 0.0
        %1856 = vmatmul.mubr.f32.gmra.mrb[0].mxu0 %v393
        %v1857 = vpop.f32.mrb[0].mxu0
        %v1858 = vadd.f32 0.0, %v1857
        %v1859 = vpop.f32.mrb[0].mxu0
        %v1860 = vadd.f32 0.0, %v1859
        %1861 = vmatprep.mubr.f32.mxu0 0.0
        %1862 = vmatmul.mubr.f32.gmra.mrb[0].mxu0 %v394
        %v1863 = vpop.f32.mrb[0].mxu0
        %v1864 = vpop.f32.mrb[0].mxu0
        %1865 = vmatprep.mubr.f32.mxu0 0.0
        %1866 = vmatmul.mubr.f32.gmra.mrb[0].mxu0 %v395
        %v1867 = vpop.f32.mrb[0].mxu0
        %v1868 = vpop.f32.mrb[0].mxu0
        %1869 = vmatprep.mubr.f32.mxu0 0.0
        %1870 = vmatmul.mubr.f32.gmra.mrb[0].mxu0 %v396
        %v1871 = vpop.f32.mrb[0].mxu0
        %v1872 = vadd.f32 0.0, %v1871
        %v1873 = vpop.f32.mrb[0].mxu0
        %v1874 = vadd.f32 0.0, %v1873
        %1875 = vmatprep.mubr.f32.mxu0 0.0
        %1876 = vmatmul.mubr.f32.gmra.mrb[0].mxu0 %v397
        %v1877 = vpop.f32.mrb[0].mxu0
        %v1878 = vadd.f32 0.0, %v1877
        %v1879 = vpop.f32.mrb[0].mxu0
        %v1880 = vadd.f32 0.0, %v1879
        %1881 = vmatprep.mubr.f32.mxu0 0.0
        %1882 = vmatmul.mubr.f32.gmra.mrb[0].mxu0 %v398
        %v1883 = vpop.f32.mrb[0].mxu0
        %v1884 = vadd.f32 0.0, %v1883
        %v1885 = vpop.f32.mrb[0].mxu0
        %v1886 = vadd.f32 0.0, %v1885
        %1887 = vmatprep.mubr.f32.mxu0 0.0
        %1888 = vmatmul.mubr.f32.gmra.mrb[0].mxu0 %v399
        %v1889 = vpop.f32.mrb[0].mxu0
        %v1890 = vadd.f32 0.0, %v1889
        %v1891 = vpop.f32.mrb[0].mxu0
        %v1892 = vadd.f32 0.0, %v1891
        %1893 = vmatprep.mubr.f32.mxu0 0.0
        %1894 = vmatmul.mubr.f32.gmra.mrb[0].mxu0 %v400
        %v1895 = vpop.f32.mrb[0].mxu0
        %v1896 = vadd.f32 0.0, %v1895
        %v1897 = vpop.f32.mrb[0].mxu0
        %v1898 = vadd.f32 0.0, %v1897
        %1899 = vmatprep.mubr.f32.mxu0 0.0
        %1900 = vmatmul.mubr.f32.gmra.mrb[0].mxu0 %v401
        %v1901 = vpop.f32.mrb[0].mxu0
        %v1902 = vadd.f32 0.0, %v1901
        %v1903 = vpop.f32.mrb[0].mxu0
        %v1904 = vadd.f32 0.0, %v1903
        %1905 = vmatprep.mubr.f32.mxu0 0.0
        %1906 = vmatmul.mubr.f32.gmra.mrb[0].mxu0 %v402
        %v1907 = vpop.f32.mrb[0].mxu0
        %v1908 = vadd.f32 0.0, %v1907
        %v1909 = vpop.f32.mrb[0].mxu0
        %v1910 = vadd.f32 0.0, %v1909
        %1911 = vmatprep.mubr.f32.mxu0 0.0
        %1912 = vmatmul.mubr.f32.gmra.mrb[0].mxu0 %v403
        %v1913 = vpop.f32.mrb[0].mxu0
        %v1914 = vadd.f32 0.0, %v1913
        %v1915 = vpop.f32.mrb[0].mxu0
        %v1916 = vadd.f32 0.0, %v1915
        %1917 = vmatprep.mubr.f32.mxu0 0.0
        %1918 = vmatmul.mubr.f32.gmra.mrb[0].mxu0 %v404
        %v1919 = vpop.f32.mrb[0].mxu0
        %v1920 = vpop.f32.mrb[0].mxu0
        %1921 = vmatprep.mubr.f32.mxu0 0.0
        %1922 = vmatmul.mubr.f32.gmra.mrb[0].mxu0 %v405
        %v1923 = vpop.f32.mrb[0].mxu0
        %v1924 = vpop.f32.mrb[0].mxu0
        %1925 = vmatprep.mubr.f32.mxu0 0.0
        %1926 = vmatmul.mubr.f32.gmra.mrb[0].mxu0 %v406
        %v1927 = vpop.f32.mrb[0].mxu0
        %v1928 = vadd.f32 0.0, %v1927
        %v1929 = vpop.f32.mrb[0].mxu0
        %v1930 = vadd.f32 0.0, %v1929
        %1931 = vmatprep.mubr.f32.mxu0 0.0
        %1932 = vmatmul.mubr.f32.gmra.mrb[0].mxu0 %v407
        %v1933 = vpop.f32.mrb[0].mxu0
        %v1934 = vadd.f32 0.0, %v1933
        %v1935 = vpop.f32.mrb[0].mxu0
        %v1936 = vadd.f32 0.0, %v1935
        %1937 = vmatprep.mubr.f32.mxu0 0.0
        %1938 = vmatmul.mubr.f32.gmra.mrb[0].mxu0 %v408
        %v1939 = vpop.f32.mrb[0].mxu0
        %v1940 = vadd.f32 0.0, %v1939
        %v1941 = vpop.f32.mrb[0].mxu0
        %v1942 = vadd.f32 0.0, %v1941
        %1943 = vmatprep.mubr.f32.mxu0 0.0
        %1944 = vmatmul.mubr.f32.gmra.mrb[0].mxu0 %v409
        %v1945 = vpop.f32.mrb[0].mxu0
        %v1946 = vadd.f32 0.0, %v1945
        %v1947 = vpop.f32.mrb[0].mxu0
        %v1948 = vadd.f32 0.0, %v1947
        %1949 = vmatprep.mubr.f32.mxu0 0.0
        %1950 = vmatmul.mubr.f32.gmra.mrb[0].mxu0 %v410
        %v1951 = vpop.f32.mrb[0].mxu0
        %v1952 = vadd.f32 0.0, %v1951
        %v1953 = vpop.f32.mrb[0].mxu0
        %v1954 = vadd.f32 0.0, %v1953
        %1955 = vmatprep.mubr.f32.mxu0 0.0
        %1956 = vmatmul.mubr.f32.gmra.mrb[0].mxu0 %v411
        %v1957 = vpop.f32.mrb[0].mxu0
        %v1958 = vadd.f32 0.0, %v1957
        %v1959 = vpop.f32.mrb[0].mxu0
        %v1960 = vadd.f32 0.0, %v1959
        %1961 = vmatprep.mubr.f32.mxu0 0.0
        %1962 = vmatmul.mubr.f32.gmra.mrb[0].mxu0 %v412
        %v1963 = vpop.f32.mrb[0].mxu0
        %v1964 = vadd.f32 0.0, %v1963
        %v1965 = vpop.f32.mrb[0].mxu0
        %v1966 = vadd.f32 0.0, %v1965
        %1967 = vmatprep.mubr.f32.mxu0 0.0
        %1968 = vmatmul.mubr.f32.gmra.mrb[0].mxu0 %v413
        %v1969 = vpop.f32.mrb[0].mxu0
        %v1970 = vadd.f32 0.0, %v1969
        %v1971 = vpop.f32.mrb[0].mxu0
        %v1972 = vadd.f32 0.0, %v1971
        %1973 = vmatprep.mubr.f32.mxu0 0.0
        %1974 = vmatmul.mubr.f32.gmra.mrb[0].mxu0 %v414
        %v1975 = vpop.f32.mrb[0].mxu0
        %v1976 = vpop.f32.mrb[0].mxu0
        %1977 = vmatprep.mubr.f32.mxu0 0.0
        %1978 = vmatmul.mubr.f32.gmra.mrb[0].mxu0 %v415
        %v1979 = vpop.f32.mrb[0].mxu0
        %v1980 = vpop.f32.mrb[0].mxu0
        %1981 = vmatprep.mubr.f32.mxu0 0.0
        %1982 = vmatmul.mubr.f32.gmra.mrb[0].mxu0 %v416
        %v1983 = vpop.f32.mrb[0].mxu0
        %v1984 = vadd.f32 0.0, %v1983
        %v1985 = vpop.f32.mrb[0].mxu0
        %v1986 = vadd.f32 0.0, %v1985
        %1987 = vmatprep.mubr.f32.mxu0 0.0
        %1988 = vmatmul.mubr.f32.gmra.mrb[0].mxu0 %v417
        %v1989 = vpop.f32.mrb[0].mxu0
        %v1990 = vadd.f32 0.0, %v1989
        %v1991 = vpop.f32.mrb[0].mxu0
        %v1992 = vadd.f32 0.0, %v1991
        %1993 = vmatprep.mubr.f32.mxu0 0.0
        %1994 = vmatmul.mubr.f32.gmra.mrb[0].mxu0 %v418
        %v1995 = vpop.f32.mrb[0].mxu0
        %v1996 = vadd.f32 0.0, %v1995
        %v1997 = vpop.f32.mrb[0].mxu0
        %v1998 = vadd.f32 0.0, %v1997
        %1999 = vmatprep.mubr.f32.mxu0 0.0
        %2000 = vmatmul.mubr.f32.gmra.mrb[0].mxu0 %v419
        %v2001 = vpop.f32.mrb[0].mxu0
        %v2002 = vadd.f32 0.0, %v2001
        %v2003 = vpop.f32.mrb[0].mxu0
        %v2004 = vadd.f32 0.0, %v2003
        %2005 = vmatprep.mubr.f32.mxu0 0.0
        %2006 = vmatmul.mubr.f32.gmra.mrb[0].mxu0 %v420
        %v2007 = vpop.f32.mrb[0].mxu0
        %v2008 = vadd.f32 0.0, %v2007
        %v2009 = vpop.f32.mrb[0].mxu0
        %v2010 = vadd.f32 0.0, %v2009
        %2011 = vmatprep.mubr.f32.mxu0 0.0
        %2012 = vmatmul.mubr.f32.gmra.mrb[0].mxu0 %v421
        %v2013 = vpop.f32.mrb[0].mxu0
        %v2014 = vadd.f32 0.0, %v2013
        %v2015 = vpop.f32.mrb[0].mxu0
        %v2016 = vadd.f32 0.0, %v2015
        %2017 = vmatprep.mubr.f32.mxu0 0.0
        %2018 = vmatmul.mubr.f32.gmra.mrb[0].mxu0 %v422
        %v2019 = vpop.f32.mrb[0].mxu0
        %v2020 = vadd.f32 0.0, %v2019
        %v2021 = vpop.f32.mrb[0].mxu0
        %v2022 = vadd.f32 0.0, %v2021
        %2023 = vmatprep.mubr.f32.mxu0 0.0
        %2024 = vmatmul.mubr.f32.gmra.mrb[0].mxu0 %v423
        %v2025 = vpop.f32.mrb[0].mxu0
        %v2026 = vadd.f32 0.0, %v2025
        %v2027 = vpop.f32.mrb[0].mxu0
        %v2028 = vadd.f32 0.0, %v2027
        %2029 = vmatprep.mubr.f32.mxu0 0.0
        %2030 = vmatmul.mubr.f32.gmra.mrb[0].mxu0 %v424
        %v2031 = vpop.f32.mrb[0].mxu0
        %v2032 = vpop.f32.mrb[0].mxu0
        %2033 = vdwg.mxu0
        %v2034 = vadd.f32 %v524, %v902
        %v2035 = vadd.f32 %v526, %v904
        %v2036 = vadd.f32 %v530, %v908
        %v2037 = vadd.f32 %v532, %v910
        %v2038 = vadd.f32 %v536, %v914
        %v2039 = vadd.f32 %v538, %v916
        %v2040 = vadd.f32 %v542, %v920
        %v2041 = vadd.f32 %v544, %v922
        %v2042 = vadd.f32 %v548, %v926
        %v2043 = vadd.f32 %v550, %v928
        %v2044 = vadd.f32 %v554, %v932
        %v2045 = vadd.f32 %v556, %v934
        %v2046 = vadd.f32 %v560, %v938
        %v2047 = vadd.f32 %v562, %v940
        %v2048 = vadd.f32 %v566, %v944
        %v2049 = vadd.f32 %v568, %v946
        %v2050 = vadd.f32 %v2034, %v1280
        %v2051 = vadd.f32 %v2035, %v1282
        %v2052 = vadd.f32 %v2036, %v1286
        %v2053 = vadd.f32 %v2037, %v1288
        %v2054 = vadd.f32 %v2038, %v1292
        %v2055 = vadd.f32 %v2039, %v1294
        %v2056 = vadd.f32 %v2040, %v1298
        %v2057 = vadd.f32 %v2041, %v1300
        %v2058 = vadd.f32 %v2042, %v1304
        %v2059 = vadd.f32 %v2043, %v1306
        %v2060 = vadd.f32 %v2044, %v1310
        %v2061 = vadd.f32 %v2045, %v1312
        %v2062 = vadd.f32 %v2046, %v1316
        %v2063 = vadd.f32 %v2047, %v1318
        %v2064 = vadd.f32 %v2048, %v1322
        %v2065 = vadd.f32 %v2049, %v1324
        %v2066 = vadd.f32 %v2050, %v1658
        %v2067 = vadd.f32 %v2051, %v1660
        %v2068 = vadd.f32 %v2052, %v1664
        %v2069 = vadd.f32 %v2053, %v1666
        %v2070 = vadd.f32 %v2054, %v1670
        %v2071 = vadd.f32 %v2055, %v1672
        %v2072 = vadd.f32 %v2056, %v1676
        %v2073 = vadd.f32 %v2057, %v1678
        %v2074 = vadd.f32 %v2058, %v1682
        %v2075 = vadd.f32 %v2059, %v1684
        %v2076 = vadd.f32 %v2060, %v1688
        %v2077 = vadd.f32 %v2061, %v1690
        %v2078 = vadd.f32 %v2062, %v1694
        %v2079 = vadd.f32 %v2063, %v1696
        %v2080 = vadd.f32 %v2064, %v1700
        %v2081 = vadd.f32 %v2065, %v1702
        %v2082 = vadd.f32 %v2066, %v1816
        %v2083 = vadd.f32 %v2067, %v1818
        %v2084 = vadd.f32 %v2068, %v1822
        %v2085 = vadd.f32 %v2069, %v1824
        %v2086 = vadd.f32 %v2070, %v1828
        %v2087 = vadd.f32 %v2071, %v1830
        %v2088 = vadd.f32 %v2072, %v1834
        %v2089 = vadd.f32 %v2073, %v1836
        %v2090 = vadd.f32 %v2074, %v1840
        %v2091 = vadd.f32 %v2075, %v1842
        %v2092 = vadd.f32 %v2076, %v1846
        %v2093 = vadd.f32 %v2077, %v1848
        %v2094 = vadd.f32 %v2078, %v1852
        %v2095 = vadd.f32 %v2079, %v1854
        %v2096 = vadd.f32 %v2080, %v1858
        %v2097 = vadd.f32 %v2081, %v1860
        %v2098 = vadd.f32 %v580, %v958
        %v2099 = vadd.f32 %v582, %v960
        %v2100 = vadd.f32 %v586, %v964
        %v2101 = vadd.f32 %v588, %v966
        %v2102 = vadd.f32 %v592, %v970
        %v2103 = vadd.f32 %v594, %v972
        %v2104 = vadd.f32 %v598, %v976
        %v2105 = vadd.f32 %v600, %v978
        %v2106 = vadd.f32 %v604, %v982
        %v2107 = vadd.f32 %v606, %v984
        %v2108 = vadd.f32 %v610, %v988
        %v2109 = vadd.f32 %v612, %v990
        %v2110 = vadd.f32 %v616, %v994
        %v2111 = vadd.f32 %v618, %v996
        %v2112 = vadd.f32 %v622, %v1000
        %v2113 = vadd.f32 %v624, %v1002
        %v2114 = vadd.f32 %v2098, %v1336
        %v2115 = vadd.f32 %v2099, %v1338
        %v2116 = vadd.f32 %v2100, %v1342
        %v2117 = vadd.f32 %v2101, %v1344
        %v2118 = vadd.f32 %v2102, %v1348
        %v2119 = vadd.f32 %v2103, %v1350
        %v2120 = vadd.f32 %v2104, %v1354
        %v2121 = vadd.f32 %v2105, %v1356
        %v2122 = vadd.f32 %v2106, %v1360
        %v2123 = vadd.f32 %v2107, %v1362
        %v2124 = vadd.f32 %v2108, %v1366
        %v2125 = vadd.f32 %v2109, %v1368
        %v2126 = vadd.f32 %v2110, %v1372
        %v2127 = vadd.f32 %v2111, %v1374
        %v2128 = vadd.f32 %v2112, %v1378
        %v2129 = vadd.f32 %v2113, %v1380
        %v2130 = vadd.f32 %v2114, %v1494
        %v2131 = vadd.f32 %v2115, %v1496
        %v2132 = vadd.f32 %v2116, %v1500
        %v2133 = vadd.f32 %v2117, %v1502
        %v2134 = vadd.f32 %v2118, %v1506
        %v2135 = vadd.f32 %v2119, %v1508
        %v2136 = vadd.f32 %v2120, %v1512
        %v2137 = vadd.f32 %v2121, %v1514
        %v2138 = vadd.f32 %v2122, %v1518
        %v2139 = vadd.f32 %v2123, %v1520
        %v2140 = vadd.f32 %v2124, %v1524
        %v2141 = vadd.f32 %v2125, %v1526
        %v2142 = vadd.f32 %v2126, %v1530
        %v2143 = vadd.f32 %v2127, %v1532
        %v2144 = vadd.f32 %v2128, %v1536
        %v2145 = vadd.f32 %v2129, %v1538
        %v2146 = vadd.f32 %v2130, %v1872
        %v2147 = vadd.f32 %v2131, %v1874
        %v2148 = vadd.f32 %v2132, %v1878
        %v2149 = vadd.f32 %v2133, %v1880
        %v2150 = vadd.f32 %v2134, %v1884
        %v2151 = vadd.f32 %v2135, %v1886
        %v2152 = vadd.f32 %v2136, %v1890
        %v2153 = vadd.f32 %v2137, %v1892
        %v2154 = vadd.f32 %v2138, %v1896
        %v2155 = vadd.f32 %v2139, %v1898
        %v2156 = vadd.f32 %v2140, %v1902
        %v2157 = vadd.f32 %v2141, %v1904
        %v2158 = vadd.f32 %v2142, %v1908
        %v2159 = vadd.f32 %v2143, %v1910
        %v2160 = vadd.f32 %v2144, %v1914
        %v2161 = vadd.f32 %v2145, %v1916
        %v2162 = vadd.f32 %v636, %v1014
        %v2163 = vadd.f32 %v638, %v1016
        %v2164 = vadd.f32 %v642, %v1020
        %v2165 = vadd.f32 %v644, %v1022
        %v2166 = vadd.f32 %v648, %v1026
        %v2167 = vadd.f32 %v650, %v1028
        %v2168 = vadd.f32 %v654, %v1032
        %v2169 = vadd.f32 %v656, %v1034
        %v2170 = vadd.f32 %v660, %v1038
        %v2171 = vadd.f32 %v662, %v1040
        %v2172 = vadd.f32 %v666, %v1044
        %v2173 = vadd.f32 %v668, %v1046
        %v2174 = vadd.f32 %v672, %v1050
        %v2175 = vadd.f32 %v674, %v1052
        %v2176 = vadd.f32 %v678, %v1056
        %v2177 = vadd.f32 %v680, %v1058
        %v2178 = vadd.f32 %v2162, %v1172
        %v2179 = vadd.f32 %v2163, %v1174
        %v2180 = vadd.f32 %v2164, %v1178
        %v2181 = vadd.f32 %v2165, %v1180
        %v2182 = vadd.f32 %v2166, %v1184
        %v2183 = vadd.f32 %v2167, %v1186
        %v2184 = vadd.f32 %v2168, %v1190
        %v2185 = vadd.f32 %v2169, %v1192
        %v2186 = vadd.f32 %v2170, %v1196
        %v2187 = vadd.f32 %v2171, %v1198
        %v2188 = vadd.f32 %v2172, %v1202
        %v2189 = vadd.f32 %v2173, %v1204
        %v2190 = vadd.f32 %v2174, %v1208
        %v2191 = vadd.f32 %v2175, %v1210
        %v2192 = vadd.f32 %v2176, %v1214
        %v2193 = vadd.f32 %v2177, %v1216
        %v2194 = vadd.f32 %v2178, %v1550
        %v2195 = vadd.f32 %v2179, %v1552
        %v2196 = vadd.f32 %v2180, %v1556
        %v2197 = vadd.f32 %v2181, %v1558
        %v2198 = vadd.f32 %v2182, %v1562
        %v2199 = vadd.f32 %v2183, %v1564
        %v2200 = vadd.f32 %v2184, %v1568
        %v2201 = vadd.f32 %v2185, %v1570
        %v2202 = vadd.f32 %v2186, %v1574
        %v2203 = vadd.f32 %v2187, %v1576
        %v2204 = vadd.f32 %v2188, %v1580
        %v2205 = vadd.f32 %v2189, %v1582
        %v2206 = vadd.f32 %v2190, %v1586
        %v2207 = vadd.f32 %v2191, %v1588
        %v2208 = vadd.f32 %v2192, %v1592
        %v2209 = vadd.f32 %v2193, %v1594
        %v2210 = vadd.f32 %v2194, %v1928
        %v2211 = vadd.f32 %v2195, %v1930
        %v2212 = vadd.f32 %v2196, %v1934
        %v2213 = vadd.f32 %v2197, %v1936
        %v2214 = vadd.f32 %v2198, %v1940
        %v2215 = vadd.f32 %v2199, %v1942
        %v2216 = vadd.f32 %v2200, %v1946
        %v2217 = vadd.f32 %v2201, %v1948
        %v2218 = vadd.f32 %v2202, %v1952
        %v2219 = vadd.f32 %v2203, %v1954
        %v2220 = vadd.f32 %v2204, %v1958
        %v2221 = vadd.f32 %v2205, %v1960
        %v2222 = vadd.f32 %v2206, %v1964
        %v2223 = vadd.f32 %v2207, %v1966
        %v2224 = vadd.f32 %v2208, %v1970
        %v2225 = vadd.f32 %v2209, %v1972
        %v2226 = vadd.f32 %v692, %v850
        %v2227 = vadd.f32 %v694, %v852
        %v2228 = vadd.f32 %v698, %v856
        %v2229 = vadd.f32 %v700, %v858
        %v2230 = vadd.f32 %v704, %v862
        %v2231 = vadd.f32 %v706, %v864
        %v2232 = vadd.f32 %v710, %v868
        %v2233 = vadd.f32 %v712, %v870
        %v2234 = vadd.f32 %v716, %v874
        %v2235 = vadd.f32 %v718, %v876
        %v2236 = vadd.f32 %v722, %v880
        %v2237 = vadd.f32 %v724, %v882
        %v2238 = vadd.f32 %v728, %v886
        %v2239 = vadd.f32 %v730, %v888
        %v2240 = vadd.f32 %v734, %v892
        %v2241 = vadd.f32 %v736, %v894
        %v2242 = vadd.f32 %v2226, %v1228
        %v2243 = vadd.f32 %v2227, %v1230
        %v2244 = vadd.f32 %v2228, %v1234
        %v2245 = vadd.f32 %v2229, %v1236
        %v2246 = vadd.f32 %v2230, %v1240
        %v2247 = vadd.f32 %v2231, %v1242
        %v2248 = vadd.f32 %v2232, %v1246
        %v2249 = vadd.f32 %v2233, %v1248
        %v2250 = vadd.f32 %v2234, %v1252
        %v2251 = vadd.f32 %v2235, %v1254
        %v2252 = vadd.f32 %v2236, %v1258
        %v2253 = vadd.f32 %v2237, %v1260
        %v2254 = vadd.f32 %v2238, %v1264
        %v2255 = vadd.f32 %v2239, %v1266
        %v2256 = vadd.f32 %v2240, %v1270
        %v2257 = vadd.f32 %v2241, %v1272
        %v2258 = vadd.f32 %v2242, %v1606
        %v2259 = vadd.f32 %v2243, %v1608
        %v2260 = vadd.f32 %v2244, %v1612
        %v2261 = vadd.f32 %v2245, %v1614
        %v2262 = vadd.f32 %v2246, %v1618
        %v2263 = vadd.f32 %v2247, %v1620
        %v2264 = vadd.f32 %v2248, %v1624
        %v2265 = vadd.f32 %v2249, %v1626
        %v2266 = vadd.f32 %v2250, %v1630
        %v2267 = vadd.f32 %v2251, %v1632
        %v2268 = vadd.f32 %v2252, %v1636
        %v2269 = vadd.f32 %v2253, %v1638
        %v2270 = vadd.f32 %v2254, %v1642
        %v2271 = vadd.f32 %v2255, %v1644
        %v2272 = vadd.f32 %v2256, %v1648
        %v2273 = vadd.f32 %v2257, %v1650
        %v2274 = vadd.f32 %v2258, %v1984
        %v2275 = vadd.f32 %v2259, %v1986
        %v2276 = vadd.f32 %v2260, %v1990
        %v2277 = vadd.f32 %v2261, %v1992
        %v2278 = vadd.f32 %v2262, %v1996
        %v2279 = vadd.f32 %v2263, %v1998
        %v2280 = vadd.f32 %v2264, %v2002
        %v2281 = vadd.f32 %v2265, %v2004
        %v2282 = vadd.f32 %v2266, %v2008
        %v2283 = vadd.f32 %v2267, %v2010
        %v2284 = vadd.f32 %v2268, %v2014
        %v2285 = vadd.f32 %v2269, %v2016
        %v2286 = vadd.f32 %v2270, %v2020
        %v2287 = vadd.f32 %v2271, %v2022
        %v2288 = vadd.f32 %v2272, %v2026
        %v2289 = vadd.f32 %v2273, %v2028
        %v2290 = vmax.f32 %v2082, %v2146
        %v2291 = vmax.f32 %v2083, %v2147
        %v2292 = vmax.f32 %v2084, %v2148
        %v2293 = vmax.f32 %v2085, %v2149
        %v2294 = vmax.f32 %v2086, %v2150
        %v2295 = vmax.f32 %v2087, %v2151
        %v2296 = vmax.f32 %v2088, %v2152
        %v2297 = vmax.f32 %v2089, %v2153
        %v2298 = vmax.f32 %v2090, %v2154
        %v2299 = vmax.f32 %v2091, %v2155
        %v2300 = vmax.f32 %v2092, %v2156
        %v2301 = vmax.f32 %v2093, %v2157
        %v2302 = vmax.f32 %v2094, %v2158
        %v2303 = vmax.f32 %v2095, %v2159
        %v2304 = vmax.f32 %v2096, %v2160
        %v2305 = vmax.f32 %v2097, %v2161
        %v2306 = vld [vmem:[%s2] sm:$0x3]
        %v2308 = vlaneseq
        %v2309 = vshrl.u32 %v2308, 7
        %v2310 = vsub.s32 0, %v2309
        %v2311 = vrot.slane %v2306, %v2310
        %v2312 = vlaneseq
        %v2313 = vshrl.u32 %v2312, 7
        %v2314 = vsub.s32 1, %v2313
        %v2315 = vrot.slane %v2306, %v2314
        %v2318 = vadd.f32 %v2290, %v2311
        %v2319 = vadd.f32 %v2291, %v2315
        %v2320 = vadd.f32 %v2292, %v2311
        %v2321 = vadd.f32 %v2293, %v2315
        %v2322 = vadd.f32 %v2294, %v2311
        %v2323 = vadd.f32 %v2295, %v2315
        %v2324 = vadd.f32 %v2296, %v2311
        %v2325 = vadd.f32 %v2297, %v2315
        %v2326 = vadd.f32 %v2298, %v2311
        %v2327 = vadd.f32 %v2299, %v2315
        %v2328 = vadd.f32 %v2300, %v2311
        %v2329 = vadd.f32 %v2301, %v2315
        %v2330 = vadd.f32 %v2302, %v2311
        %v2331 = vadd.f32 %v2303, %v2315
        %v2332 = vadd.f32 %v2304, %v2311
        %v2333 = vadd.f32 %v2305, %v2315
        %v2334 = vmax.f32 %v2318, 0.0
        %v2335 = vmax.f32 %v2319, 0.0
        %v2336 = vmax.f32 %v2320, 0.0
        %v2337 = vmax.f32 %v2321, 0.0
        %v2338 = vmax.f32 %v2322, 0.0
        %v2339 = vmax.f32 %v2323, 0.0
        %v2340 = vmax.f32 %v2324, 0.0
        %v2341 = vmax.f32 %v2325, 0.0
        %v2342 = vmax.f32 %v2326, 0.0
        %v2343 = vmax.f32 %v2327, 0.0
        %v2344 = vmax.f32 %v2328, 0.0
        %v2345 = vmax.f32 %v2329, 0.0
        %v2346 = vmax.f32 %v2330, 0.0
        %v2347 = vmax.f32 %v2331, 0.0
        %v2348 = vmax.f32 %v2332, 0.0
        %v2349 = vmax.f32 %v2333, 0.0
        %v2350 = vmax.f32 %v2210, %v2274
        %v2351 = vmax.f32 %v2211, %v2275
        %v2352 = vmax.f32 %v2212, %v2276
        %v2353 = vmax.f32 %v2213, %v2277
        %v2354 = vmax.f32 %v2214, %v2278
        %v2355 = vmax.f32 %v2215, %v2279
        %v2356 = vmax.f32 %v2216, %v2280
        %v2357 = vmax.f32 %v2217, %v2281
        %v2358 = vmax.f32 %v2218, %v2282
        %v2359 = vmax.f32 %v2219, %v2283
        %v2360 = vmax.f32 %v2220, %v2284
        %v2361 = vmax.f32 %v2221, %v2285
        %v2362 = vmax.f32 %v2222, %v2286
        %v2363 = vmax.f32 %v2223, %v2287
        %v2364 = vmax.f32 %v2224, %v2288
        %v2365 = vmax.f32 %v2225, %v2289
        %v2366 = vadd.f32 %v2350, %v2311
        %v2367 = vadd.f32 %v2351, %v2315
        %v2368 = vadd.f32 %v2352, %v2311
        %v2369 = vadd.f32 %v2353, %v2315
        %v2370 = vadd.f32 %v2354, %v2311
        %v2371 = vadd.f32 %v2355, %v2315
        %v2372 = vadd.f32 %v2356, %v2311
        %v2373 = vadd.f32 %v2357, %v2315
        %v2374 = vadd.f32 %v2358, %v2311
        %v2375 = vadd.f32 %v2359, %v2315
        %v2376 = vadd.f32 %v2360, %v2311
        %v2377 = vadd.f32 %v2361, %v2315
        %v2378 = vadd.f32 %v2362, %v2311
        %v2379 = vadd.f32 %v2363, %v2315
        %v2380 = vadd.f32 %v2364, %v2311
        %v2381 = vadd.f32 %v2365, %v2315
        %v2382 = vmax.f32 %v2366, 0.0
        %v2383 = vmax.f32 %v2367, 0.0
        %v2384 = vmax.f32 %v2368, 0.0
        %v2385 = vmax.f32 %v2369, 0.0
        %v2386 = vmax.f32 %v2370, 0.0
        %v2387 = vmax.f32 %v2371, 0.0
        %v2388 = vmax.f32 %v2372, 0.0
        %v2389 = vmax.f32 %v2373, 0.0
        %v2390 = vmax.f32 %v2374, 0.0
        %v2391 = vmax.f32 %v2375, 0.0
        %v2392 = vmax.f32 %v2376, 0.0
        %v2393 = vmax.f32 %v2377, 0.0
        %v2394 = vmax.f32 %v2378, 0.0
        %v2395 = vmax.f32 %v2379, 0.0
        %v2396 = vmax.f32 %v2380, 0.0
        %v2397 = vmax.f32 %v2381, 0.0
        %2414 = vrot.lane.b32.xlu0 %v2334, 122
        %v2415 = vpop.permute.xlu0 %2414
        %2416 = vrot.lane.b32.xlu0 %v2335, 122
        %v2417 = vpop.permute.xlu0 %2416
        %2418 = vrot.lane.b32.xlu0 %v2336, 122
        %v2419 = vpop.permute.xlu0 %2418
        %2420 = vrot.lane.b32.xlu0 %v2337, 122
        %v2421 = vpop.permute.xlu0 %2420
        %2422 = vrot.lane.b32.xlu0 %v2338, 122
        %v2423 = vpop.permute.xlu0 %2422
        %2424 = vrot.lane.b32.xlu0 %v2339, 122
        %v2425 = vpop.permute.xlu0 %2424
        %2426 = vrot.lane.b32.xlu0 %v2340, 122
        %v2427 = vpop.permute.xlu0 %2426
        %2428 = vrot.lane.b32.xlu0 %v2341, 122
        %v2429 = vpop.permute.xlu0 %2428
        %2430 = vrot.lane.b32.xlu0 %v2342, 122
        %v2431 = vpop.permute.xlu0 %2430
        %2432 = vrot.lane.b32.xlu0 %v2343, 122
        %v2433 = vpop.permute.xlu0 %2432
        %2434 = vrot.lane.b32.xlu0 %v2344, 122
        %v2435 = vpop.permute.xlu0 %2434
        %2436 = vrot.lane.b32.xlu0 %v2345, 122
        %v2437 = vpop.permute.xlu0 %2436
        %2438 = vrot.lane.b32.xlu0 %v2346, 122
        %v2439 = vpop.permute.xlu0 %2438
        %2440 = vrot.lane.b32.xlu0 %v2347, 122
        %v2441 = vpop.permute.xlu0 %2440
        %2442 = vrot.lane.b32.xlu0 %v2348, 122
        %v2443 = vpop.permute.xlu0 %2442
        %2444 = vrot.lane.b32.xlu0 %v2349, 122
        %v2445 = vpop.permute.xlu0 %2444
        %vm2446 = vcmask 998400
        %v2447 = vsel %vm2446, %v2415, %v2417
        %v2448 = vsel %vm2446, %v2419, %v2421
        %v2449 = vsel %vm2446, %v2423, %v2425
        %v2450 = vsel %vm2446, %v2427, %v2429
        %v2451 = vsel %vm2446, %v2431, %v2433
        %v2452 = vsel %vm2446, %v2435, %v2437
        %v2453 = vsel %vm2446, %v2439, %v2441
        %v2454 = vsel %vm2446, %v2443, %v2445
        %v2471 = vmax.f32 %v2334, %v2447
        %v2472 = vmax.f32 %v2335, %v2417
        %v2473 = vmax.f32 %v2336, %v2448
        %v2474 = vmax.f32 %v2337, %v2421
        %v2475 = vmax.f32 %v2338, %v2449
        %v2476 = vmax.f32 %v2339, %v2425
        %v2477 = vmax.f32 %v2340, %v2450
        %v2478 = vmax.f32 %v2341, %v2429
        %v2479 = vmax.f32 %v2342, %v2451
        %v2480 = vmax.f32 %v2343, %v2433
        %v2481 = vmax.f32 %v2344, %v2452
        %v2482 = vmax.f32 %v2345, %v2437
        %v2483 = vmax.f32 %v2346, %v2453
        %v2484 = vmax.f32 %v2347, %v2441
        %v2485 = vmax.f32 %v2348, %v2454
        %v2486 = vmax.f32 %v2349, %v2445
        %2503 = vrot.lane.b32.xlu0 %v2382, 122
        %v2504 = vpop.permute.xlu0 %2503
        %2505 = vrot.lane.b32.xlu0 %v2383, 122
        %v2506 = vpop.permute.xlu0 %2505
        %2507 = vrot.lane.b32.xlu0 %v2384, 122
        %v2508 = vpop.permute.xlu0 %2507
        %2509 = vrot.lane.b32.xlu0 %v2385, 122
        %v2510 = vpop.permute.xlu0 %2509
        %2511 = vrot.lane.b32.xlu0 %v2386, 122
        %v2512 = vpop.permute.xlu0 %2511
        %2513 = vrot.lane.b32.xlu0 %v2387, 122
        %v2514 = vpop.permute.xlu0 %2513
        %2515 = vrot.lane.b32.xlu0 %v2388, 122
        %v2516 = vpop.permute.xlu0 %2515
        %2517 = vrot.lane.b32.xlu0 %v2389, 122
        %v2518 = vpop.permute.xlu0 %2517
        %2519 = vrot.lane.b32.xlu0 %v2390, 122
        %v2520 = vpop.permute.xlu0 %2519
        %2521 = vrot.lane.b32.xlu0 %v2391, 122
        %v2522 = vpop.permute.xlu0 %2521
        %2523 = vrot.lane.b32.xlu0 %v2392, 122
        %v2524 = vpop.permute.xlu0 %2523
        %2525 = vrot.lane.b32.xlu0 %v2393, 122
        %v2526 = vpop.permute.xlu0 %2525
        %2527 = vrot.lane.b32.xlu0 %v2394, 122
        %v2528 = vpop.permute.xlu0 %2527
        %2529 = vrot.lane.b32.xlu0 %v2395, 122
        %v2530 = vpop.permute.xlu0 %2529
        %2531 = vrot.lane.b32.xlu0 %v2396, 122
        %v2532 = vpop.permute.xlu0 %2531
        %2533 = vrot.lane.b32.xlu0 %v2397, 122
        %v2534 = vpop.permute.xlu0 %2533
        %v2535 = vsel %vm2446, %v2504, %v2506
        %v2536 = vsel %vm2446, %v2508, %v2510
        %v2537 = vsel %vm2446, %v2512, %v2514
        %v2538 = vsel %vm2446, %v2516, %v2518
        %v2539 = vsel %vm2446, %v2520, %v2522
        %v2540 = vsel %vm2446, %v2524, %v2526
        %v2541 = vsel %vm2446, %v2528, %v2530
        %v2542 = vsel %vm2446, %v2532, %v2534
        %v2559 = vmax.f32 %v2382, %v2535
        %v2560 = vmax.f32 %v2383, %v2506
        %v2561 = vmax.f32 %v2384, %v2536
        %v2562 = vmax.f32 %v2385, %v2510
        %v2563 = vmax.f32 %v2386, %v2537
        %v2564 = vmax.f32 %v2387, %v2514
        %v2565 = vmax.f32 %v2388, %v2538
        %v2566 = vmax.f32 %v2389, %v2518
        %v2567 = vmax.f32 %v2390, %v2539
        %v2568 = vmax.f32 %v2391, %v2522
        %v2569 = vmax.f32 %v2392, %v2540
        %v2570 = vmax.f32 %v2393, %v2526
        %v2571 = vmax.f32 %v2394, %v2541
        %v2572 = vmax.f32 %v2395, %v2530
        %v2573 = vmax.f32 %v2396, %v2542
        %v2574 = vmax.f32 %v2397, %v2534
        %v2575 = vld [vmem:[%s3] sm:$0xff]
        %v2576 = vld [vmem:[%s3 + $0x8] sm:$0xff]
        %v2577 = vld [vmem:[%s3 + $0x10] sm:$0xff]
        %v2578 = vld [vmem:[%s3 + $0x18] sm:$0xff]
        %v2579 = vld [vmem:[%s3 + $0x20] sm:$0xff]
        %v2580 = vld [vmem:[%s3 + $0x28] sm:$0xff]
        %v2581 = vld [vmem:[%s3 + $0x30] sm:$0xff]
        %v2582 = vld [vmem:[%s3 + $0x38] sm:$0xff]
        %v2583 = vld [vmem:[%s3 + $0x40] sm:$0xff]
        %v2584 = vld [vmem:[%s3 + $0x48] sm:$0xff]
        %v2585 = vld [vmem:[%s3 + $0x50] sm:$0xff]
        %v2586 = vld [vmem:[%s3 + $0x58] sm:$0xff]
        %v2587 = vld [vmem:[%s3 + $0x60] sm:$0xff]
        %v2588 = vld [vmem:[%s3 + $0x68] sm:$0xff]
        %v2589 = vld [vmem:[%s3 + $0x70] sm:$0xff]
        %v2590 = vld [vmem:[%s3 + $0x78] sm:$0xff]
        %v2591 = vld [vmem:[%s3 + $0x80] sm:$0xff]
        %v2592 = vld [vmem:[%s3 + $0x88] sm:$0xff]
        %v2593 = vld [vmem:[%s3 + $0x90] sm:$0xff]
        %v2594 = vld [vmem:[%s3 + $0x98] sm:$0xff]
        %v2595 = vld [vmem:[%s3 + $0xa0] sm:$0xff]
        %v2596 = vld [vmem:[%s3 + $0xa8] sm:$0xff]
        %v2597 = vld [vmem:[%s3 + $0xb0] sm:$0xff]
        %v2598 = vld [vmem:[%s3 + $0xb8] sm:$0xff]
        %v2599 = vld [vmem:[%s3 + $0xc0] sm:$0xff]
        %v2600 = vld [vmem:[%s3 + $0xc8] sm:$0xff]
        %v2601 = vld [vmem:[%s3 + $0xd0] sm:$0xff]
        %v2602 = vld [vmem:[%s3 + $0xd8] sm:$0xff]
        %v2603 = vld [vmem:[%s3 + $0xe0] sm:$0xff]
        %v2604 = vld [vmem:[%s3 + $0xe8] sm:$0xff]
        %v2605 = vld [vmem:[%s3 + $0xf0] sm:$0xff]
        %v2606 = vld [vmem:[%s3 + $0xf8] sm:$0xff]
        %v2607 = vld [vmem:[%s3 + $0x100] sm:$0xff]
        %v2608 = vld [vmem:[%s3 + $0x108] sm:$0xff]
        %v2609 = vld [vmem:[%s3 + $0x110] sm:$0xff]
        %v2610 = vld [vmem:[%s3 + $0x118] sm:$0xff]
        %v2611 = vld [vmem:[%s3 + $0x120] sm:$0xff]
        %v2612 = vld [vmem:[%s3 + $0x128] sm:$0xff]
        %v2613 = vld [vmem:[%s3 + $0x130] sm:$0xff]
        %v2614 = vld [vmem:[%s3 + $0x138] sm:$0xff]
        %v2615 = vld [vmem:[%s3 + $0x140] sm:$0x3]
        %v2616 = vld [vmem:[%s3 + $0x148] sm:$0x3]
        %vm2617 = vcmask 277504
        %v2619 = vsel %vm2617, %v2472, 0
        %v2622 = vsel %vm2617, %v2474, 0
        %v2625 = vsel %vm2617, %v2476, 0
        %v2628 = vsel %vm2617, %v2478, 0
        %v2631 = vsel %vm2617, %v2480, 0
        %v2634 = vsel %vm2617, %v2482, 0
        %v2637 = vsel %vm2617, %v2484, 0
        %v2640 = vsel %vm2617, %v2486, 0
        %vm2642 = vcmask 1041408
        %v2644 = vsel %vm2642, %v2615, 0
        %v2647 = vsel %vm2642, %v2616, 0
        %2649 = vmatprep.subr.mxu0 %v2576
        %2650 = vmatpush1.msra.mxu0 %v2575
        %2651 = vmatprep.subr.mxu0 %v2578
        %2652 = vmatpush1.msra.mxu0 %v2577
        %2653 = vmatprep.subr.mxu0 %v2580
        %2654 = vmatpush1.msra.mxu0 %v2579
        %2655 = vmatprep.subr.mxu0 %v2582
        %2656 = vmatpush1.msra.mxu0 %v2581
        %2657 = vmatprep.subr.mxu0 %v2584
        %2658 = vmatpush1.msra.mxu0 %v2583
        %2659 = vmatprep.subr.mxu0 %v2586
        %2660 = vmatpush1.msra.mxu0 %v2585
        %2661 = vmatprep.subr.mxu0 %v2588
        %2662 = vmatpush1.msra.mxu0 %v2587
        %2663 = vmatprep.subr.mxu0 %v2590
        %2664 = vmatpush1.msra.mxu0 %v2589
        %2665 = vmatprep.subr.mxu0 %v2592
        %2666 = vmatpush1.msra.mxu0 %v2591
        %2667 = vmatprep.subr.mxu0 %v2594
        %2668 = vmatpush1.msra.mxu0 %v2593
        %2669 = vmatprep.subr.mxu0 %v2596
        %2670 = vmatpush1.msra.mxu0 %v2595
        %2671 = vmatprep.subr.mxu0 %v2598
        %2672 = vmatpush1.msra.mxu0 %v2597
        %2673 = vmatprep.subr.mxu0 %v2600
        %2674 = vmatpush1.msra.mxu0 %v2599
        %2675 = vmatprep.subr.mxu0 %v2602
        %2676 = vmatpush1.msra.mxu0 %v2601
        %2677 = vmatprep.subr.mxu0 %v2604
        %2678 = vmatpush1.msra.mxu0 %v2603
        %2679 = vmatprep.subr.mxu0 %v2606
        %2680 = vmatpush1.msra.mxu0 %v2605
        %2681 = vmatprep.subr.mxu0 %v2608
        %2682 = vmatpush1.msra.mxu0 %v2607
        %2683 = vmatprep.subr.mxu0 %v2610
        %2684 = vmatpush1.msra.mxu0 %v2609
        %2685 = vmatprep.subr.mxu0 %v2612
        %2686 = vmatpush1.msra.mxu0 %v2611
        %2687 = vmatprep.subr.mxu0 %v2614
        %2688 = vmatpush1.msra.mxu0 %v2613
        %2689 = vmatprep.subr.mxu0 %v2647
        %2690 = vmatpush1.msra.mxu0 %v2644
        %2691 = vmatprep.subr.mxu0 0.0
        %2692 = vmatpush1.msra.mxu0 0.0
        %2693 = vmatprep.subr.mxu0 0.0
        %2694 = vmatpush1.msra.mxu0 0.0
        %2695 = vmatprep.subr.mxu0 0.0
        %2696 = vmatpush1.msra.mxu0 0.0
        %2697 = vmatprep.subr.mxu0 0.0
        %2698 = vmatpush1.msra.mxu0 0.0
        %2699 = vmatprep.subr.mxu0 0.0
        %2700 = vmatpush1.msra.mxu0 0.0
        %2701 = vmatprep.subr.mxu0 0.0
        %2702 = vmatpush1.msra.mxu0 0.0
        %2703 = vmatprep.subr.mxu0 0.0
        %2704 = vmatpush1.msra.mxu0 0.0
        %2705 = vmatprep.subr.mxu0 0.0
        %2706 = vmatpush1.msra.mxu0 0.0
        %2707 = vmatprep.subr.mxu0 0.0
        %2708 = vmatpush1.msra.mxu0 0.0
        %2709 = vmatprep.subr.mxu0 0.0
        %2710 = vmatpush1.msra.mxu0 0.0
        %2711 = vmatprep.subr.mxu0 0.0
        %2712 = vmatpush1.msra.mxu0 0.0
        %2713 = vmatprep.mubr.f32.mxu0 %v2619
        %2714 = vmatmul.mubr.f32.gmra.mrb[0].mxu0 %v2471
        %v2715 = vpop.f32.mrb[0].mxu0
        %v2716 = vadd.f32 0.0, %v2715
        %v2717 = vpop.f32.mrb[0].mxu0
        %v2718 = vadd.f32 0.0, %v2717
        %2719 = vmatprep.mubr.f32.mxu0 %v2622
        %2720 = vmatmul.mubr.f32.gmra.mrb[0].mxu0 %v2473
        %v2721 = vpop.f32.mrb[0].mxu0
        %v2722 = vadd.f32 0.0, %v2721
        %v2723 = vpop.f32.mrb[0].mxu0
        %v2724 = vadd.f32 0.0, %v2723
        %2725 = vmatprep.mubr.f32.mxu0 %v2625
        %2726 = vmatmul.mubr.f32.gmra.mrb[0].mxu0 %v2475
        %v2727 = vpop.f32.mrb[0].mxu0
        %v2728 = vadd.f32 0.0, %v2727
        %v2729 = vpop.f32.mrb[0].mxu0
        %v2730 = vadd.f32 0.0, %v2729
        %2731 = vmatprep.mubr.f32.mxu0 %v2628
        %2732 = vmatmul.mubr.f32.gmra.mrb[0].mxu0 %v2477
        %v2733 = vpop.f32.mrb[0].mxu0
        %v2734 = vadd.f32 0.0, %v2733
        %v2735 = vpop.f32.mrb[0].mxu0
        %v2736 = vadd.f32 0.0, %v2735
        %2737 = vmatprep.mubr.f32.mxu0 %v2631
        %2738 = vmatmul.mubr.f32.gmra.mrb[0].mxu0 %v2479
        %v2739 = vpop.f32.mrb[0].mxu0
        %v2740 = vadd.f32 0.0, %v2739
        %v2741 = vpop.f32.mrb[0].mxu0
        %v2742 = vadd.f32 0.0, %v2741
        %2743 = vmatprep.mubr.f32.mxu0 %v2634
        %2744 = vmatmul.mubr.f32.gmra.mrb[0].mxu0 %v2481
        %v2745 = vpop.f32.mrb[0].mxu0
        %v2746 = vpop.f32.mrb[0].mxu0
        %2747 = vmatprep.mubr.f32.mxu0 %v2637
        %2748 = vmatmul.mubr.f32.gmra.mrb[0].mxu0 %v2483
        %v2749 = vpop.f32.mrb[0].mxu0
        %v2750 = vpop.f32.mrb[0].mxu0
        %2751 = vmatprep.mubr.f32.mxu0 %v2640
        %2752 = vmatmul.mubr.f32.gmra.mrb[0].mxu0 %v2485
        %v2753 = vpop.f32.mrb[0].mxu0
        %v2754 = vpop.f32.mrb[0].mxu0
        %2755 = vdwg.mxu0
        %s2756 = scalar_lea.vmem %s3, 336
        %v2757 = vld [vmem:[%s2756] sm:$0xff]
        %v2758 = vld [vmem:[%s2756 + $0x8] sm:$0xff]
        %v2759 = vld [vmem:[%s2756 + $0x10] sm:$0xff]
        %v2760 = vld [vmem:[%s2756 + $0x18] sm:$0xff]
        %v2761 = vld [vmem:[%s2756 + $0x20] sm:$0xff]
        %v2762 = vld [vmem:[%s2756 + $0x28] sm:$0xff]
        %v2763 = vld [vmem:[%s2756 + $0x30] sm:$0xff]
        %v2764 = vld [vmem:[%s2756 + $0x38] sm:$0xff]
        %v2765 = vld [vmem:[%s2756 + $0x40] sm:$0xff]
        %v2766 = vld [vmem:[%s2756 + $0x48] sm:$0xff]
        %v2767 = vld [vmem:[%s2756 + $0x50] sm:$0xff]
        %v2768 = vld [vmem:[%s2756 + $0x58] sm:$0xff]
        %v2769 = vld [vmem:[%s2756 + $0x60] sm:$0xff]
        %v2770 = vld [vmem:[%s2756 + $0x68] sm:$0xff]
        %v2771 = vld [vmem:[%s2756 + $0x70] sm:$0xff]
        %v2772 = vld [vmem:[%s2756 + $0x78] sm:$0xff]
        %v2773 = vld [vmem:[%s2756 + $0x80] sm:$0xff]
        %v2774 = vld [vmem:[%s2756 + $0x88] sm:$0xff]
        %v2775 = vld [vmem:[%s2756 + $0x90] sm:$0xff]
        %v2776 = vld [vmem:[%s2756 + $0x98] sm:$0xff]
        %v2777 = vld [vmem:[%s2756 + $0xa0] sm:$0xff]
        %v2778 = vld [vmem:[%s2756 + $0xa8] sm:$0xff]
        %v2779 = vld [vmem:[%s2756 + $0xb0] sm:$0xff]
        %v2780 = vld [vmem:[%s2756 + $0xb8] sm:$0xff]
        %v2781 = vld [vmem:[%s2756 + $0xc0] sm:$0xff]
        %v2782 = vld [vmem:[%s2756 + $0xc8] sm:$0xff]
        %v2783 = vld [vmem:[%s2756 + $0xd0] sm:$0xff]
        %v2784 = vld [vmem:[%s2756 + $0xd8] sm:$0xff]
        %v2785 = vld [vmem:[%s2756 + $0xe0] sm:$0xff]
        %v2786 = vld [vmem:[%s2756 + $0xe8] sm:$0xff]
        %v2787 = vld [vmem:[%s2756 + $0xf0] sm:$0xff]
        %v2788 = vld [vmem:[%s2756 + $0xf8] sm:$0xff]
        %v2789 = vld [vmem:[%s2756 + $0x100] sm:$0xff]
        %v2790 = vld [vmem:[%s2756 + $0x108] sm:$0xff]
        %v2791 = vld [vmem:[%s2756 + $0x110] sm:$0xff]
        %v2792 = vld [vmem:[%s2756 + $0x118] sm:$0xff]
        %v2793 = vld [vmem:[%s2756 + $0x120] sm:$0xff]
        %v2794 = vld [vmem:[%s2756 + $0x128] sm:$0xff]
        %v2795 = vld [vmem:[%s2756 + $0x130] sm:$0xff]
        %v2796 = vld [vmem:[%s2756 + $0x138] sm:$0xff]
        %v2797 = vld [vmem:[%s2756 + $0x140] sm:$0x3]
        %v2798 = vld [vmem:[%s2756 + $0x148] sm:$0x3]
        %v2800 = vsel %vm2642, %v2797, 0
        %v2803 = vsel %vm2642, %v2798, 0
        %2805 = vmatprep.subr.mxu0 %v2758
        %2806 = vmatpush1.msra.mxu0 %v2757
        %2807 = vmatprep.subr.mxu0 %v2760
        %2808 = vmatpush1.msra.mxu0 %v2759
        %2809 = vmatprep.subr.mxu0 %v2762
        %2810 = vmatpush1.msra.mxu0 %v2761
        %2811 = vmatprep.subr.mxu0 %v2764
        %2812 = vmatpush1.msra.mxu0 %v2763
        %2813 = vmatprep.subr.mxu0 %v2766
        %2814 = vmatpush1.msra.mxu0 %v2765
        %2815 = vmatprep.subr.mxu0 %v2768
        %2816 = vmatpush1.msra.mxu0 %v2767
        %2817 = vmatprep.subr.mxu0 %v2770
        %2818 = vmatpush1.msra.mxu0 %v2769
        %2819 = vmatprep.subr.mxu0 %v2772
        %2820 = vmatpush1.msra.mxu0 %v2771
        %2821 = vmatprep.subr.mxu0 %v2774
        %2822 = vmatpush1.msra.mxu0 %v2773
        %2823 = vmatprep.subr.mxu0 %v2776
        %2824 = vmatpush1.msra.mxu0 %v2775
        %2825 = vmatprep.subr.mxu0 %v2778
        %2826 = vmatpush1.msra.mxu0 %v2777
        %2827 = vmatprep.subr.mxu0 %v2780
        %2828 = vmatpush1.msra.mxu0 %v2779
        %2829 = vmatprep.subr.mxu0 %v2782
        %2830 = vmatpush1.msra.mxu0 %v2781
        %2831 = vmatprep.subr.mxu0 %v2784
        %2832 = vmatpush1.msra.mxu0 %v2783
        %2833 = vmatprep.subr.mxu0 %v2786
        %2834 = vmatpush1.msra.mxu0 %v2785
        %2835 = vmatprep.subr.mxu0 %v2788
        %2836 = vmatpush1.msra.mxu0 %v2787
        %2837 = vmatprep.subr.mxu0 %v2790
        %2838 = vmatpush1.msra.mxu0 %v2789
        %2839 = vmatprep.subr.mxu0 %v2792
        %2840 = vmatpush1.msra.mxu0 %v2791
        %2841 = vmatprep.subr.mxu0 %v2794
        %2842 = vmatpush1.msra.mxu0 %v2793
        %2843 = vmatprep.subr.mxu0 %v2796
        %2844 = vmatpush1.msra.mxu0 %v2795
        %2845 = vmatprep.subr.mxu0 %v2803
        %2846 = vmatpush1.msra.mxu0 %v2800
        %2847 = vmatprep.subr.mxu0 0.0
        %2848 = vmatpush1.msra.mxu0 0.0
        %2849 = vmatprep.subr.mxu0 0.0
        %2850 = vmatpush1.msra.mxu0 0.0
        %2851 = vmatprep.subr.mxu0 0.0
        %2852 = vmatpush1.msra.mxu0 0.0
        %2853 = vmatprep.subr.mxu0 0.0
        %2854 = vmatpush1.msra.mxu0 0.0
        %2855 = vmatprep.subr.mxu0 0.0
        %2856 = vmatpush1.msra.mxu0 0.0
        %2857 = vmatprep.subr.mxu0 0.0
        %2858 = vmatpush1.msra.mxu0 0.0
        %2859 = vmatprep.subr.mxu0 0.0
        %2860 = vmatpush1.msra.mxu0 0.0
        %2861 = vmatprep.subr.mxu0 0.0
        %2862 = vmatpush1.msra.mxu0 0.0
        %2863 = vmatprep.subr.mxu0 0.0
        %2864 = vmatpush1.msra.mxu0 0.0
        %2865 = vmatprep.subr.mxu0 0.0
        %2866 = vmatpush1.msra.mxu0 0.0
        %2867 = vmatprep.subr.mxu0 0.0
        %2868 = vmatpush1.msra.mxu0 0.0
        %2869 = vmatprep.mubr.f32.mxu0 %v2619
        %2870 = vmatmul.mubr.f32.gmra.mrb[0].mxu0 %v2471
        %v2871 = vpop.f32.mrb[0].mxu0
        %v2872 = vpop.f32.mrb[0].mxu0
        %2873 = vmatprep.mubr.f32.mxu0 %v2622
        %2874 = vmatmul.mubr.f32.gmra.mrb[0].mxu0 %v2473
        %v2875 = vpop.f32.mrb[0].mxu0
        %v2876 = vadd.f32 0.0, %v2875
        %v2877 = vpop.f32.mrb[0].mxu0
        %v2878 = vadd.f32 0.0, %v2877
        %2879 = vmatprep.mubr.f32.mxu0 %v2625
        %2880 = vmatmul.mubr.f32.gmra.mrb[0].mxu0 %v2475
        %v2881 = vpop.f32.mrb[0].mxu0
        %v2882 = vadd.f32 0.0, %v2881
        %v2883 = vpop.f32.mrb[0].mxu0
        %v2884 = vadd.f32 0.0, %v2883
        %2885 = vmatprep.mubr.f32.mxu0 %v2628
        %2886 = vmatmul.mubr.f32.gmra.mrb[0].mxu0 %v2477
        %v2887 = vpop.f32.mrb[0].mxu0
        %v2888 = vadd.f32 0.0, %v2887
        %v2889 = vpop.f32.mrb[0].mxu0
        %v2890 = vadd.f32 0.0, %v2889
        %2891 = vmatprep.mubr.f32.mxu0 %v2631
        %2892 = vmatmul.mubr.f32.gmra.mrb[0].mxu0 %v2479
        %v2893 = vpop.f32.mrb[0].mxu0
        %v2894 = vadd.f32 0.0, %v2893
        %v2895 = vpop.f32.mrb[0].mxu0
        %v2896 = vadd.f32 0.0, %v2895
        %2897 = vmatprep.mubr.f32.mxu0 %v2634
        %2898 = vmatmul.mubr.f32.gmra.mrb[0].mxu0 %v2481
        %v2899 = vpop.f32.mrb[0].mxu0
        %v2900 = vadd.f32 0.0, %v2899
        %v2901 = vpop.f32.mrb[0].mxu0
        %v2902 = vadd.f32 0.0, %v2901
        %2903 = vmatprep.mubr.f32.mxu0 %v2637
        %2904 = vmatmul.mubr.f32.gmra.mrb[0].mxu0 %v2483
        %v2905 = vpop.f32.mrb[0].mxu0
        %v2906 = vpop.f32.mrb[0].mxu0
        %2907 = vmatprep.mubr.f32.mxu0 %v2640
        %2908 = vmatmul.mubr.f32.gmra.mrb[0].mxu0 %v2485
        %v2909 = vpop.f32.mrb[0].mxu0
        %v2910 = vpop.f32.mrb[0].mxu0
        %2911 = vdwg.mxu0
        %s2912 = scalar_lea.vmem %s3, 672
        %v2913 = vld [vmem:[%s2912] sm:$0xff]
        %v2914 = vld [vmem:[%s2912 + $0x8] sm:$0xff]
        %v2915 = vld [vmem:[%s2912 + $0x10] sm:$0xff]
        %v2916 = vld [vmem:[%s2912 + $0x18] sm:$0xff]
        %v2917 = vld [vmem:[%s2912 + $0x20] sm:$0xff]
        %v2918 = vld [vmem:[%s2912 + $0x28] sm:$0xff]
        %v2919 = vld [vmem:[%s2912 + $0x30] sm:$0xff]
        %v2920 = vld [vmem:[%s2912 + $0x38] sm:$0xff]
        %v2921 = vld [vmem:[%s2912 + $0x40] sm:$0xff]
        %v2922 = vld [vmem:[%s2912 + $0x48] sm:$0xff]
        %v2923 = vld [vmem:[%s2912 + $0x50] sm:$0xff]
        %v2924 = vld [vmem:[%s2912 + $0x58] sm:$0xff]
        %v2925 = vld [vmem:[%s2912 + $0x60] sm:$0xff]
        %v2926 = vld [vmem:[%s2912 + $0x68] sm:$0xff]
        %v2927 = vld [vmem:[%s2912 + $0x70] sm:$0xff]
        %v2928 = vld [vmem:[%s2912 + $0x78] sm:$0xff]
        %v2929 = vld [vmem:[%s2912 + $0x80] sm:$0xff]
        %v2930 = vld [vmem:[%s2912 + $0x88] sm:$0xff]
        %v2931 = vld [vmem:[%s2912 + $0x90] sm:$0xff]
        %v2932 = vld [vmem:[%s2912 + $0x98] sm:$0xff]
        %v2933 = vld [vmem:[%s2912 + $0xa0] sm:$0xff]
        %v2934 = vld [vmem:[%s2912 + $0xa8] sm:$0xff]
        %v2935 = vld [vmem:[%s2912 + $0xb0] sm:$0xff]
        %v2936 = vld [vmem:[%s2912 + $0xb8] sm:$0xff]
        %v2937 = vld [vmem:[%s2912 + $0xc0] sm:$0xff]
        %v2938 = vld [vmem:[%s2912 + $0xc8] sm:$0xff]
        %v2939 = vld [vmem:[%s2912 + $0xd0] sm:$0xff]
        %v2940 = vld [vmem:[%s2912 + $0xd8] sm:$0xff]
        %v2941 = vld [vmem:[%s2912 + $0xe0] sm:$0xff]
        %v2942 = vld [vmem:[%s2912 + $0xe8] sm:$0xff]
        %v2943 = vld [vmem:[%s2912 + $0xf0] sm:$0xff]
        %v2944 = vld [vmem:[%s2912 + $0xf8] sm:$0xff]
        %v2945 = vld [vmem:[%s2912 + $0x100] sm:$0xff]
        %v2946 = vld [vmem:[%s2912 + $0x108] sm:$0xff]
        %v2947 = vld [vmem:[%s2912 + $0x110] sm:$0xff]
        %v2948 = vld [vmem:[%s2912 + $0x118] sm:$0xff]
        %v2949 = vld [vmem:[%s2912 + $0x120] sm:$0xff]
        %v2950 = vld [vmem:[%s2912 + $0x128] sm:$0xff]
        %v2951 = vld [vmem:[%s2912 + $0x130] sm:$0xff]
        %v2952 = vld [vmem:[%s2912 + $0x138] sm:$0xff]
        %v2953 = vld [vmem:[%s2912 + $0x140] sm:$0x3]
        %v2954 = vld [vmem:[%s2912 + $0x148] sm:$0x3]
        %v2956 = vsel %vm2642, %v2953, 0
        %v2959 = vsel %vm2642, %v2954, 0
        %2961 = vmatprep.subr.mxu0 %v2914
        %2962 = vmatpush1.msra.mxu0 %v2913
        %2963 = vmatprep.subr.mxu0 %v2916
        %2964 = vmatpush1.msra.mxu0 %v2915
        %2965 = vmatprep.subr.mxu0 %v2918
        %2966 = vmatpush1.msra.mxu0 %v2917
        %2967 = vmatprep.subr.mxu0 %v2920
        %2968 = vmatpush1.msra.mxu0 %v2919
        %2969 = vmatprep.subr.mxu0 %v2922
        %2970 = vmatpush1.msra.mxu0 %v2921
        %2971 = vmatprep.subr.mxu0 %v2924
        %2972 = vmatpush1.msra.mxu0 %v2923
        %2973 = vmatprep.subr.mxu0 %v2926
        %2974 = vmatpush1.msra.mxu0 %v2925
        %2975 = vmatprep.subr.mxu0 %v2928
        %2976 = vmatpush1.msra.mxu0 %v2927
        %2977 = vmatprep.subr.mxu0 %v2930
        %2978 = vmatpush1.msra.mxu0 %v2929
        %2979 = vmatprep.subr.mxu0 %v2932
        %2980 = vmatpush1.msra.mxu0 %v2931
        %2981 = vmatprep.subr.mxu0 %v2934
        %2982 = vmatpush1.msra.mxu0 %v2933
        %2983 = vmatprep.subr.mxu0 %v2936
        %2984 = vmatpush1.msra.mxu0 %v2935
        %2985 = vmatprep.subr.mxu0 %v2938
        %2986 = vmatpush1.msra.mxu0 %v2937
        %2987 = vmatprep.subr.mxu0 %v2940
        %2988 = vmatpush1.msra.mxu0 %v2939
        %2989 = vmatprep.subr.mxu0 %v2942
        %2990 = vmatpush1.msra.mxu0 %v2941
        %2991 = vmatprep.subr.mxu0 %v2944
        %2992 = vmatpush1.msra.mxu0 %v2943
        %2993 = vmatprep.subr.mxu0 %v2946
        %2994 = vmatpush1.msra.mxu0 %v2945
        %2995 = vmatprep.subr.mxu0 %v2948
        %2996 = vmatpush1.msra.mxu0 %v2947
        %2997 = vmatprep.subr.mxu0 %v2950
        %2998 = vmatpush1.msra.mxu0 %v2949
        %2999 = vmatprep.subr.mxu0 %v2952
        %3000 = vmatpush1.msra.mxu0 %v2951
        %3001 = vmatprep.subr.mxu0 %v2959
        %3002 = vmatpush1.msra.mxu0 %v2956
        %3003 = vmatprep.subr.mxu0 0.0
        %3004 = vmatpush1.msra.mxu0 0.0
        %3005 = vmatprep.subr.mxu0 0.0
        %3006 = vmatpush1.msra.mxu0 0.0
        %3007 = vmatprep.subr.mxu0 0.0
        %3008 = vmatpush1.msra.mxu0 0.0
        %3009 = vmatprep.subr.mxu0 0.0
        %3010 = vmatpush1.msra.mxu0 0.0
        %3011 = vmatprep.subr.mxu0 0.0
        %3012 = vmatpush1.msra.mxu0 0.0
        %3013 = vmatprep.subr.mxu0 0.0
        %3014 = vmatpush1.msra.mxu0 0.0
        %3015 = vmatprep.subr.mxu0 0.0
        %3016 = vmatpush1.msra.mxu0 0.0
        %3017 = vmatprep.subr.mxu0 0.0
        %3018 = vmatpush1.msra.mxu0 0.0
        %3019 = vmatprep.subr.mxu0 0.0
        %3020 = vmatpush1.msra.mxu0 0.0
        %3021 = vmatprep.subr.mxu0 0.0
        %3022 = vmatpush1.msra.mxu0 0.0
        %3023 = vmatprep.subr.mxu0 0.0
        %3024 = vmatpush1.msra.mxu0 0.0
        %3025 = vmatprep.mubr.f32.mxu0 %v2619
        %3026 = vmatmul.mubr.f32.gmra.mrb[0].mxu0 %v2471
        %v3027 = vpop.f32.mrb[0].mxu0
        %v3028 = vpop.f32.mrb[0].mxu0
        %3029 = vmatprep.mubr.f32.mxu0 %v2622
        %3030 = vmatmul.mubr.f32.gmra.mrb[0].mxu0 %v2473
        %v3031 = vpop.f32.mrb[0].mxu0
        %v3032 = vadd.f32 0.0, %v3031
        %v3033 = vpop.f32.mrb[0].mxu0
        %v3034 = vadd.f32 0.0, %v3033
        %3035 = vmatprep.mubr.f32.mxu0 %v2625
        %3036 = vmatmul.mubr.f32.gmra.mrb[0].mxu0 %v2475
        %v3037 = vpop.f32.mrb[0].mxu0
        %v3038 = vadd.f32 0.0, %v3037
        %v3039 = vpop.f32.mrb[0].mxu0
        %v3040 = vadd.f32 0.0, %v3039
        %3041 = vmatprep.mubr.f32.mxu0 %v2628
        %3042 = vmatmul.mubr.f32.gmra.mrb[0].mxu0 %v2477
        %v3043 = vpop.f32.mrb[0].mxu0
        %v3044 = vadd.f32 0.0, %v3043
        %v3045 = vpop.f32.mrb[0].mxu0
        %v3046 = vadd.f32 0.0, %v3045
        %3047 = vmatprep.mubr.f32.mxu0 %v2631
        %3048 = vmatmul.mubr.f32.gmra.mrb[0].mxu0 %v2479
        %v3049 = vpop.f32.mrb[0].mxu0
        %v3050 = vadd.f32 0.0, %v3049
        %v3051 = vpop.f32.mrb[0].mxu0
        %v3052 = vadd.f32 0.0, %v3051
        %3053 = vmatprep.mubr.f32.mxu0 %v2634
        %3054 = vmatmul.mubr.f32.gmra.mrb[0].mxu0 %v2481
        %v3055 = vpop.f32.mrb[0].mxu0
        %v3056 = vadd.f32 0.0, %v3055
        %v3057 = vpop.f32.mrb[0].mxu0
        %v3058 = vadd.f32 0.0, %v3057
        %3059 = vmatprep.mubr.f32.mxu0 %v2637
        %3060 = vmatmul.mubr.f32.gmra.mrb[0].mxu0 %v2483
        %v3061 = vpop.f32.mrb[0].mxu0
        %v3062 = vpop.f32.mrb[0].mxu0
        %3063 = vmatprep.mubr.f32.mxu0 %v2640
        %3064 = vmatmul.mubr.f32.gmra.mrb[0].mxu0 %v2485
        %v3065 = vpop.f32.mrb[0].mxu0
        %v3066 = vpop.f32.mrb[0].mxu0
        %3067 = vdwg.mxu0
        %s3068 = scalar_lea.vmem %s3, 1008
        %v3069 = vld [vmem:[%s3068] sm:$0xff]
        %v3070 = vld [vmem:[%s3068 + $0x8] sm:$0xff]
        %v3071 = vld [vmem:[%s3068 + $0x10] sm:$0xff]
        %v3072 = vld [vmem:[%s3068 + $0x18] sm:$0xff]
        %v3073 = vld [vmem:[%s3068 + $0x20] sm:$0xff]
        %v3074 = vld [vmem:[%s3068 + $0x28] sm:$0xff]
        %v3075 = vld [vmem:[%s3068 + $0x30] sm:$0xff]
        %v3076 = vld [vmem:[%s3068 + $0x38] sm:$0xff]
        %v3077 = vld [vmem:[%s3068 + $0x40] sm:$0xff]
        %v3078 = vld [vmem:[%s3068 + $0x48] sm:$0xff]
        %v3079 = vld [vmem:[%s3068 + $0x50] sm:$0xff]
        %v3080 = vld [vmem:[%s3068 + $0x58] sm:$0xff]
        %v3081 = vld [vmem:[%s3068 + $0x60] sm:$0xff]
        %v3082 = vld [vmem:[%s3068 + $0x68] sm:$0xff]
        %v3083 = vld [vmem:[%s3068 + $0x70] sm:$0xff]
        %v3084 = vld [vmem:[%s3068 + $0x78] sm:$0xff]
        %v3085 = vld [vmem:[%s3068 + $0x80] sm:$0xff]
        %v3086 = vld [vmem:[%s3068 + $0x88] sm:$0xff]
        %v3087 = vld [vmem:[%s3068 + $0x90] sm:$0xff]
        %v3088 = vld [vmem:[%s3068 + $0x98] sm:$0xff]
        %v3089 = vld [vmem:[%s3068 + $0xa0] sm:$0xff]
        %v3090 = vld [vmem:[%s3068 + $0xa8] sm:$0xff]
        %v3091 = vld [vmem:[%s3068 + $0xb0] sm:$0xff]
        %v3092 = vld [vmem:[%s3068 + $0xb8] sm:$0xff]
        %v3093 = vld [vmem:[%s3068 + $0xc0] sm:$0xff]
        %v3094 = vld [vmem:[%s3068 + $0xc8] sm:$0xff]
        %v3095 = vld [vmem:[%s3068 + $0xd0] sm:$0xff]
        %v3096 = vld [vmem:[%s3068 + $0xd8] sm:$0xff]
        %v3097 = vld [vmem:[%s3068 + $0xe0] sm:$0xff]
        %v3098 = vld [vmem:[%s3068 + $0xe8] sm:$0xff]
        %v3099 = vld [vmem:[%s3068 + $0xf0] sm:$0xff]
        %v3100 = vld [vmem:[%s3068 + $0xf8] sm:$0xff]
        %v3101 = vld [vmem:[%s3068 + $0x100] sm:$0xff]
        %v3102 = vld [vmem:[%s3068 + $0x108] sm:$0xff]
        %v3103 = vld [vmem:[%s3068 + $0x110] sm:$0xff]
        %v3104 = vld [vmem:[%s3068 + $0x118] sm:$0xff]
        %v3105 = vld [vmem:[%s3068 + $0x120] sm:$0xff]
        %v3106 = vld [vmem:[%s3068 + $0x128] sm:$0xff]
        %v3107 = vld [vmem:[%s3068 + $0x130] sm:$0xff]
        %v3108 = vld [vmem:[%s3068 + $0x138] sm:$0xff]
        %v3109 = vld [vmem:[%s3068 + $0x140] sm:$0x3]
        %v3110 = vld [vmem:[%s3068 + $0x148] sm:$0x3]
        %v3112 = vsel %vm2642, %v3109, 0
        %v3115 = vsel %vm2642, %v3110, 0
        %3117 = vmatprep.subr.mxu0 %v3070
        %3118 = vmatpush1.msra.mxu0 %v3069
        %3119 = vmatprep.subr.mxu0 %v3072
        %3120 = vmatpush1.msra.mxu0 %v3071
        %3121 = vmatprep.subr.mxu0 %v3074
        %3122 = vmatpush1.msra.mxu0 %v3073
        %3123 = vmatprep.subr.mxu0 %v3076
        %3124 = vmatpush1.msra.mxu0 %v3075
        %3125 = vmatprep.subr.mxu0 %v3078
        %3126 = vmatpush1.msra.mxu0 %v3077
        %3127 = vmatprep.subr.mxu0 %v3080
        %3128 = vmatpush1.msra.mxu0 %v3079
        %3129 = vmatprep.subr.mxu0 %v3082
        %3130 = vmatpush1.msra.mxu0 %v3081
        %3131 = vmatprep.subr.mxu0 %v3084
        %3132 = vmatpush1.msra.mxu0 %v3083
        %3133 = vmatprep.subr.mxu0 %v3086
        %3134 = vmatpush1.msra.mxu0 %v3085
        %3135 = vmatprep.subr.mxu0 %v3088
        %3136 = vmatpush1.msra.mxu0 %v3087
        %3137 = vmatprep.subr.mxu0 %v3090
        %3138 = vmatpush1.msra.mxu0 %v3089
        %3139 = vmatprep.subr.mxu0 %v3092
        %3140 = vmatpush1.msra.mxu0 %v3091
        %3141 = vmatprep.subr.mxu0 %v3094
        %3142 = vmatpush1.msra.mxu0 %v3093
        %3143 = vmatprep.subr.mxu0 %v3096
        %3144 = vmatpush1.msra.mxu0 %v3095
        %3145 = vmatprep.subr.mxu0 %v3098
        %3146 = vmatpush1.msra.mxu0 %v3097
        %3147 = vmatprep.subr.mxu0 %v3100
        %3148 = vmatpush1.msra.mxu0 %v3099
        %3149 = vmatprep.subr.mxu0 %v3102
        %3150 = vmatpush1.msra.mxu0 %v3101
        %3151 = vmatprep.subr.mxu0 %v3104
        %3152 = vmatpush1.msra.mxu0 %v3103
        %3153 = vmatprep.subr.mxu0 %v3106
        %3154 = vmatpush1.msra.mxu0 %v3105
        %3155 = vmatprep.subr.mxu0 %v3108
        %3156 = vmatpush1.msra.mxu0 %v3107
        %3157 = vmatprep.subr.mxu0 %v3115
        %3158 = vmatpush1.msra.mxu0 %v3112
        %3159 = vmatprep.subr.mxu0 0.0
        %3160 = vmatpush1.msra.mxu0 0.0
        %3161 = vmatprep.subr.mxu0 0.0
        %3162 = vmatpush1.msra.mxu0 0.0
        %3163 = vmatprep.subr.mxu0 0.0
        %3164 = vmatpush1.msra.mxu0 0.0
        %3165 = vmatprep.subr.mxu0 0.0
        %3166 = vmatpush1.msra.mxu0 0.0
        %3167 = vmatprep.subr.mxu0 0.0
        %3168 = vmatpush1.msra.mxu0 0.0
        %3169 = vmatprep.subr.mxu0 0.0
        %3170 = vmatpush1.msra.mxu0 0.0
        %3171 = vmatprep.subr.mxu0 0.0
        %3172 = vmatpush1.msra.mxu0 0.0
        %3173 = vmatprep.subr.mxu0 0.0
        %3174 = vmatpush1.msra.mxu0 0.0
        %3175 = vmatprep.subr.mxu0 0.0
        %3176 = vmatpush1.msra.mxu0 0.0
        %3177 = vmatprep.subr.mxu0 0.0
        %3178 = vmatpush1.msra.mxu0 0.0
        %3179 = vmatprep.subr.mxu0 0.0
        %3180 = vmatpush1.msra.mxu0 0.0
        %3181 = vmatprep.mubr.f32.mxu0 %v2619
        %3182 = vmatmul.mubr.f32.gmra.mrb[0].mxu0 %v2471
        %v3183 = vpop.f32.mrb[0].mxu0
        %v3184 = vpop.f32.mrb[0].mxu0
        %3185 = vmatprep.mubr.f32.mxu0 %v2622
        %3186 = vmatmul.mubr.f32.gmra.mrb[0].mxu0 %v2473
        %v3187 = vpop.f32.mrb[0].mxu0
        %v3188 = vpop.f32.mrb[0].mxu0
        %3189 = vmatprep.mubr.f32.mxu0 %v2625
        %3190 = vmatmul.mubr.f32.gmra.mrb[0].mxu0 %v2475
        %v3191 = vpop.f32.mrb[0].mxu0
        %v3192 = vadd.f32 0.0, %v3191
        %v3193 = vpop.f32.mrb[0].mxu0
        %v3194 = vadd.f32 0.0, %v3193
        %3195 = vmatprep.mubr.f32.mxu0 %v2628
        %3196 = vmatmul.mubr.f32.gmra.mrb[0].mxu0 %v2477
        %v3197 = vpop.f32.mrb[0].mxu0
        %v3198 = vadd.f32 0.0, %v3197
        %v3199 = vpop.f32.mrb[0].mxu0
        %v3200 = vadd.f32 0.0, %v3199
        %3201 = vmatprep.mubr.f32.mxu0 %v2631
        %3202 = vmatmul.mubr.f32.gmra.mrb[0].mxu0 %v2479
        %v3203 = vpop.f32.mrb[0].mxu0
        %v3204 = vadd.f32 0.0, %v3203
        %v3205 = vpop.f32.mrb[0].mxu0
        %v3206 = vadd.f32 0.0, %v3205
        %3207 = vmatprep.mubr.f32.mxu0 %v2634
        %3208 = vmatmul.mubr.f32.gmra.mrb[0].mxu0 %v2481
        %v3209 = vpop.f32.mrb[0].mxu0
        %v3210 = vadd.f32 0.0, %v3209
        %v3211 = vpop.f32.mrb[0].mxu0
        %v3212 = vadd.f32 0.0, %v3211
        %3213 = vmatprep.mubr.f32.mxu0 %v2637
        %3214 = vmatmul.mubr.f32.gmra.mrb[0].mxu0 %v2483
        %v3215 = vpop.f32.mrb[0].mxu0
        %v3216 = vadd.f32 0.0, %v3215
        %v3217 = vpop.f32.mrb[0].mxu0
        %v3218 = vadd.f32 0.0, %v3217
        %3219 = vmatprep.mubr.f32.mxu0 %v2640
        %3220 = vmatmul.mubr.f32.gmra.mrb[0].mxu0 %v2485
        %v3221 = vpop.f32.mrb[0].mxu0
        %v3222 = vpop.f32.mrb[0].mxu0
        %3223 = vdwg.mxu0
        %s3224 = scalar_lea.vmem %s3, 1344
        %v3225 = vld [vmem:[%s3224] sm:$0xff]
        %v3226 = vld [vmem:[%s3224 + $0x8] sm:$0xff]
        %v3227 = vld [vmem:[%s3224 + $0x10] sm:$0xff]
        %v3228 = vld [vmem:[%s3224 + $0x18] sm:$0xff]
        %v3229 = vld [vmem:[%s3224 + $0x20] sm:$0xff]
        %v3230 = vld [vmem:[%s3224 + $0x28] sm:$0xff]
        %v3231 = vld [vmem:[%s3224 + $0x30] sm:$0xff]
        %v3232 = vld [vmem:[%s3224 + $0x38] sm:$0xff]
        %v3233 = vld [vmem:[%s3224 + $0x40] sm:$0xff]
        %v3234 = vld [vmem:[%s3224 + $0x48] sm:$0xff]
        %v3235 = vld [vmem:[%s3224 + $0x50] sm:$0xff]
        %v3236 = vld [vmem:[%s3224 + $0x58] sm:$0xff]
        %v3237 = vld [vmem:[%s3224 + $0x60] sm:$0xff]
        %v3238 = vld [vmem:[%s3224 + $0x68] sm:$0xff]
        %v3239 = vld [vmem:[%s3224 + $0x70] sm:$0xff]
        %v3240 = vld [vmem:[%s3224 + $0x78] sm:$0xff]
        %v3241 = vld [vmem:[%s3224 + $0x80] sm:$0xff]
        %v3242 = vld [vmem:[%s3224 + $0x88] sm:$0xff]
        %v3243 = vld [vmem:[%s3224 + $0x90] sm:$0xff]
        %v3244 = vld [vmem:[%s3224 + $0x98] sm:$0xff]
        %v3245 = vld [vmem:[%s3224 + $0xa0] sm:$0xff]
        %v3246 = vld [vmem:[%s3224 + $0xa8] sm:$0xff]
        %v3247 = vld [vmem:[%s3224 + $0xb0] sm:$0xff]
        %v3248 = vld [vmem:[%s3224 + $0xb8] sm:$0xff]
        %v3249 = vld [vmem:[%s3224 + $0xc0] sm:$0xff]
        %v3250 = vld [vmem:[%s3224 + $0xc8] sm:$0xff]
        %v3251 = vld [vmem:[%s3224 + $0xd0] sm:$0xff]
        %v3252 = vld [vmem:[%s3224 + $0xd8] sm:$0xff]
        %v3253 = vld [vmem:[%s3224 + $0xe0] sm:$0xff]
        %v3254 = vld [vmem:[%s3224 + $0xe8] sm:$0xff]
        %v3255 = vld [vmem:[%s3224 + $0xf0] sm:$0xff]
        %v3256 = vld [vmem:[%s3224 + $0xf8] sm:$0xff]
        %v3257 = vld [vmem:[%s3224 + $0x100] sm:$0xff]
        %v3258 = vld [vmem:[%s3224 + $0x108] sm:$0xff]
        %v3259 = vld [vmem:[%s3224 + $0x110] sm:$0xff]
        %v3260 = vld [vmem:[%s3224 + $0x118] sm:$0xff]
        %v3261 = vld [vmem:[%s3224 + $0x120] sm:$0xff]
        %v3262 = vld [vmem:[%s3224 + $0x128] sm:$0xff]
        %v3263 = vld [vmem:[%s3224 + $0x130] sm:$0xff]
        %v3264 = vld [vmem:[%s3224 + $0x138] sm:$0xff]
        %v3265 = vld [vmem:[%s3224 + $0x140] sm:$0x3]
        %v3266 = vld [vmem:[%s3224 + $0x148] sm:$0x3]
        %v3268 = vsel %vm2642, %v3265, 0
        %v3271 = vsel %vm2642, %v3266, 0
        %3273 = vmatprep.subr.mxu0 %v3226
        %3274 = vmatpush1.msra.mxu0 %v3225
        %3275 = vmatprep.subr.mxu0 %v3228
        %3276 = vmatpush1.msra.mxu0 %v3227
        %3277 = vmatprep.subr.mxu0 %v3230
        %3278 = vmatpush1.msra.mxu0 %v3229
        %3279 = vmatprep.subr.mxu0 %v3232
        %3280 = vmatpush1.msra.mxu0 %v3231
        %3281 = vmatprep.subr.mxu0 %v3234
        %3282 = vmatpush1.msra.mxu0 %v3233
        %3283 = vmatprep.subr.mxu0 %v3236
        %3284 = vmatpush1.msra.mxu0 %v3235
        %3285 = vmatprep.subr.mxu0 %v3238
        %3286 = vmatpush1.msra.mxu0 %v3237
        %3287 = vmatprep.subr.mxu0 %v3240
        %3288 = vmatpush1.msra.mxu0 %v3239
        %3289 = vmatprep.subr.mxu0 %v3242
        %3290 = vmatpush1.msra.mxu0 %v3241
        %3291 = vmatprep.subr.mxu0 %v3244
        %3292 = vmatpush1.msra.mxu0 %v3243
        %3293 = vmatprep.subr.mxu0 %v3246
        %3294 = vmatpush1.msra.mxu0 %v3245
        %3295 = vmatprep.subr.mxu0 %v3248
        %3296 = vmatpush1.msra.mxu0 %v3247
        %3297 = vmatprep.subr.mxu0 %v3250
        %3298 = vmatpush1.msra.mxu0 %v3249
        %3299 = vmatprep.subr.mxu0 %v3252
        %3300 = vmatpush1.msra.mxu0 %v3251
        %3301 = vmatprep.subr.mxu0 %v3254
        %3302 = vmatpush1.msra.mxu0 %v3253
        %3303 = vmatprep.subr.mxu0 %v3256
        %3304 = vmatpush1.msra.mxu0 %v3255
        %3305 = vmatprep.subr.mxu0 %v3258
        %3306 = vmatpush1.msra.mxu0 %v3257
        %3307 = vmatprep.subr.mxu0 %v3260
        %3308 = vmatpush1.msra.mxu0 %v3259
        %3309 = vmatprep.subr.mxu0 %v3262
        %3310 = vmatpush1.msra.mxu0 %v3261
        %3311 = vmatprep.subr.mxu0 %v3264
        %3312 = vmatpush1.msra.mxu0 %v3263
        %3313 = vmatprep.subr.mxu0 %v3271
        %3314 = vmatpush1.msra.mxu0 %v3268
        %3315 = vmatprep.subr.mxu0 0.0
        %3316 = vmatpush1.msra.mxu0 0.0
        %3317 = vmatprep.subr.mxu0 0.0
        %3318 = vmatpush1.msra.mxu0 0.0
        %3319 = vmatprep.subr.mxu0 0.0
        %3320 = vmatpush1.msra.mxu0 0.0
        %3321 = vmatprep.subr.mxu0 0.0
        %3322 = vmatpush1.msra.mxu0 0.0
        %3323 = vmatprep.subr.mxu0 0.0
        %3324 = vmatpush1.msra.mxu0 0.0
        %3325 = vmatprep.subr.mxu0 0.0
        %3326 = vmatpush1.msra.mxu0 0.0
        %3327 = vmatprep.subr.mxu0 0.0
        %3328 = vmatpush1.msra.mxu0 0.0
        %3329 = vmatprep.subr.mxu0 0.0
        %3330 = vmatpush1.msra.mxu0 0.0
        %3331 = vmatprep.subr.mxu0 0.0
        %3332 = vmatpush1.msra.mxu0 0.0
        %3333 = vmatprep.subr.mxu0 0.0
        %3334 = vmatpush1.msra.mxu0 0.0
        %3335 = vmatprep.subr.mxu0 0.0
        %3336 = vmatpush1.msra.mxu0 0.0
        %3337 = vmatprep.mubr.f32.mxu0 %v2619
        %3338 = vmatmul.mubr.f32.gmra.mrb[0].mxu0 %v2471
        %v3339 = vpop.f32.mrb[0].mxu0
        %v3340 = vpop.f32.mrb[0].mxu0
        %3341 = vmatprep.mubr.f32.mxu0 %v2622
        %3342 = vmatmul.mubr.f32.gmra.mrb[0].mxu0 %v2473
        %v3343 = vpop.f32.mrb[0].mxu0
        %v3344 = vpop.f32.mrb[0].mxu0
        %3345 = vmatprep.mubr.f32.mxu0 %v2625
        %3346 = vmatmul.mubr.f32.gmra.mrb[0].mxu0 %v2475
        %v3347 = vpop.f32.mrb[0].mxu0
        %v3348 = vadd.f32 0.0, %v3347
        %v3349 = vpop.f32.mrb[0].mxu0
        %v3350 = vadd.f32 0.0, %v3349
        %3351 = vmatprep.mubr.f32.mxu0 %v2628
        %3352 = vmatmul.mubr.f32.gmra.mrb[0].mxu0 %v2477
        %v3353 = vpop.f32.mrb[0].mxu0
        %v3354 = vadd.f32 0.0, %v3353
        %v3355 = vpop.f32.mrb[0].mxu0
        %v3356 = vadd.f32 0.0, %v3355
        %3357 = vmatprep.mubr.f32.mxu0 %v2631
        %3358 = vmatmul.mubr.f32.gmra.mrb[0].mxu0 %v2479
        %v3359 = vpop.f32.mrb[0].mxu0
        %v3360 = vadd.f32 0.0, %v3359
        %v3361 = vpop.f32.mrb[0].mxu0
        %v3362 = vadd.f32 0.0, %v3361
        %3363 = vmatprep.mubr.f32.mxu0 %v2634
        %3364 = vmatmul.mubr.f32.gmra.mrb[0].mxu0 %v2481
        %v3365 = vpop.f32.mrb[0].mxu0
        %v3366 = vadd.f32 0.0, %v3365
        %v3367 = vpop.f32.mrb[0].mxu0
        %v3368 = vadd.f32 0.0, %v3367
        %3369 = vmatprep.mubr.f32.mxu0 %v2637
        %3370 = vmatmul.mubr.f32.gmra.mrb[0].mxu0 %v2483
        %v3371 = vpop.f32.mrb[0].mxu0
        %v3372 = vadd.f32 0.0, %v3371
        %v3373 = vpop.f32.mrb[0].mxu0
        %v3374 = vadd.f32 0.0, %v3373
        %3375 = vmatprep.mubr.f32.mxu0 %v2640
        %3376 = vmatmul.mubr.f32.gmra.mrb[0].mxu0 %v2485
        %v3377 = vpop.f32.mrb[0].mxu0
        %v3378 = vpop.f32.mrb[0].mxu0
        %3379 = vdwg.mxu0
        %v3381 = vsel %vm2617, %v2560, 0
        %v3384 = vsel %vm2617, %v2562, 0
        %v3387 = vsel %vm2617, %v2564, 0
        %v3390 = vsel %vm2617, %v2566, 0
        %v3393 = vsel %vm2617, %v2568, 0
        %v3396 = vsel %vm2617, %v2570, 0
        %v3399 = vsel %vm2617, %v2572, 0
        %v3402 = vsel %vm2617, %v2574, 0
        %3404 = vmatprep.subr.mxu0 %v2576
        %3405 = vmatpush1.msra.mxu0 %v2575
        %3406 = vmatprep.subr.mxu0 %v2578
        %3407 = vmatpush1.msra.mxu0 %v2577
        %3408 = vmatprep.subr.mxu0 %v2580
        %3409 = vmatpush1.msra.mxu0 %v2579
        %3410 = vmatprep.subr.mxu0 %v2582
        %3411 = vmatpush1.msra.mxu0 %v2581
        %3412 = vmatprep.subr.mxu0 %v2584
        %3413 = vmatpush1.msra.mxu0 %v2583
        %3414 = vmatprep.subr.mxu0 %v2586
        %3415 = vmatpush1.msra.mxu0 %v2585
        %3416 = vmatprep.subr.mxu0 %v2588
        %3417 = vmatpush1.msra.mxu0 %v2587
        %3418 = vmatprep.subr.mxu0 %v2590
        %3419 = vmatpush1.msra.mxu0 %v2589
        %3420 = vmatprep.subr.mxu0 %v2592
        %3421 = vmatpush1.msra.mxu0 %v2591
        %3422 = vmatprep.subr.mxu0 %v2594
        %3423 = vmatpush1.msra.mxu0 %v2593
        %3424 = vmatprep.subr.mxu0 %v2596
        %3425 = vmatpush1.msra.mxu0 %v2595
        %3426 = vmatprep.subr.mxu0 %v2598
        %3427 = vmatpush1.msra.mxu0 %v2597
        %3428 = vmatprep.subr.mxu0 %v2600
        %3429 = vmatpush1.msra.mxu0 %v2599
        %3430 = vmatprep.subr.mxu0 %v2602
        %3431 = vmatpush1.msra.mxu0 %v2601
        %3432 = vmatprep.subr.mxu0 %v2604
        %3433 = vmatpush1.msra.mxu0 %v2603
        %3434 = vmatprep.subr.mxu0 %v2606
        %3435 = vmatpush1.msra.mxu0 %v2605
        %3436 = vmatprep.subr.mxu0 %v2608
        %3437 = vmatpush1.msra.mxu0 %v2607
        %3438 = vmatprep.subr.mxu0 %v2610
        %3439 = vmatpush1.msra.mxu0 %v2609
        %3440 = vmatprep.subr.mxu0 %v2612
        %3441 = vmatpush1.msra.mxu0 %v2611
        %3442 = vmatprep.subr.mxu0 %v2614
        %3443 = vmatpush1.msra.mxu0 %v2613
        %3444 = vmatprep.subr.mxu0 %v2647
        %3445 = vmatpush1.msra.mxu0 %v2644
        %3446 = vmatprep.subr.mxu0 0.0
        %3447 = vmatpush1.msra.mxu0 0.0
        %3448 = vmatprep.subr.mxu0 0.0
        %3449 = vmatpush1.msra.mxu0 0.0
        %3450 = vmatprep.subr.mxu0 0.0
        %3451 = vmatpush1.msra.mxu0 0.0
        %3452 = vmatprep.subr.mxu0 0.0
        %3453 = vmatpush1.msra.mxu0 0.0
        %3454 = vmatprep.subr.mxu0 0.0
        %3455 = vmatpush1.msra.mxu0 0.0
        %3456 = vmatprep.subr.mxu0 0.0
        %3457 = vmatpush1.msra.mxu0 0.0
        %3458 = vmatprep.subr.mxu0 0.0
        %3459 = vmatpush1.msra.mxu0 0.0
        %3460 = vmatprep.subr.mxu0 0.0
        %3461 = vmatpush1.msra.mxu0 0.0
        %3462 = vmatprep.subr.mxu0 0.0
        %3463 = vmatpush1.msra.mxu0 0.0
        %3464 = vmatprep.subr.mxu0 0.0
        %3465 = vmatpush1.msra.mxu0 0.0
        %3466 = vmatprep.subr.mxu0 0.0
        %3467 = vmatpush1.msra.mxu0 0.0
        %3468 = vmatprep.mubr.f32.mxu0 %v3381
        %3469 = vmatmul.mubr.f32.gmra.mrb[0].mxu0 %v2559
        %v3470 = vpop.f32.mrb[0].mxu0
        %v3471 = vadd.f32 0.0, %v3470
        %v3472 = vpop.f32.mrb[0].mxu0
        %v3473 = vadd.f32 0.0, %v3472
        %3474 = vmatprep.mubr.f32.mxu0 %v3384
        %3475 = vmatmul.mubr.f32.gmra.mrb[0].mxu0 %v2561
        %v3476 = vpop.f32.mrb[0].mxu0
        %v3477 = vadd.f32 0.0, %v3476
        %v3478 = vpop.f32.mrb[0].mxu0
        %v3479 = vadd.f32 0.0, %v3478
        %3480 = vmatprep.mubr.f32.mxu0 %v3387
        %3481 = vmatmul.mubr.f32.gmra.mrb[0].mxu0 %v2563
        %v3482 = vpop.f32.mrb[0].mxu0
        %v3483 = vadd.f32 0.0, %v3482
        %v3484 = vpop.f32.mrb[0].mxu0
        %v3485 = vadd.f32 0.0, %v3484
        %3486 = vmatprep.mubr.f32.mxu0 %v3390
        %3487 = vmatmul.mubr.f32.gmra.mrb[0].mxu0 %v2565
        %v3488 = vpop.f32.mrb[0].mxu0
        %v3489 = vadd.f32 0.0, %v3488
        %v3490 = vpop.f32.mrb[0].mxu0
        %v3491 = vadd.f32 0.0, %v3490
        %3492 = vmatprep.mubr.f32.mxu0 %v3393
        %3493 = vmatmul.mubr.f32.gmra.mrb[0].mxu0 %v2567
        %v3494 = vpop.f32.mrb[0].mxu0
        %v3495 = vadd.f32 0.0, %v3494
        %v3496 = vpop.f32.mrb[0].mxu0
        %v3497 = vadd.f32 0.0, %v3496
        %3498 = vmatprep.mubr.f32.mxu0 %v3396
        %3499 = vmatmul.mubr.f32.gmra.mrb[0].mxu0 %v2569
        %v3500 = vpop.f32.mrb[0].mxu0
        %v3501 = vpop.f32.mrb[0].mxu0
        %3502 = vmatprep.mubr.f32.mxu0 %v3399
        %3503 = vmatmul.mubr.f32.gmra.mrb[0].mxu0 %v2571
        %v3504 = vpop.f32.mrb[0].mxu0
        %v3505 = vpop.f32.mrb[0].mxu0
        %3506 = vmatprep.mubr.f32.mxu0 %v3402
        %3507 = vmatmul.mubr.f32.gmra.mrb[0].mxu0 %v2573
        %v3508 = vpop.f32.mrb[0].mxu0
        %v3509 = vpop.f32.mrb[0].mxu0
        %3510 = vdwg.mxu0
        %3511 = vmatprep.subr.mxu0 %v2758
        %3512 = vmatpush1.msra.mxu0 %v2757
        %3513 = vmatprep.subr.mxu0 %v2760
        %3514 = vmatpush1.msra.mxu0 %v2759
        %3515 = vmatprep.subr.mxu0 %v2762
        %3516 = vmatpush1.msra.mxu0 %v2761
        %3517 = vmatprep.subr.mxu0 %v2764
        %3518 = vmatpush1.msra.mxu0 %v2763
        %3519 = vmatprep.subr.mxu0 %v2766
        %3520 = vmatpush1.msra.mxu0 %v2765
        %3521 = vmatprep.subr.mxu0 %v2768
        %3522 = vmatpush1.msra.mxu0 %v2767
        %3523 = vmatprep.subr.mxu0 %v2770
        %3524 = vmatpush1.msra.mxu0 %v2769
        %3525 = vmatprep.subr.mxu0 %v2772
        %3526 = vmatpush1.msra.mxu0 %v2771
        %3527 = vmatprep.subr.mxu0 %v2774
        %3528 = vmatpush1.msra.mxu0 %v2773
        %3529 = vmatprep.subr.mxu0 %v2776
        %3530 = vmatpush1.msra.mxu0 %v2775
        %3531 = vmatprep.subr.mxu0 %v2778
        %3532 = vmatpush1.msra.mxu0 %v2777
        %3533 = vmatprep.subr.mxu0 %v2780
        %3534 = vmatpush1.msra.mxu0 %v2779
        %3535 = vmatprep.subr.mxu0 %v2782
        %3536 = vmatpush1.msra.mxu0 %v2781
        %3537 = vmatprep.subr.mxu0 %v2784
        %3538 = vmatpush1.msra.mxu0 %v2783
        %3539 = vmatprep.subr.mxu0 %v2786
        %3540 = vmatpush1.msra.mxu0 %v2785
        %3541 = vmatprep.subr.mxu0 %v2788
        %3542 = vmatpush1.msra.mxu0 %v2787
        %3543 = vmatprep.subr.mxu0 %v2790
        %3544 = vmatpush1.msra.mxu0 %v2789
        %3545 = vmatprep.subr.mxu0 %v2792
        %3546 = vmatpush1.msra.mxu0 %v2791
        %3547 = vmatprep.subr.mxu0 %v2794
        %3548 = vmatpush1.msra.mxu0 %v2793
        %3549 = vmatprep.subr.mxu0 %v2796
        %3550 = vmatpush1.msra.mxu0 %v2795
        %3551 = vmatprep.subr.mxu0 %v2803
        %3552 = vmatpush1.msra.mxu0 %v2800
        %3553 = vmatprep.subr.mxu0 0.0
        %3554 = vmatpush1.msra.mxu0 0.0
        %3555 = vmatprep.subr.mxu0 0.0
        %3556 = vmatpush1.msra.mxu0 0.0
        %3557 = vmatprep.subr.mxu0 0.0
        %3558 = vmatpush1.msra.mxu0 0.0
        %3559 = vmatprep.subr.mxu0 0.0
        %3560 = vmatpush1.msra.mxu0 0.0
        %3561 = vmatprep.subr.mxu0 0.0
        %3562 = vmatpush1.msra.mxu0 0.0
        %3563 = vmatprep.subr.mxu0 0.0
        %3564 = vmatpush1.msra.mxu0 0.0
        %3565 = vmatprep.subr.mxu0 0.0
        %3566 = vmatpush1.msra.mxu0 0.0
        %3567 = vmatprep.subr.mxu0 0.0
        %3568 = vmatpush1.msra.mxu0 0.0
        %3569 = vmatprep.subr.mxu0 0.0
        %3570 = vmatpush1.msra.mxu0 0.0
        %3571 = vmatprep.subr.mxu0 0.0
        %3572 = vmatpush1.msra.mxu0 0.0
        %3573 = vmatprep.subr.mxu0 0.0
        %3574 = vmatpush1.msra.mxu0 0.0
        %3575 = vmatprep.mubr.f32.mxu0 %v3381
        %3576 = vmatmul.mubr.f32.gmra.mrb[0].mxu0 %v2559
        %v3577 = vpop.f32.mrb[0].mxu0
        %v3578 = vadd.f32 0.0, %v3577
        %v3579 = vpop.f32.mrb[0].mxu0
        %v3580 = vadd.f32 0.0, %v3579
        %3581 = vmatprep.mubr.f32.mxu0 %v3384
        %3582 = vmatmul.mubr.f32.gmra.mrb[0].mxu0 %v2561
        %v3583 = vpop.f32.mrb[0].mxu0
        %v3584 = vadd.f32 0.0, %v3583
        %v3585 = vpop.f32.mrb[0].mxu0
        %v3586 = vadd.f32 0.0, %v3585
        %3587 = vmatprep.mubr.f32.mxu0 %v3387
        %3588 = vmatmul.mubr.f32.gmra.mrb[0].mxu0 %v2563
        %v3589 = vpop.f32.mrb[0].mxu0
        %v3590 = vadd.f32 0.0, %v3589
        %v3591 = vpop.f32.mrb[0].mxu0
        %v3592 = vadd.f32 0.0, %v3591
        %3593 = vmatprep.mubr.f32.mxu0 %v3390
        %3594 = vmatmul.mubr.f32.gmra.mrb[0].mxu0 %v2565
        %v3595 = vpop.f32.mrb[0].mxu0
        %v3596 = vadd.f32 0.0, %v3595
        %v3597 = vpop.f32.mrb[0].mxu0
        %v3598 = vadd.f32 0.0, %v3597
        %3599 = vmatprep.mubr.f32.mxu0 %v3393
        %3600 = vmatmul.mubr.f32.gmra.mrb[0].mxu0 %v2567
        %v3601 = vpop.f32.mrb[0].mxu0
        %v3602 = vadd.f32 0.0, %v3601
        %v3603 = vpop.f32.mrb[0].mxu0
        %v3604 = vadd.f32 0.0, %v3603
        %3605 = vmatprep.mubr.f32.mxu0 %v3396
        %3606 = vmatmul.mubr.f32.gmra.mrb[0].mxu0 %v2569
        %v3607 = vpop.f32.mrb[0].mxu0
        %v3608 = vpop.f32.mrb[0].mxu0
        %3609 = vmatprep.mubr.f32.mxu0 %v3399
        %3610 = vmatmul.mubr.f32.gmra.mrb[0].mxu0 %v2571
        %v3611 = vpop.f32.mrb[0].mxu0
        %v3612 = vpop.f32.mrb[0].mxu0
        %3613 = vmatprep.mubr.f32.mxu0 %v3402
        %3614 = vmatmul.mubr.f32.gmra.mrb[0].mxu0 %v2573
        %v3615 = vpop.f32.mrb[0].mxu0
        %v3616 = vpop.f32.mrb[0].mxu0
        %3617 = vdwg.mxu0
        %3618 = vmatprep.subr.mxu0 %v2914
        %3619 = vmatpush1.msra.mxu0 %v2913
        %3620 = vmatprep.subr.mxu0 %v2916
        %3621 = vmatpush1.msra.mxu0 %v2915
        %3622 = vmatprep.subr.mxu0 %v2918
        %3623 = vmatpush1.msra.mxu0 %v2917
        %3624 = vmatprep.subr.mxu0 %v2920
        %3625 = vmatpush1.msra.mxu0 %v2919
        %3626 = vmatprep.subr.mxu0 %v2922
        %3627 = vmatpush1.msra.mxu0 %v2921
        %3628 = vmatprep.subr.mxu0 %v2924
        %3629 = vmatpush1.msra.mxu0 %v2923
        %3630 = vmatprep.subr.mxu0 %v2926
        %3631 = vmatpush1.msra.mxu0 %v2925
        %3632 = vmatprep.subr.mxu0 %v2928
        %3633 = vmatpush1.msra.mxu0 %v2927
        %3634 = vmatprep.subr.mxu0 %v2930
        %3635 = vmatpush1.msra.mxu0 %v2929
        %3636 = vmatprep.subr.mxu0 %v2932
        %3637 = vmatpush1.msra.mxu0 %v2931
        %3638 = vmatprep.subr.mxu0 %v2934
        %3639 = vmatpush1.msra.mxu0 %v2933
        %3640 = vmatprep.subr.mxu0 %v2936
        %3641 = vmatpush1.msra.mxu0 %v2935
        %3642 = vmatprep.subr.mxu0 %v2938
        %3643 = vmatpush1.msra.mxu0 %v2937
        %3644 = vmatprep.subr.mxu0 %v2940
        %3645 = vmatpush1.msra.mxu0 %v2939
        %3646 = vmatprep.subr.mxu0 %v2942
        %3647 = vmatpush1.msra.mxu0 %v2941
        %3648 = vmatprep.subr.mxu0 %v2944
        %3649 = vmatpush1.msra.mxu0 %v2943
        %3650 = vmatprep.subr.mxu0 %v2946
        %3651 = vmatpush1.msra.mxu0 %v2945
        %3652 = vmatprep.subr.mxu0 %v2948
        %3653 = vmatpush1.msra.mxu0 %v2947
        %3654 = vmatprep.subr.mxu0 %v2950
        %3655 = vmatpush1.msra.mxu0 %v2949
        %3656 = vmatprep.subr.mxu0 %v2952
        %3657 = vmatpush1.msra.mxu0 %v2951
        %3658 = vmatprep.subr.mxu0 %v2959
        %3659 = vmatpush1.msra.mxu0 %v2956
        %3660 = vmatprep.subr.mxu0 0.0
        %3661 = vmatpush1.msra.mxu0 0.0
        %3662 = vmatprep.subr.mxu0 0.0
        %3663 = vmatpush1.msra.mxu0 0.0
        %3664 = vmatprep.subr.mxu0 0.0
        %3665 = vmatpush1.msra.mxu0 0.0
        %3666 = vmatprep.subr.mxu0 0.0
        %3667 = vmatpush1.msra.mxu0 0.0
        %3668 = vmatprep.subr.mxu0 0.0
        %3669 = vmatpush1.msra.mxu0 0.0
        %3670 = vmatprep.subr.mxu0 0.0
        %3671 = vmatpush1.msra.mxu0 0.0
        %3672 = vmatprep.subr.mxu0 0.0
        %3673 = vmatpush1.msra.mxu0 0.0
        %3674 = vmatprep.subr.mxu0 0.0
        %3675 = vmatpush1.msra.mxu0 0.0
        %3676 = vmatprep.subr.mxu0 0.0
        %3677 = vmatpush1.msra.mxu0 0.0
        %3678 = vmatprep.subr.mxu0 0.0
        %3679 = vmatpush1.msra.mxu0 0.0
        %3680 = vmatprep.subr.mxu0 0.0
        %3681 = vmatpush1.msra.mxu0 0.0
        %3682 = vmatprep.mubr.f32.mxu0 %v3381
        %3683 = vmatmul.mubr.f32.gmra.mrb[0].mxu0 %v2559
        %v3684 = vpop.f32.mrb[0].mxu0
        %v3685 = vpop.f32.mrb[0].mxu0
        %3686 = vmatprep.mubr.f32.mxu0 %v3384
        %3687 = vmatmul.mubr.f32.gmra.mrb[0].mxu0 %v2561
        %v3688 = vpop.f32.mrb[0].mxu0
        %v3689 = vadd.f32 0.0, %v3688
        %v3690 = vpop.f32.mrb[0].mxu0
        %v3691 = vadd.f32 0.0, %v3690
        %3692 = vmatprep.mubr.f32.mxu0 %v3387
        %3693 = vmatmul.mubr.f32.gmra.mrb[0].mxu0 %v2563
        %v3694 = vpop.f32.mrb[0].mxu0
        %v3695 = vadd.f32 0.0, %v3694
        %v3696 = vpop.f32.mrb[0].mxu0
        %v3697 = vadd.f32 0.0, %v3696
        %3698 = vmatprep.mubr.f32.mxu0 %v3390
        %3699 = vmatmul.mubr.f32.gmra.mrb[0].mxu0 %v2565
        %v3700 = vpop.f32.mrb[0].mxu0
        %v3701 = vadd.f32 0.0, %v3700
        %v3702 = vpop.f32.mrb[0].mxu0
        %v3703 = vadd.f32 0.0, %v3702
        %3704 = vmatprep.mubr.f32.mxu0 %v3393
        %3705 = vmatmul.mubr.f32.gmra.mrb[0].mxu0 %v2567
        %v3706 = vpop.f32.mrb[0].mxu0
        %v3707 = vadd.f32 0.0, %v3706
        %v3708 = vpop.f32.mrb[0].mxu0
        %v3709 = vadd.f32 0.0, %v3708
        %3710 = vmatprep.mubr.f32.mxu0 %v3396
        %3711 = vmatmul.mubr.f32.gmra.mrb[0].mxu0 %v2569
        %v3712 = vpop.f32.mrb[0].mxu0
        %v3713 = vadd.f32 0.0, %v3712
        %v3714 = vpop.f32.mrb[0].mxu0
        %v3715 = vadd.f32 0.0, %v3714
        %3716 = vmatprep.mubr.f32.mxu0 %v3399
        %3717 = vmatmul.mubr.f32.gmra.mrb[0].mxu0 %v2571
        %v3718 = vpop.f32.mrb[0].mxu0
        %v3719 = vpop.f32.mrb[0].mxu0
        %3720 = vmatprep.mubr.f32.mxu0 %v3402
        %3721 = vmatmul.mubr.f32.gmra.mrb[0].mxu0 %v2573
        %v3722 = vpop.f32.mrb[0].mxu0
        %v3723 = vpop.f32.mrb[0].mxu0
        %3724 = vdwg.mxu0
        %3725 = vmatprep.subr.mxu0 %v3070
        %3726 = vmatpush1.msra.mxu0 %v3069
        %3727 = vmatprep.subr.mxu0 %v3072
        %3728 = vmatpush1.msra.mxu0 %v3071
        %3729 = vmatprep.subr.mxu0 %v3074
        %3730 = vmatpush1.msra.mxu0 %v3073
        %3731 = vmatprep.subr.mxu0 %v3076
        %3732 = vmatpush1.msra.mxu0 %v3075
        %3733 = vmatprep.subr.mxu0 %v3078
        %3734 = vmatpush1.msra.mxu0 %v3077
        %3735 = vmatprep.subr.mxu0 %v3080
        %3736 = vmatpush1.msra.mxu0 %v3079
        %3737 = vmatprep.subr.mxu0 %v3082
        %3738 = vmatpush1.msra.mxu0 %v3081
        %3739 = vmatprep.subr.mxu0 %v3084
        %3740 = vmatpush1.msra.mxu0 %v3083
        %3741 = vmatprep.subr.mxu0 %v3086
        %3742 = vmatpush1.msra.mxu0 %v3085
        %3743 = vmatprep.subr.mxu0 %v3088
        %3744 = vmatpush1.msra.mxu0 %v3087
        %3745 = vmatprep.subr.mxu0 %v3090
        %3746 = vmatpush1.msra.mxu0 %v3089
        %3747 = vmatprep.subr.mxu0 %v3092
        %3748 = vmatpush1.msra.mxu0 %v3091
        %3749 = vmatprep.subr.mxu0 %v3094
        %3750 = vmatpush1.msra.mxu0 %v3093
        %3751 = vmatprep.subr.mxu0 %v3096
        %3752 = vmatpush1.msra.mxu0 %v3095
        %3753 = vmatprep.subr.mxu0 %v3098
        %3754 = vmatpush1.msra.mxu0 %v3097
        %3755 = vmatprep.subr.mxu0 %v3100
        %3756 = vmatpush1.msra.mxu0 %v3099
        %3757 = vmatprep.subr.mxu0 %v3102
        %3758 = vmatpush1.msra.mxu0 %v3101
        %3759 = vmatprep.subr.mxu0 %v3104
        %3760 = vmatpush1.msra.mxu0 %v3103
        %3761 = vmatprep.subr.mxu0 %v3106
        %3762 = vmatpush1.msra.mxu0 %v3105
        %3763 = vmatprep.subr.mxu0 %v3108
        %3764 = vmatpush1.msra.mxu0 %v3107
        %3765 = vmatprep.subr.mxu0 %v3115
        %3766 = vmatpush1.msra.mxu0 %v3112
        %3767 = vmatprep.subr.mxu0 0.0
        %3768 = vmatpush1.msra.mxu0 0.0
        %3769 = vmatprep.subr.mxu0 0.0
        %3770 = vmatpush1.msra.mxu0 0.0
        %3771 = vmatprep.subr.mxu0 0.0
        %3772 = vmatpush1.msra.mxu0 0.0
        %3773 = vmatprep.subr.mxu0 0.0
        %3774 = vmatpush1.msra.mxu0 0.0
        %3775 = vmatprep.subr.mxu0 0.0
        %3776 = vmatpush1.msra.mxu0 0.0
        %3777 = vmatprep.subr.mxu0 0.0
        %3778 = vmatpush1.msra.mxu0 0.0
        %3779 = vmatprep.subr.mxu0 0.0
        %3780 = vmatpush1.msra.mxu0 0.0
        %3781 = vmatprep.subr.mxu0 0.0
        %3782 = vmatpush1.msra.mxu0 0.0
        %3783 = vmatprep.subr.mxu0 0.0
        %3784 = vmatpush1.msra.mxu0 0.0
        %3785 = vmatprep.subr.mxu0 0.0
        %3786 = vmatpush1.msra.mxu0 0.0
        %3787 = vmatprep.subr.mxu0 0.0
        %3788 = vmatpush1.msra.mxu0 0.0
        %3789 = vmatprep.mubr.f32.mxu0 %v3381
        %3790 = vmatmul.mubr.f32.gmra.mrb[0].mxu0 %v2559
        %v3791 = vpop.f32.mrb[0].mxu0
        %v3792 = vpop.f32.mrb[0].mxu0
        %3793 = vmatprep.mubr.f32.mxu0 %v3384
        %3794 = vmatmul.mubr.f32.gmra.mrb[0].mxu0 %v2561
        %v3795 = vpop.f32.mrb[0].mxu0
        %v3796 = vadd.f32 0.0, %v3795
        %v3797 = vpop.f32.mrb[0].mxu0
        %v3798 = vadd.f32 0.0, %v3797
        %3799 = vmatprep.mubr.f32.mxu0 %v3387
        %3800 = vmatmul.mubr.f32.gmra.mrb[0].mxu0 %v2563
        %v3801 = vpop.f32.mrb[0].mxu0
        %v3802 = vadd.f32 0.0, %v3801
        %v3803 = vpop.f32.mrb[0].mxu0
        %v3804 = vadd.f32 0.0, %v3803
        %3805 = vmatprep.mubr.f32.mxu0 %v3390
        %3806 = vmatmul.mubr.f32.gmra.mrb[0].mxu0 %v2565
        %v3807 = vpop.f32.mrb[0].mxu0
        %v3808 = vadd.f32 0.0, %v3807
        %v3809 = vpop.f32.mrb[0].mxu0
        %v3810 = vadd.f32 0.0, %v3809
        %3811 = vmatprep.mubr.f32.mxu0 %v3393
        %3812 = vmatmul.mubr.f32.gmra.mrb[0].mxu0 %v2567
        %v3813 = vpop.f32.mrb[0].mxu0
        %v3814 = vadd.f32 0.0, %v3813
        %v3815 = vpop.f32.mrb[0].mxu0
        %v3816 = vadd.f32 0.0, %v3815
        %3817 = vmatprep.mubr.f32.mxu0 %v3396
        %3818 = vmatmul.mubr.f32.gmra.mrb[0].mxu0 %v2569
        %v3819 = vpop.f32.mrb[0].mxu0
        %v3820 = vadd.f32 0.0, %v3819
        %v3821 = vpop.f32.mrb[0].mxu0
        %v3822 = vadd.f32 0.0, %v3821
        %3823 = vmatprep.mubr.f32.mxu0 %v3399
        %3824 = vmatmul.mubr.f32.gmra.mrb[0].mxu0 %v2571
        %v3825 = vpop.f32.mrb[0].mxu0
        %v3826 = vpop.f32.mrb[0].mxu0
        %3827 = vmatprep.mubr.f32.mxu0 %v3402
        %3828 = vmatmul.mubr.f32.gmra.mrb[0].mxu0 %v2573
        %v3829 = vpop.f32.mrb[0].mxu0
        %v3830 = vpop.f32.mrb[0].mxu0
        %3831 = vdwg.mxu0
        %3832 = vmatprep.subr.mxu0 %v3226
        %3833 = vmatpush1.msra.mxu0 %v3225
        %3834 = vmatprep.subr.mxu0 %v3228
        %3835 = vmatpush1.msra.mxu0 %v3227
        %3836 = vmatprep.subr.mxu0 %v3230
        %3837 = vmatpush1.msra.mxu0 %v3229
        %3838 = vmatprep.subr.mxu0 %v3232
        %3839 = vmatpush1.msra.mxu0 %v3231
        %3840 = vmatprep.subr.mxu0 %v3234
        %3841 = vmatpush1.msra.mxu0 %v3233
        %3842 = vmatprep.subr.mxu0 %v3236
        %3843 = vmatpush1.msra.mxu0 %v3235
        %3844 = vmatprep.subr.mxu0 %v3238
        %3845 = vmatpush1.msra.mxu0 %v3237
        %3846 = vmatprep.subr.mxu0 %v3240
        %3847 = vmatpush1.msra.mxu0 %v3239
        %3848 = vmatprep.subr.mxu0 %v3242
        %3849 = vmatpush1.msra.mxu0 %v3241
        %3850 = vmatprep.subr.mxu0 %v3244
        %3851 = vmatpush1.msra.mxu0 %v3243
        %3852 = vmatprep.subr.mxu0 %v3246
        %3853 = vmatpush1.msra.mxu0 %v3245
        %3854 = vmatprep.subr.mxu0 %v3248
        %3855 = vmatpush1.msra.mxu0 %v3247
        %3856 = vmatprep.subr.mxu0 %v3250
        %3857 = vmatpush1.msra.mxu0 %v3249
        %3858 = vmatprep.subr.mxu0 %v3252
        %3859 = vmatpush1.msra.mxu0 %v3251
        %3860 = vmatprep.subr.mxu0 %v3254
        %3861 = vmatpush1.msra.mxu0 %v3253
        %3862 = vmatprep.subr.mxu0 %v3256
        %3863 = vmatpush1.msra.mxu0 %v3255
        %3864 = vmatprep.subr.mxu0 %v3258
        %3865 = vmatpush1.msra.mxu0 %v3257
        %3866 = vmatprep.subr.mxu0 %v3260
        %3867 = vmatpush1.msra.mxu0 %v3259
        %3868 = vmatprep.subr.mxu0 %v3262
        %3869 = vmatpush1.msra.mxu0 %v3261
        %3870 = vmatprep.subr.mxu0 %v3264
        %3871 = vmatpush1.msra.mxu0 %v3263
        %3872 = vmatprep.subr.mxu0 %v3271
        %3873 = vmatpush1.msra.mxu0 %v3268
        %3874 = vmatprep.subr.mxu0 0.0
        %3875 = vmatpush1.msra.mxu0 0.0
        %3876 = vmatprep.subr.mxu0 0.0
        %3877 = vmatpush1.msra.mxu0 0.0
        %3878 = vmatprep.subr.mxu0 0.0
        %3879 = vmatpush1.msra.mxu0 0.0
        %3880 = vmatprep.subr.mxu0 0.0
        %3881 = vmatpush1.msra.mxu0 0.0
        %3882 = vmatprep.subr.mxu0 0.0
        %3883 = vmatpush1.msra.mxu0 0.0
        %3884 = vmatprep.subr.mxu0 0.0
        %3885 = vmatpush1.msra.mxu0 0.0
        %3886 = vmatprep.subr.mxu0 0.0
        %3887 = vmatpush1.msra.mxu0 0.0
        %3888 = vmatprep.subr.mxu0 0.0
        %3889 = vmatpush1.msra.mxu0 0.0
        %3890 = vmatprep.subr.mxu0 0.0
        %3891 = vmatpush1.msra.mxu0 0.0
        %3892 = vmatprep.subr.mxu0 0.0
        %3893 = vmatpush1.msra.mxu0 0.0
        %3894 = vmatprep.subr.mxu0 0.0
        %3895 = vmatpush1.msra.mxu0 0.0
        %3896 = vmatprep.mubr.f32.mxu0 %v3381
        %3897 = vmatmul.mubr.f32.gmra.mrb[0].mxu0 %v2559
        %v3898 = vpop.f32.mrb[0].mxu0
        %v3899 = vpop.f32.mrb[0].mxu0
        %3900 = vmatprep.mubr.f32.mxu0 %v3384
        %3901 = vmatmul.mubr.f32.gmra.mrb[0].mxu0 %v2561
        %v3902 = vpop.f32.mrb[0].mxu0
        %v3903 = vpop.f32.mrb[0].mxu0
        %3904 = vmatprep.mubr.f32.mxu0 %v3387
        %3905 = vmatmul.mubr.f32.gmra.mrb[0].mxu0 %v2563
        %v3906 = vpop.f32.mrb[0].mxu0
        %v3907 = vadd.f32 0.0, %v3906
        %v3908 = vpop.f32.mrb[0].mxu0
        %v3909 = vadd.f32 0.0, %v3908
        %3910 = vmatprep.mubr.f32.mxu0 %v3390
        %3911 = vmatmul.mubr.f32.gmra.mrb[0].mxu0 %v2565
        %v3912 = vpop.f32.mrb[0].mxu0
        %v3913 = vadd.f32 0.0, %v3912
        %v3914 = vpop.f32.mrb[0].mxu0
        %v3915 = vadd.f32 0.0, %v3914
        %3916 = vmatprep.mubr.f32.mxu0 %v3393
        %3917 = vmatmul.mubr.f32.gmra.mrb[0].mxu0 %v2567
        %v3918 = vpop.f32.mrb[0].mxu0
        %v3919 = vadd.f32 0.0, %v3918
        %v3920 = vpop.f32.mrb[0].mxu0
        %v3921 = vadd.f32 0.0, %v3920
        %3922 = vmatprep.mubr.f32.mxu0 %v3396
        %3923 = vmatmul.mubr.f32.gmra.mrb[0].mxu0 %v2569
        %v3924 = vpop.f32.mrb[0].mxu0
        %v3925 = vadd.f32 0.0, %v3924
        %v3926 = vpop.f32.mrb[0].mxu0
        %v3927 = vadd.f32 0.0, %v3926
        %3928 = vmatprep.mubr.f32.mxu0 %v3399
        %3929 = vmatmul.mubr.f32.gmra.mrb[0].mxu0 %v2571
        %v3930 = vpop.f32.mrb[0].mxu0
        %v3931 = vadd.f32 0.0, %v3930
        %v3932 = vpop.f32.mrb[0].mxu0
        %v3933 = vadd.f32 0.0, %v3932
        %3934 = vmatprep.mubr.f32.mxu0 %v3402
        %3935 = vmatmul.mubr.f32.gmra.mrb[0].mxu0 %v2573
        %v3936 = vpop.f32.mrb[0].mxu0
        %v3937 = vpop.f32.mrb[0].mxu0
        %3938 = vdwg.mxu0
        %v3939 = vadd.f32 %v2716, %v3578
        %v3940 = vadd.f32 %v2718, %v3580
        %v3941 = vadd.f32 %v2722, %v3584
        %v3942 = vadd.f32 %v2724, %v3586
        %v3943 = vadd.f32 %v2728, %v3590
        %v3944 = vadd.f32 %v2730, %v3592
        %v3945 = vadd.f32 %v2734, %v3596
        %v3946 = vadd.f32 %v2736, %v3598
        %v3947 = vadd.f32 %v2740, %v3602
        %v3948 = vadd.f32 %v2742, %v3604
        %v3949 = vadd.f32 %v3939, %v3032
        %v3950 = vadd.f32 %v3940, %v3034
        %v3951 = vadd.f32 %v3941, %v3038
        %v3952 = vadd.f32 %v3942, %v3040
        %v3953 = vadd.f32 %v3943, %v3044
        %v3954 = vadd.f32 %v3944, %v3046
        %v3955 = vadd.f32 %v3945, %v3050
        %v3956 = vadd.f32 %v3946, %v3052
        %v3957 = vadd.f32 %v3947, %v3056
        %v3958 = vadd.f32 %v3948, %v3058
        %v3959 = vadd.f32 %v3949, %v3796
        %v3960 = vadd.f32 %v3950, %v3798
        %v3961 = vadd.f32 %v3951, %v3802
        %v3962 = vadd.f32 %v3952, %v3804
        %v3963 = vadd.f32 %v3953, %v3808
        %v3964 = vadd.f32 %v3954, %v3810
        %v3965 = vadd.f32 %v3955, %v3814
        %v3966 = vadd.f32 %v3956, %v3816
        %v3967 = vadd.f32 %v3957, %v3820
        %v3968 = vadd.f32 %v3958, %v3822
        %v3969 = vadd.f32 %v3959, %v3348
        %v3970 = vadd.f32 %v3960, %v3350
        %v3971 = vadd.f32 %v3961, %v3354
        %v3972 = vadd.f32 %v3962, %v3356
        %v3973 = vadd.f32 %v3963, %v3360
        %v3974 = vadd.f32 %v3964, %v3362
        %v3975 = vadd.f32 %v3965, %v3366
        %v3976 = vadd.f32 %v3966, %v3368
        %v3977 = vadd.f32 %v3967, %v3372
        %v3978 = vadd.f32 %v3968, %v3374
        %v3979 = vadd.f32 %v3471, %v2876
        %v3980 = vadd.f32 %v3473, %v2878
        %v3981 = vadd.f32 %v3477, %v2882
        %v3982 = vadd.f32 %v3479, %v2884
        %v3983 = vadd.f32 %v3483, %v2888
        %v3984 = vadd.f32 %v3485, %v2890
        %v3985 = vadd.f32 %v3489, %v2894
        %v3986 = vadd.f32 %v3491, %v2896
        %v3987 = vadd.f32 %v3495, %v2900
        %v3988 = vadd.f32 %v3497, %v2902
        %v3989 = vadd.f32 %v3979, %v3689
        %v3990 = vadd.f32 %v3980, %v3691
        %v3991 = vadd.f32 %v3981, %v3695
        %v3992 = vadd.f32 %v3982, %v3697
        %v3993 = vadd.f32 %v3983, %v3701
        %v3994 = vadd.f32 %v3984, %v3703
        %v3995 = vadd.f32 %v3985, %v3707
        %v3996 = vadd.f32 %v3986, %v3709
        %v3997 = vadd.f32 %v3987, %v3713
        %v3998 = vadd.f32 %v3988, %v3715
        %v3999 = vadd.f32 %v3989, %v3192
        %v4000 = vadd.f32 %v3990, %v3194
        %v4001 = vadd.f32 %v3991, %v3198
        %v4002 = vadd.f32 %v3992, %v3200
        %v4003 = vadd.f32 %v3993, %v3204
        %v4004 = vadd.f32 %v3994, %v3206
        %v4005 = vadd.f32 %v3995, %v3210
        %v4006 = vadd.f32 %v3996, %v3212
        %v4007 = vadd.f32 %v3997, %v3216
        %v4008 = vadd.f32 %v3998, %v3218
        %v4009 = vadd.f32 %v3999, %v3907
        %v4010 = vadd.f32 %v4000, %v3909
        %v4011 = vadd.f32 %v4001, %v3913
        %v4012 = vadd.f32 %v4002, %v3915
        %v4013 = vadd.f32 %v4003, %v3919
        %v4014 = vadd.f32 %v4004, %v3921
        %v4015 = vadd.f32 %v4005, %v3925
        %v4016 = vadd.f32 %v4006, %v3927
        %v4017 = vadd.f32 %v4007, %v3931
        %v4018 = vadd.f32 %v4008, %v3933
        %v4019 = vmax.f32 %v3969, %v4009
        %v4020 = vmax.f32 %v3970, %v4010
        %v4021 = vmax.f32 %v3971, %v4011
        %v4022 = vmax.f32 %v3972, %v4012
        %v4023 = vmax.f32 %v3973, %v4013
        %v4024 = vmax.f32 %v3974, %v4014
        %v4025 = vmax.f32 %v3975, %v4015
        %v4026 = vmax.f32 %v3976, %v4016
        %v4027 = vmax.f32 %v3977, %v4017
        %v4028 = vmax.f32 %v3978, %v4018
        %v4029 = vld [vmem:[%s4] sm:$0x3]
        %v4031 = vlaneseq
        %v4032 = vshrl.u32 %v4031, 7
        %v4033 = vsub.s32 0, %v4032
        %v4034 = vrot.slane %v4029, %v4033
        %v4035 = vlaneseq
        %v4036 = vshrl.u32 %v4035, 7
        %v4037 = vsub.s32 1, %v4036
        %v4038 = vrot.slane %v4029, %v4037
        %v4041 = vadd.f32 %v4019, %v4034
        %v4042 = vadd.f32 %v4020, %v4038
        %v4043 = vadd.f32 %v4021, %v4034
        %v4044 = vadd.f32 %v4022, %v4038
        %v4045 = vadd.f32 %v4023, %v4034
        %v4046 = vadd.f32 %v4024, %v4038
        %v4047 = vadd.f32 %v4025, %v4034
        %v4048 = vadd.f32 %v4026, %v4038
        %v4049 = vadd.f32 %v4027, %v4034
        %v4050 = vadd.f32 %v4028, %v4038
        %v4051 = vmax.f32 %v4041, 0.0
        %v4052 = vmax.f32 %v4042, 0.0
        %v4053 = vmax.f32 %v4043, 0.0
        %v4054 = vmax.f32 %v4044, 0.0
        %v4055 = vmax.f32 %v4045, 0.0
        %v4056 = vmax.f32 %v4046, 0.0
        %v4057 = vmax.f32 %v4047, 0.0
        %v4058 = vmax.f32 %v4048, 0.0
        %v4059 = vmax.f32 %v4049, 0.0
        %v4060 = vmax.f32 %v4050, 0.0
        %4071 = vrot.lane.b32.xlu0 %v4051, 112
        %v4072 = vpop.permute.xlu0 %4071
        %4073 = vrot.lane.b32.xlu0 %v4052, 112
        %v4074 = vpop.permute.xlu0 %4073
        %4075 = vrot.lane.b32.xlu0 %v4053, 112
        %v4076 = vpop.permute.xlu0 %4075
        %4077 = vrot.lane.b32.xlu0 %v4054, 112
        %v4078 = vpop.permute.xlu0 %4077
        %4079 = vrot.lane.b32.xlu0 %v4055, 112
        %v4080 = vpop.permute.xlu0 %4079
        %4081 = vrot.lane.b32.xlu0 %v4056, 112
        %v4082 = vpop.permute.xlu0 %4081
        %4083 = vrot.lane.b32.xlu0 %v4057, 112
        %v4084 = vpop.permute.xlu0 %4083
        %4085 = vrot.lane.b32.xlu0 %v4058, 112
        %v4086 = vpop.permute.xlu0 %4085
        %4087 = vrot.lane.b32.xlu0 %v4059, 112
        %v4088 = vpop.permute.xlu0 %4087
        %4089 = vrot.lane.b32.xlu0 %v4060, 112
        %v4090 = vpop.permute.xlu0 %4089
        %vm4091 = vcmask 916480
        %v4092 = vsel %vm4091, %v4072, %v4074
        %v4093 = vsel %vm4091, %v4076, %v4078
        %v4094 = vsel %vm4091, %v4080, %v4082
        %v4095 = vsel %vm4091, %v4084, %v4086
        %v4096 = vsel %vm4091, %v4088, %v4090
        %v4107 = vmax.f32 %v4051, %v4092
        %v4108 = vmax.f32 %v4052, %v4074
        %v4109 = vmax.f32 %v4053, %v4093
        %v4110 = vmax.f32 %v4054, %v4078
        %v4111 = vmax.f32 %v4055, %v4094
        %v4112 = vmax.f32 %v4056, %v4082
        %v4113 = vmax.f32 %v4057, %v4095
        %v4114 = vmax.f32 %v4058, %v4086
        %v4115 = vmax.f32 %v4059, %v4096
        %v4116 = vmax.f32 %v4060, %v4090
        %4119 = vrot.lane.b32.xlu0 %v4109, 16
        %v4120 = vpop.permute.xlu0 %4119
        %4121 = vrot.lane.b32.xlu0 %v4110, 16
        %v4122 = vpop.permute.xlu0 %4121
        %vm4123 = vcmask 130048
        %v4124 = vsel %vm4123, %v4120, %v4122
        %4129 = vrot.lane.b32.xlu0 %v4111, 32
        %v4130 = vpop.permute.xlu0 %4129
        %4131 = vrot.lane.b32.xlu0 %v4112, 32
        %v4132 = vpop.permute.xlu0 %4131
        %vm4133 = vcmask 261120
        %v4134 = vsel %vm4133, %v4130, %v4132
        %4139 = vrot.lane.b32.xlu0 %v4113, 48
        %v4140 = vpop.permute.xlu0 %4139
        %4141 = vrot.lane.b32.xlu0 %v4114, 48
        %v4142 = vpop.permute.xlu0 %4141
        %vm4143 = vcmask 392192
        %v4144 = vsel %vm4143, %v4140, %v4142
        %4149 = vrot.lane.b32.xlu0 %v4115, 64
        %v4150 = vpop.permute.xlu0 %4149
        %4151 = vrot.lane.b32.xlu0 %v4116, 64
        %v4152 = vpop.permute.xlu0 %4151
        %vm4153 = vcmask 523264
        %v4154 = vsel %vm4153, %v4150, %v4152
        %v4156 = vsel %vm4123, %v4108, %v4120
        %v4157 = vsel %vm4133, %v4124, %v4130
        %v4158 = vsel %vm4143, %v4134, %v4140
        %v4159 = vsel %vm4153, %v4144, %v4150
        %v4160 = vld [vmem:[%s5] sm:$0xff]
        %v4161 = vld [vmem:[%s5 + $0x8] sm:$0xff]
        %v4162 = vld [vmem:[%s5 + $0x10] sm:$0xff]
        %v4163 = vld [vmem:[%s5 + $0x18] sm:$0xff]
        %v4164 = vld [vmem:[%s5 + $0x20] sm:$0xff]
        %v4165 = vld [vmem:[%s5 + $0x28] sm:$0xff]
        %v4166 = vld [vmem:[%s5 + $0x30] sm:$0xff]
        %v4167 = vld [vmem:[%s5 + $0x38] sm:$0xff]
        %v4168 = vld [vmem:[%s5 + $0x40] sm:$0xff]
        %v4169 = vld [vmem:[%s5 + $0x48] sm:$0xff]
        %v4170 = vld [vmem:[%s5 + $0x50] sm:$0xff]
        %v4171 = vld [vmem:[%s5 + $0x58] sm:$0xff]
        %v4172 = vld [vmem:[%s5 + $0x60] sm:$0xff]
        %v4173 = vld [vmem:[%s5 + $0x68] sm:$0xff]
        %v4174 = vld [vmem:[%s5 + $0x70] sm:$0xff]
        %v4175 = vld [vmem:[%s5 + $0x78] sm:$0xff]
        %v4176 = vld [vmem:[%s5 + $0x80] sm:$0xff]
        %v4177 = vld [vmem:[%s5 + $0x88] sm:$0xff]
        %v4178 = vld [vmem:[%s5 + $0x90] sm:$0xff]
        %v4179 = vld [vmem:[%s5 + $0x98] sm:$0xff]
        %v4180 = vld [vmem:[%s5 + $0xa0] sm:$0xff]
        %v4181 = vld [vmem:[%s5 + $0xa8] sm:$0xff]
        %v4182 = vld [vmem:[%s5 + $0xb0] sm:$0xff]
        %v4183 = vld [vmem:[%s5 + $0xb8] sm:$0xff]
        %v4184 = vld [vmem:[%s5 + $0xc0] sm:$0xff]
        %v4185 = vld [vmem:[%s5 + $0xc8] sm:$0xff]
        %v4186 = vld [vmem:[%s5 + $0xd0] sm:$0xff]
        %v4187 = vld [vmem:[%s5 + $0xd8] sm:$0xff]
        %v4188 = vld [vmem:[%s5 + $0xe0] sm:$0xff]
        %v4189 = vld [vmem:[%s5 + $0xe8] sm:$0xff]
        %v4190 = vld [vmem:[%s5 + $0xf0] sm:$0xff]
        %v4191 = vld [vmem:[%s5 + $0xf8] sm:$0xff]
        %v4192 = vld [vmem:[%s5 + $0x100] sm:$0xff]
        %v4193 = vld [vmem:[%s5 + $0x108] sm:$0xff]
        %v4194 = vld [vmem:[%s5 + $0x110] sm:$0xff]
        %v4195 = vld [vmem:[%s5 + $0x118] sm:$0xff]
        %v4196 = vld [vmem:[%s5 + $0x120] sm:$0xff]
        %v4197 = vld [vmem:[%s5 + $0x128] sm:$0xff]
        %v4198 = vld [vmem:[%s5 + $0x130] sm:$0xff]
        %v4199 = vld [vmem:[%s5 + $0x138] sm:$0xff]
        %v4200 = vld [vmem:[%s5 + $0x140] sm:$0xff]
        %v4201 = vld [vmem:[%s5 + $0x148] sm:$0xff]
        %v4202 = vld [vmem:[%s5 + $0x150] sm:$0xff]
        %v4203 = vld [vmem:[%s5 + $0x158] sm:$0xff]
        %v4204 = vld [vmem:[%s5 + $0x160] sm:$0xff]
        %v4205 = vld [vmem:[%s5 + $0x168] sm:$0xff]
        %v4206 = vld [vmem:[%s5 + $0x170] sm:$0xff]
        %v4207 = vld [vmem:[%s5 + $0x178] sm:$0xff]
        %v4208 = vld [vmem:[%s5 + $0x180] sm:$0xff]
        %v4209 = vld [vmem:[%s5 + $0x188] sm:$0xff]
        %v4210 = vld [vmem:[%s5 + $0x190] sm:$0xff]
        %v4211 = vld [vmem:[%s5 + $0x198] sm:$0xff]
        %v4212 = vld [vmem:[%s5 + $0x1a0] sm:$0xff]
        %v4213 = vld [vmem:[%s5 + $0x1a8] sm:$0xff]
        %v4214 = vld [vmem:[%s5 + $0x1b0] sm:$0xff]
        %v4215 = vld [vmem:[%s5 + $0x1b8] sm:$0xff]
        %v4216 = vld [vmem:[%s5 + $0x1c0] sm:$0xff]
        %v4217 = vld [vmem:[%s5 + $0x1c8] sm:$0xff]
        %v4218 = vld [vmem:[%s5 + $0x1d0] sm:$0xff]
        %v4219 = vld [vmem:[%s5 + $0x1d8] sm:$0xff]
        %v4220 = vld [vmem:[%s5 + $0x1e0] sm:$0xff]
        %v4221 = vld [vmem:[%s5 + $0x1e8] sm:$0xff]
        %v4222 = vld [vmem:[%s5 + $0x1f0] sm:$0xff]
        %v4223 = vld [vmem:[%s5 + $0x1f8] sm:$0xff]
        %v4224 = vld [vmem:[%s5 + $0x200] sm:$0xff]
        %v4225 = vld [vmem:[%s5 + $0x208] sm:$0xff]
        %v4226 = vld [vmem:[%s5 + $0x210] sm:$0xff]
        %v4227 = vld [vmem:[%s5 + $0x218] sm:$0xff]
        %v4228 = vld [vmem:[%s5 + $0x220] sm:$0xff]
        %v4229 = vld [vmem:[%s5 + $0x228] sm:$0xff]
        %v4230 = vld [vmem:[%s5 + $0x230] sm:$0xff]
        %v4231 = vld [vmem:[%s5 + $0x238] sm:$0xff]
        %v4232 = vld [vmem:[%s5 + $0x240] sm:$0xff]
        %v4233 = vld [vmem:[%s5 + $0x248] sm:$0xff]
        %v4234 = vld [vmem:[%s5 + $0x250] sm:$0xff]
        %v4235 = vld [vmem:[%s5 + $0x258] sm:$0xff]
        %v4236 = vld [vmem:[%s5 + $0x260] sm:$0xff]
        %v4237 = vld [vmem:[%s5 + $0x268] sm:$0xff]
        %v4238 = vld [vmem:[%s5 + $0x270] sm:$0xff]
        %v4239 = vld [vmem:[%s5 + $0x278] sm:$0xff]
        %v4240 = vld [vmem:[%s5 + $0x280] sm:$0xff]
        %v4241 = vld [vmem:[%s5 + $0x288] sm:$0xff]
        %v4242 = vld [vmem:[%s5 + $0x290] sm:$0xff]
        %v4243 = vld [vmem:[%s5 + $0x298] sm:$0xff]
        %v4244 = vld [vmem:[%s5 + $0x2a0] sm:$0xff]
        %v4245 = vld [vmem:[%s5 + $0x2a8] sm:$0xff]
        %v4246 = vld [vmem:[%s5 + $0x2b0] sm:$0xff]
        %v4247 = vld [vmem:[%s5 + $0x2b8] sm:$0xff]
        %v4248 = vld [vmem:[%s5 + $0x2c0] sm:$0xff]
        %v4249 = vld [vmem:[%s5 + $0x2c8] sm:$0xff]
        %v4250 = vld [vmem:[%s6] sm:$0x1]
        %v4252 = vlaneseq
        %v4253 = vshrl.u32 %v4252, 7
        %v4254 = vsub.s32 0, %v4253
        %v4255 = vrot.slane %v4250, %v4254
        %vm4257 = vcmask 654336
        %v4258 = vsel %vm4257, %v4154, 0
        %4260 = vmatprep.subr.mxu0 0.0
        %4261 = vmatpush1.msra.mxu0 %v4160
        %4262 = vmatprep.subr.mxu0 0.0
        %4263 = vmatpush1.msra.mxu0 %v4161
        %4264 = vmatprep.subr.mxu0 0.0
        %4265 = vmatpush1.msra.mxu0 %v4162
        %4266 = vmatprep.subr.mxu0 0.0
        %4267 = vmatpush1.msra.mxu0 %v4163
        %4268 = vmatprep.subr.mxu0 0.0
        %4269 = vmatpush1.msra.mxu0 %v4164
        %4270 = vmatprep.subr.mxu0 0.0
        %4271 = vmatpush1.msra.mxu0 %v4165
        %4272 = vmatprep.subr.mxu0 0.0
        %4273 = vmatpush1.msra.mxu0 %v4166
        %4274 = vmatprep.subr.mxu0 0.0
        %4275 = vmatpush1.msra.mxu0 %v4167
        %4276 = vmatprep.subr.mxu0 0.0
        %4277 = vmatpush1.msra.mxu0 %v4168
        %4278 = vmatprep.subr.mxu0 0.0
        %4279 = vmatpush1.msra.mxu0 %v4169
        %4280 = vmatprep.subr.mxu0 0.0
        %4281 = vmatpush1.msra.mxu0 %v4170
        %4282 = vmatprep.subr.mxu0 0.0
        %4283 = vmatpush1.msra.mxu0 %v4171
        %4284 = vmatprep.subr.mxu0 0.0
        %4285 = vmatpush1.msra.mxu0 %v4172
        %4286 = vmatprep.subr.mxu0 0.0
        %4287 = vmatpush1.msra.mxu0 %v4173
        %4288 = vmatprep.subr.mxu0 0.0
        %4289 = vmatpush1.msra.mxu0 %v4174
        %4290 = vmatprep.subr.mxu0 0.0
        %4291 = vmatpush1.msra.mxu0 %v4175
        %4292 = vmatprep.subr.mxu0 0.0
        %4293 = vmatpush1.msra.mxu0 %v4176
        %4294 = vmatprep.subr.mxu0 0.0
        %4295 = vmatpush1.msra.mxu0 %v4177
        %4296 = vmatprep.subr.mxu0 0.0
        %4297 = vmatpush1.msra.mxu0 %v4178
        %4298 = vmatprep.subr.mxu0 0.0
        %4299 = vmatpush1.msra.mxu0 %v4179
        %4300 = vmatprep.subr.mxu0 0.0
        %4301 = vmatpush1.msra.mxu0 %v4180
        %4302 = vmatprep.subr.mxu0 0.0
        %4303 = vmatpush1.msra.mxu0 %v4181
        %4304 = vmatprep.subr.mxu0 0.0
        %4305 = vmatpush1.msra.mxu0 %v4182
        %4306 = vmatprep.subr.mxu0 0.0
        %4307 = vmatpush1.msra.mxu0 %v4183
        %4308 = vmatprep.subr.mxu0 0.0
        %4309 = vmatpush1.msra.mxu0 %v4184
        %4310 = vmatprep.subr.mxu0 0.0
        %4311 = vmatpush1.msra.mxu0 %v4185
        %4312 = vmatprep.subr.mxu0 0.0
        %4313 = vmatpush1.msra.mxu0 %v4186
        %4314 = vmatprep.subr.mxu0 0.0
        %4315 = vmatpush1.msra.mxu0 %v4187
        %4316 = vmatprep.subr.mxu0 0.0
        %4317 = vmatpush1.msra.mxu0 %v4188
        %4318 = vmatprep.subr.mxu0 0.0
        %4319 = vmatpush1.msra.mxu0 %v4189
        %4320 = vmatprep.subr.mxu0 0.0
        %4321 = vmatpush1.msra.mxu0 %v4190
        %4322 = vmatprep.subr.mxu0 0.0
        %4323 = vmatpush1.msra.mxu0 %v4191
        %4324 = vmatprep.mubr.f32.mxu0 %v4156
        %4325 = vmatmul.mubr.f32.gmra.mrb[0].mxu0 %v4107
        %v4326 = vpop.f32.mrb[0].mxu0
        %v4327 = vadd.f32 %v4255, %v4326
        %v4328 = vpop.f32.mrb[0].mxu0
        %4329 = vdwg.mxu0
        %4330 = vmatprep.subr.mxu0 0.0
        %4331 = vmatpush1.msra.mxu0 %v4192
        %4332 = vmatprep.subr.mxu0 0.0
        %4333 = vmatpush1.msra.mxu0 %v4193
        %4334 = vmatprep.subr.mxu0 0.0
        %4335 = vmatpush1.msra.mxu0 %v4194
        %4336 = vmatprep.subr.mxu0 0.0
        %4337 = vmatpush1.msra.mxu0 %v4195
        %4338 = vmatprep.subr.mxu0 0.0
        %4339 = vmatpush1.msra.mxu0 %v4196
        %4340 = vmatprep.subr.mxu0 0.0
        %4341 = vmatpush1.msra.mxu0 %v4197
        %4342 = vmatprep.subr.mxu0 0.0
        %4343 = vmatpush1.msra.mxu0 %v4198
        %4344 = vmatprep.subr.mxu0 0.0
        %4345 = vmatpush1.msra.mxu0 %v4199
        %4346 = vmatprep.subr.mxu0 0.0
        %4347 = vmatpush1.msra.mxu0 %v4200
        %4348 = vmatprep.subr.mxu0 0.0
        %4349 = vmatpush1.msra.mxu0 %v4201
        %4350 = vmatprep.subr.mxu0 0.0
        %4351 = vmatpush1.msra.mxu0 %v4202
        %4352 = vmatprep.subr.mxu0 0.0
        %4353 = vmatpush1.msra.mxu0 %v4203
        %4354 = vmatprep.subr.mxu0 0.0
        %4355 = vmatpush1.msra.mxu0 %v4204
        %4356 = vmatprep.subr.mxu0 0.0
        %4357 = vmatpush1.msra.mxu0 %v4205
        %4358 = vmatprep.subr.mxu0 0.0
        %4359 = vmatpush1.msra.mxu0 %v4206
        %4360 = vmatprep.subr.mxu0 0.0
        %4361 = vmatpush1.msra.mxu0 %v4207
        %4362 = vmatprep.subr.mxu0 0.0
        %4363 = vmatpush1.msra.mxu0 %v4208
        %4364 = vmatprep.subr.mxu0 0.0
        %4365 = vmatpush1.msra.mxu0 %v4209
        %4366 = vmatprep.subr.mxu0 0.0
        %4367 = vmatpush1.msra.mxu0 %v4210
        %4368 = vmatprep.subr.mxu0 0.0
        %4369 = vmatpush1.msra.mxu0 %v4211
        %4370 = vmatprep.subr.mxu0 0.0
        %4371 = vmatpush1.msra.mxu0 %v4212
        %4372 = vmatprep.subr.mxu0 0.0
        %4373 = vmatpush1.msra.mxu0 %v4213
        %4374 = vmatprep.subr.mxu0 0.0
        %4375 = vmatpush1.msra.mxu0 %v4214
        %4376 = vmatprep.subr.mxu0 0.0
        %4377 = vmatpush1.msra.mxu0 %v4215
        %4378 = vmatprep.subr.mxu0 0.0
        %4379 = vmatpush1.msra.mxu0 %v4216
        %4380 = vmatprep.subr.mxu0 0.0
        %4381 = vmatpush1.msra.mxu0 %v4217
        %4382 = vmatprep.subr.mxu0 0.0
        %4383 = vmatpush1.msra.mxu0 %v4218
        %4384 = vmatprep.subr.mxu0 0.0
        %4385 = vmatpush1.msra.mxu0 %v4219
        %4386 = vmatprep.subr.mxu0 0.0
        %4387 = vmatpush1.msra.mxu0 %v4220
        %4388 = vmatprep.subr.mxu0 0.0
        %4389 = vmatpush1.msra.mxu0 %v4221
        %4390 = vmatprep.subr.mxu0 0.0
        %4391 = vmatpush1.msra.mxu0 %v4222
        %4392 = vmatprep.subr.mxu0 0.0
        %4393 = vmatpush1.msra.mxu0 %v4223
        %4394 = vmatprep.mubr.f32.mxu0 %v4158
        %4395 = vmatmul.mubr.f32.gmra.mrb[0].mxu0 %v4157
        %v4396 = vpop.f32.mrb[0].mxu0
        %v4397 = vadd.f32 %v4327, %v4396
        %v4398 = vpop.f32.mrb[0].mxu0
        %4399 = vdwg.mxu0
        %4400 = vmatprep.subr.mxu0 0.0
        %4401 = vmatpush1.msra.mxu0 %v4224
        %4402 = vmatprep.subr.mxu0 0.0
        %4403 = vmatpush1.msra.mxu0 %v4225
        %4404 = vmatprep.subr.mxu0 0.0
        %4405 = vmatpush1.msra.mxu0 %v4226
        %4406 = vmatprep.subr.mxu0 0.0
        %4407 = vmatpush1.msra.mxu0 %v4227
        %4408 = vmatprep.subr.mxu0 0.0
        %4409 = vmatpush1.msra.mxu0 %v4228
        %4410 = vmatprep.subr.mxu0 0.0
        %4411 = vmatpush1.msra.mxu0 %v4229
        %4412 = vmatprep.subr.mxu0 0.0
        %4413 = vmatpush1.msra.mxu0 %v4230
        %4414 = vmatprep.subr.mxu0 0.0
        %4415 = vmatpush1.msra.mxu0 %v4231
        %4416 = vmatprep.subr.mxu0 0.0
        %4417 = vmatpush1.msra.mxu0 %v4232
        %4418 = vmatprep.subr.mxu0 0.0
        %4419 = vmatpush1.msra.mxu0 %v4233
        %4420 = vmatprep.subr.mxu0 0.0
        %4421 = vmatpush1.msra.mxu0 %v4234
        %4422 = vmatprep.subr.mxu0 0.0
        %4423 = vmatpush1.msra.mxu0 %v4235
        %4424 = vmatprep.subr.mxu0 0.0
        %4425 = vmatpush1.msra.mxu0 %v4236
        %4426 = vmatprep.subr.mxu0 0.0
        %4427 = vmatpush1.msra.mxu0 %v4237
        %4428 = vmatprep.subr.mxu0 0.0
        %4429 = vmatpush1.msra.mxu0 %v4238
        %4430 = vmatprep.subr.mxu0 0.0
        %4431 = vmatpush1.msra.mxu0 %v4239
        %4432 = vmatprep.subr.mxu0 0.0
        %4433 = vmatpush1.msra.mxu0 %v4240
        %4434 = vmatprep.subr.mxu0 0.0
        %4435 = vmatpush1.msra.mxu0 %v4241
        %4436 = vmatprep.subr.mxu0 0.0
        %4437 = vmatpush1.msra.mxu0 %v4242
        %4438 = vmatprep.subr.mxu0 0.0
        %4439 = vmatpush1.msra.mxu0 %v4243
        %4440 = vmatprep.subr.mxu0 0.0
        %4441 = vmatpush1.msra.mxu0 %v4244
        %4442 = vmatprep.subr.mxu0 0.0
        %4443 = vmatpush1.msra.mxu0 %v4245
        %4444 = vmatprep.subr.mxu0 0.0
        %4445 = vmatpush1.msra.mxu0 %v4246
        %4446 = vmatprep.subr.mxu0 0.0
        %4447 = vmatpush1.msra.mxu0 %v4247
        %4448 = vmatprep.subr.mxu0 0.0
        %4449 = vmatpush1.msra.mxu0 %v4248
        %4450 = vmatprep.subr.mxu0 0.0
        %4451 = vmatpush1.msra.mxu0 %v4249
        %4452 = vmatprep.subr.mxu0 0.0
        %4453 = vmatpush1.msra.mxu0 0.0
        %4454 = vmatprep.subr.mxu0 0.0
        %4455 = vmatpush1.msra.mxu0 0.0
        %4456 = vmatprep.subr.mxu0 0.0
        %4457 = vmatpush1.msra.mxu0 0.0
        %4458 = vmatprep.subr.mxu0 0.0
        %4459 = vmatpush1.msra.mxu0 0.0
        %4460 = vmatprep.subr.mxu0 0.0
        %4461 = vmatpush1.msra.mxu0 0.0
        %4462 = vmatprep.subr.mxu0 0.0
        %4463 = vmatpush1.msra.mxu0 0.0
        %4464 = vmatprep.mubr.f32.mxu0 %v4258
        %4465 = vmatmul.mubr.f32.gmra.mrb[0].mxu0 %v4159
        %v4466 = vpop.f32.mrb[0].mxu0
        %v4467 = vadd.f32 %v4397, %v4466
        %v4468 = vpop.f32.mrb[0].mxu0
        %4469 = vdwg.mxu0
        %v4470 = vmax.f32 %v4467, 0.0
        %v4471 = vld [vmem:[%s7] sm:$0xff]
        %v4472 = vld [vmem:[%s7 + $0x8] sm:$0xff]
        %v4473 = vld [vmem:[%s7 + $0x10] sm:$0xff]
        %v4474 = vld [vmem:[%s7 + $0x18] sm:$0xff]
        %v4475 = vld [vmem:[%s7 + $0x20] sm:$0xff]
        %v4476 = vld [vmem:[%s7 + $0x28] sm:$0xff]
        %v4477 = vld [vmem:[%s7 + $0x30] sm:$0xff]
        %v4478 = vld [vmem:[%s7 + $0x38] sm:$0xff]
        %v4479 = vld [vmem:[%s7 + $0x40] sm:$0xff]
        %v4480 = vld [vmem:[%s7 + $0x48] sm:$0xff]
        %v4481 = vld [vmem:[%s7 + $0x50] sm:$0xff]
        %v4482 = vld [vmem:[%s7 + $0x58] sm:$0xff]
        %v4483 = vld [vmem:[%s7 + $0x60] sm:$0xff]
        %v4484 = vld [vmem:[%s7 + $0x68] sm:$0xff]
        %v4485 = vld [vmem:[%s7 + $0x70] sm:$0xff]
        %v4486 = vld [vmem:[%s8] sm:$0x1]
        %v4488 = vlaneseq
        %v4489 = vshrl.u32 %v4488, 7
        %v4490 = vsub.s32 0, %v4489
        %v4491 = vrot.slane %v4486, %v4490
        %vm4493 = vcmask 982016
        %v4495 = vsel %vm4493, %v4470, 0
        %4497 = vmatprep.subr.mxu0 0.0
        %4498 = vmatpush1.msra.mxu0 %v4471
        %4499 = vmatprep.subr.mxu0 0.0
        %4500 = vmatpush1.msra.mxu0 %v4472
        %4501 = vmatprep.subr.mxu0 0.0
        %4502 = vmatpush1.msra.mxu0 %v4473
        %4503 = vmatprep.subr.mxu0 0.0
        %4504 = vmatpush1.msra.mxu0 %v4474
        %4505 = vmatprep.subr.mxu0 0.0
        %4506 = vmatpush1.msra.mxu0 %v4475
        %4507 = vmatprep.subr.mxu0 0.0
        %4508 = vmatpush1.msra.mxu0 %v4476
        %4509 = vmatprep.subr.mxu0 0.0
        %4510 = vmatpush1.msra.mxu0 %v4477
        %4511 = vmatprep.subr.mxu0 0.0
        %4512 = vmatpush1.msra.mxu0 %v4478
        %4513 = vmatprep.subr.mxu0 0.0
        %4514 = vmatpush1.msra.mxu0 %v4479
        %4515 = vmatprep.subr.mxu0 0.0
        %4516 = vmatpush1.msra.mxu0 %v4480
        %4517 = vmatprep.subr.mxu0 0.0
        %4518 = vmatpush1.msra.mxu0 %v4481
        %4519 = vmatprep.subr.mxu0 0.0
        %4520 = vmatpush1.msra.mxu0 %v4482
        %4521 = vmatprep.subr.mxu0 0.0
        %4522 = vmatpush1.msra.mxu0 %v4483
        %4523 = vmatprep.subr.mxu0 0.0
        %4524 = vmatpush1.msra.mxu0 %v4484
        %4525 = vmatprep.subr.mxu0 0.0
        %4526 = vmatpush1.msra.mxu0 %v4485
        %4527 = vmatprep.subr.mxu0 0.0
        %4528 = vmatpush1.msra.mxu0 0.0
        %4529 = vmatprep.subr.mxu0 0.0
        %4530 = vmatpush1.msra.mxu0 0.0
        %4531 = vmatprep.subr.mxu0 0.0
        %4532 = vmatpush1.msra.mxu0 0.0
        %4533 = vmatprep.subr.mxu0 0.0
        %4534 = vmatpush1.msra.mxu0 0.0
        %4535 = vmatprep.subr.mxu0 0.0
        %4536 = vmatpush1.msra.mxu0 0.0
        %4537 = vmatprep.subr.mxu0 0.0
        %4538 = vmatpush1.msra.mxu0 0.0
        %4539 = vmatprep.subr.mxu0 0.0
        %4540 = vmatpush1.msra.mxu0 0.0
        %4541 = vmatprep.subr.mxu0 0.0
        %4542 = vmatpush1.msra.mxu0 0.0
        %4543 = vmatprep.subr.mxu0 0.0
        %4544 = vmatpush1.msra.mxu0 0.0
        %4545 = vmatprep.subr.mxu0 0.0
        %4546 = vmatpush1.msra.mxu0 0.0
        %4547 = vmatprep.subr.mxu0 0.0
        %4548 = vmatpush1.msra.mxu0 0.0
        %4549 = vmatprep.subr.mxu0 0.0
        %4550 = vmatpush1.msra.mxu0 0.0
        %4551 = vmatprep.subr.mxu0 0.0
        %4552 = vmatpush1.msra.mxu0 0.0
        %4553 = vmatprep.subr.mxu0 0.0
        %4554 = vmatpush1.msra.mxu0 0.0
        %4555 = vmatprep.subr.mxu0 0.0
        %4556 = vmatpush1.msra.mxu0 0.0
        %4557 = vmatprep.subr.mxu0 0.0
        %4558 = vmatpush1.msra.mxu0 0.0
        %4559 = vmatprep.subr.mxu0 0.0
        %4560 = vmatpush1.msra.mxu0 0.0
        %4561 = vmatprep.mubr.f32.mxu0 0.0
        %4562 = vmatmul.mubr.f32.gmra.mrb[0].mxu0 %v4495
        %v4563 = vpop.f32.mrb[0].mxu0
        %v4564 = vadd.f32 %v4491, %v4563
        %v4565 = vpop.f32.mrb[0].mxu0
        %4566 = vdwg.mxu0
        %v4567 = vmax.f32 %v4564, 0.0
        %v4568 = vld [vmem:[%s9] sm:$0xff]
        %v4569 = vld [vmem:[%s9 + $0x8] sm:$0xff]
        %v4570 = vld [vmem:[%s9 + $0x10] sm:$0xff]
        %v4571 = vld [vmem:[%s9 + $0x18] sm:$0xff]
        %v4572 = vld [vmem:[%s9 + $0x20] sm:$0xff]
        %v4573 = vld [vmem:[%s9 + $0x28] sm:$0xff]
        %v4574 = vld [vmem:[%s9 + $0x30] sm:$0xff]
        %v4575 = vld [vmem:[%s9 + $0x38] sm:$0xff]
        %v4576 = vld [vmem:[%s9 + $0x40] sm:$0xff]
        %v4577 = vld [vmem:[%s9 + $0x48] sm:$0xff]
        %v4578 = vld [vmem:[%s9 + $0x50] sm:$0xf]
        %v4579 = vld [vmem:[%s10] sm:$0x1]
        %v4581 = vlaneseq
        %v4582 = vshrl.u32 %v4581, 7
        %v4583 = vsub.s32 0, %v4582
        %v4584 = vrot.slane %v4579, %v4583
        %vm4586 = vcmask 687104
        %v4588 = vsel %vm4586, %v4567, 0
        %vm4590 = vcmask 1043456
        %v4592 = vsel %vm4590, %v4578, 0
        %4594 = vmatprep.subr.mxu0 0.0
        %4595 = vmatpush1.msra.mxu0 %v4568
        %4596 = vmatprep.subr.mxu0 0.0
        %4597 = vmatpush1.msra.mxu0 %v4569
        %4598 = vmatprep.subr.mxu0 0.0
        %4599 = vmatpush1.msra.mxu0 %v4570
        %4600 = vmatprep.subr.mxu0 0.0
        %4601 = vmatpush1.msra.mxu0 %v4571
        %4602 = vmatprep.subr.mxu0 0.0
        %4603 = vmatpush1.msra.mxu0 %v4572
        %4604 = vmatprep.subr.mxu0 0.0
        %4605 = vmatpush1.msra.mxu0 %v4573
        %4606 = vmatprep.subr.mxu0 0.0
        %4607 = vmatpush1.msra.mxu0 %v4574
        %4608 = vmatprep.subr.mxu0 0.0
        %4609 = vmatpush1.msra.mxu0 %v4575
        %4610 = vmatprep.subr.mxu0 0.0
        %4611 = vmatpush1.msra.mxu0 %v4576
        %4612 = vmatprep.subr.mxu0 0.0
        %4613 = vmatpush1.msra.mxu0 %v4577
        %4614 = vmatprep.subr.mxu0 0.0
        %4615 = vmatpush1.msra.mxu0 %v4592
        %4616 = vmatprep.subr.mxu0 0.0
        %4617 = vmatpush1.msra.mxu0 0.0
        %4618 = vmatprep.subr.mxu0 0.0
        %4619 = vmatpush1.msra.mxu0 0.0
        %4620 = vmatprep.subr.mxu0 0.0
        %4621 = vmatpush1.msra.mxu0 0.0
        %4622 = vmatprep.subr.mxu0 0.0
        %4623 = vmatpush1.msra.mxu0 0.0
        %4624 = vmatprep.subr.mxu0 0.0
        %4625 = vmatpush1.msra.mxu0 0.0
        %4626 = vmatprep.subr.mxu0 0.0
        %4627 = vmatpush1.msra.mxu0 0.0
        %4628 = vmatprep.subr.mxu0 0.0
        %4629 = vmatpush1.msra.mxu0 0.0
        %4630 = vmatprep.subr.mxu0 0.0
        %4631 = vmatpush1.msra.mxu0 0.0
        %4632 = vmatprep.subr.mxu0 0.0
        %4633 = vmatpush1.msra.mxu0 0.0
        %4634 = vmatprep.subr.mxu0 0.0
        %4635 = vmatpush1.msra.mxu0 0.0
        %4636 = vmatprep.subr.mxu0 0.0
        %4637 = vmatpush1.msra.mxu0 0.0
        %4638 = vmatprep.subr.mxu0 0.0
        %4639 = vmatpush1.msra.mxu0 0.0
        %4640 = vmatprep.subr.mxu0 0.0
        %4641 = vmatpush1.msra.mxu0 0.0
        %4642 = vmatprep.subr.mxu0 0.0
        %4643 = vmatpush1.msra.mxu0 0.0
        %4644 = vmatprep.subr.mxu0 0.0
        %4645 = vmatpush1.msra.mxu0 0.0
        %4646 = vmatprep.subr.mxu0 0.0
        %4647 = vmatpush1.msra.mxu0 0.0
        %4648 = vmatprep.subr.mxu0 0.0
        %4649 = vmatpush1.msra.mxu0 0.0
        %4650 = vmatprep.subr.mxu0 0.0
        %4651 = vmatpush1.msra.mxu0 0.0
        %4652 = vmatprep.subr.mxu0 0.0
        %4653 = vmatpush1.msra.mxu0 0.0
        %4654 = vmatprep.subr.mxu0 0.0
        %4655 = vmatpush1.msra.mxu0 0.0
        %4656 = vmatprep.subr.mxu0 0.0
        %4657 = vmatpush1.msra.mxu0 0.0
        %4658 = vmatprep.mubr.f32.mxu0 0.0
        %4659 = vmatmul.mubr.f32.gmra.mrb[0].mxu0 %v4588
        %v4660 = vpop.f32.mrb[0].mxu0
        %v4661 = vadd.f32 %v4584, %v4660
        %v4662 = vpop.f32.mrb[0].mxu0
        %4663 = vdwg.mxu0
        %4664 = vst [vmem:[%s379] sm:$0xff] %v4661
        %s4665 = sand.u32 %s269, 1
        %s4666 = scalar_lea.sflag [#allocation3], %s4665
        %s4667 = sand.u32 %s269, 1
        %s4668 = smul.addr %s4667, 8
        %s4669 = scalar_lea.vmem [#allocation2], %s4668
        // Predicated region
        $region65: #{lenet_forward.1} parent=63 // pred_check
          %p4670 = pneg %p279
        $region66: #{lenet_forward.1} parent=63 // pred_check_branch
          %4672 = sbr.rel (%p4670) target = $region68
        $region67: #{lenet_forward.1} parent=63 // pred_region
          %s4674 = ssub.s32 128, 128
          %4675 = vsyncadd %s4666, %s4674
          %s4676 = smul.addr %s25, 128
          %s4677 = scalar_lea.hbm %s11, %s4676
          %s4679 = sshll.u32 %s4669, 4
          %s4680 = int_to_ptr.vmem [resolvable:$true] %s4679
          %4682 = dma.vmem_to_hbm [thread:$0]  %s4680, 128, %s4677, %s4666
        $region68: #{lenet_forward.1} parent=63 // pred_fallthru
          _
      $region64: #{lenet_forward.1} parent=5 // pred_fallthru
        _
      %p4683 = scmp.le.s32.totalorder 2, %s20
      // Predicated region
      $region69: #{lenet_forward.1} parent=5 // pred_check
        %p4684 = pneg %p4683
      $region70: #{lenet_forward.1} parent=5 // pred_check_branch
        %4686 = sbr.rel (%p4684) target = $region72
      $region71: #{lenet_forward.1} parent=5 // pred_region
        %s4687 = ssub.s32 %s20, 2
        // Predicated region
        $region73: #{lenet_forward.1} parent=71 // pred_check
          %p4688 = pneg %p285
        $region74: #{lenet_forward.1} parent=71 // pred_check_branch
          %4690 = sbr.rel (%p4688) target = $region76
        $region75: #{lenet_forward.1} parent=71 // pred_region
          %s4691 = sand.u32 %s270, 1
          %s4692 = scalar_lea.sflag [#allocation3], %s4691
          %s4693 = sand.u32 %s270, 1
          %s4694 = smul.addr %s4693, 8
          %s4695 = scalar_lea.vmem [#allocation2], %s4694
          %4696 = dma.done %s4692, 128
        $region76: #{lenet_forward.1} parent=71 // pred_fallthru
          _
      $region72: #{lenet_forward.1} parent=5 // pred_fallthru
        _
    $region6: #{lenet_forward.1} parent=1 // loop_footer
      %s24 = sadd.s32 1, %s20
    $region7: #{lenet_forward.1} parent=1 // loop_footer_branch
      %19 = sbr.rel target = $region3
    $region8: #{lenet_forward.1} parent=1 // loop_exit
      _
    %4697 = vsyncpa [#allocation3], 1
    %s4698 = scalar_lea.sflag [#allocation3], 1
    %4699 = vsyncpa %s4698, 1

</llo_original>
